<compile_context>
chip_gen: v7x
topology: tpu7x:2x2x1
jax: 0.10.0
libtpu: 0.0.40
codegen_flags: <defaults>
</compile_context>

<pallas_src>
import math
import jax
import jax.numpy as jnp
from jax.experimental import pallas as pl
from jax.experimental.pallas import tpu as pltpu  # noqa: F401  (TPU backend)

D_MODEL = 32
NUM_HEADS = 4
D_K = D_MODEL // NUM_HEADS
D_FF = 64
LN_EPS = 1e-5


def _make_decoder_layer_kernel(B, S, S_enc):
    N = B * S          # number of decoder tokens
    M = B * S_enc      # number of encoder tokens
    scale = 1.0 / math.sqrt(D_K)

    def kernel(x_ref, enc_ref, tmask_ref, smask_ref,
               s_wqkv_ref, s_bqkv_ref, s_wo_ref, s_bo_ref,
               c_wq_ref, c_bq_ref, c_wkv_ref, c_bkv_ref, c_wo_ref, c_bo_ref,
               w1_ref, b1_ref, w2_ref, b2_ref,
               ln_g_ref, ln_b_ref, out_ref):
        # (B, S, D) -> (B*S, D): leading-dim merge only (layout-free).
        x = x_ref[...].reshape(N, D_MODEL)
        enc = enc_ref[...].reshape(M, D_MODEL)
        tmask = tmask_ref[...]      # (B, S, S)
        smask = smask_ref[...]      # (B, S, S_enc)
        ln_g = ln_g_ref[...]        # (3, D)
        ln_b = ln_b_ref[...]        # (3, D)

        def layer_norm(v, row):
            mu = jnp.mean(v, axis=-1, keepdims=True)
            var = jnp.mean((v - mu) ** 2, axis=-1, keepdims=True)
            return ((v - mu) * jax.lax.rsqrt(var + LN_EPS)
                    * ln_g[row:row + 1, :] + ln_b[row:row + 1, :])

        def mha(q2d, k2d, v2d, Sq, Sk, mask, wo, bo):
            # q2d: (B*Sq, D), k2d/v2d: (B*Sk, D), mask: (B, Sq, Sk)
            q3 = q2d.reshape(B, Sq, D_MODEL)
            k3 = k2d.reshape(B, Sk, D_MODEL)
            v3 = v2d.reshape(B, Sk, D_MODEL)
            acc = None
            for h in range(NUM_HEADS):          # tiny static unroll (4 heads)
                lo, hi = h * D_K, (h + 1) * D_K
                qh, kh, vh = q3[:, :, lo:hi], k3[:, :, lo:hi], v3[:, :, lo:hi]
                s = jnp.einsum('bqd,bkd->bqk', qh, kh,
                               preferred_element_type=jnp.float32) * scale
                s = jnp.where(mask == 0.0, jnp.float32(-1e9), s)
                m = jnp.max(s, axis=-1, keepdims=True)
                e = jnp.exp(s - m)
                p = e / jnp.sum(e, axis=-1, keepdims=True)
                ctx = jnp.einsum('bqk,bkd->bqd', p, vh,
                                 preferred_element_type=jnp.float32)
                # concat_h(ctx_h) @ W_o  ==  sum_h ctx_h @ W_o[h*dk:(h+1)*dk, :]
                contrib = jnp.dot(ctx.reshape(B * Sq, D_K), wo[lo:hi, :],
                                  preferred_element_type=jnp.float32)
                acc = contrib if acc is None else acc + contrib
            return acc + bo

        # ---- masked self-attention (fused QKV projection) ----
        qkv = jnp.dot(x, s_wqkv_ref[...],
                      preferred_element_type=jnp.float32) + s_bqkv_ref[...]
        attn = mha(qkv[:, :D_MODEL], qkv[:, D_MODEL:2 * D_MODEL],
                   qkv[:, 2 * D_MODEL:], S, S, tmask,
                   s_wo_ref[...], s_bo_ref[...])
        x1 = layer_norm(x + attn, 0)

        # ---- cross-attention (fused KV projection of encoder output) ----
        qc = jnp.dot(x1, c_wq_ref[...],
                     preferred_element_type=jnp.float32) + c_bq_ref[...]
        kvc = jnp.dot(enc, c_wkv_ref[...],
                      preferred_element_type=jnp.float32) + c_bkv_ref[...]
        attn2 = mha(qc, kvc[:, :D_MODEL], kvc[:, D_MODEL:], S, S_enc, smask,
                    c_wo_ref[...], c_bo_ref[...])
        x2 = layer_norm(x1 + attn2, 1)

        # ---- position-wise feed-forward ----
        hdn = jnp.maximum(jnp.dot(x2, w1_ref[...],
                                  preferred_element_type=jnp.float32)
                          + b1_ref[...], 0.0)
        ff = jnp.dot(hdn, w2_ref[...],
                     preferred_element_type=jnp.float32) + b2_ref[...]
        x3 = layer_norm(x2 + ff, 2)

        # TODO(synk): nn.Dropout is treated as identity (inference mode).
        out_ref[...] = x3.reshape(B, S, D_MODEL).astype(out_ref.dtype)

    return kernel


def decoder_layer(x, enc, tgt_mask, src_mask, params):
    B, S, D = x.shape
    _, S_enc, _ = enc.shape
    assert D == D_MODEL

    sw, sb = params["self_w"], params["self_b"]
    cw, cb = params["cross_w"], params["cross_b"]

    # Wrapper-side (free) weight packing: fused QKV / KV slabs, 2-D biases.
    s_wqkv = jnp.concatenate([sw[0], sw[1], sw[2]], axis=1)        # (D, 3D)
    s_bqkv = jnp.concatenate([sb[0], sb[1], sb[2]])[None, :]       # (1, 3D)
    s_wo, s_bo = sw[3], sb[3][None, :]
    c_wq, c_bq = cw[0], cb[0][None, :]
    c_wkv = jnp.concatenate([cw[1], cw[2]], axis=1)                # (D, 2D)
    c_bkv = jnp.concatenate([cb[1], cb[2]])[None, :]               # (1, 2D)
    c_wo, c_bo = cw[3], cb[3][None, :]
    w1, b1 = params["w1"], params["b1"][None, :]
    w2, b2 = params["w2"], params["b2"][None, :]

    kernel = _make_decoder_layer_kernel(B, S, S_enc)

    # Single invocation, no grid: every operand (a few KB total) is a
    # full-array block resident in VMEM for the entire kernel.
    return pl.pallas_call(
        kernel,
        out_shape=jax.ShapeDtypeStruct((B, S, D_MODEL), jnp.float32),
    )(x, enc, tgt_mask, src_mask,
      s_wqkv, s_bqkv, s_wo, s_bo,
      c_wq, c_bq, c_wkv, c_bkv, c_wo, c_bo,
      w1, b1, w2, b2, params["ln_g"], params["ln_b"])


# ------------------------- pure-JAX reference -------------------------
def ref_decoder_layer(x, enc, tgt_mask, src_mask, p):
    def linear(v, w, b):
        return v @ w + b

    def ln(v, g, b):
        mu = v.mean(-1, keepdims=True)
        var = ((v - mu) ** 2).mean(-1, keepdims=True)
        return (v - mu) / jnp.sqrt(var + LN_EPS) * g + b

    def mha(q_in, kv_in, w, b, mask):
        Q = linear(q_in, w[0], b[0])
        K = linear(kv_in, w[1], b[1])
        V = linear(kv_in, w[2], b[2])
        B_, Sq, _ = Q.shape
        Sk = K.shape[1]
        Qh = Q.reshape(B_, Sq, NUM_HEADS, D_K).transpose(0, 2, 1, 3)
        Kh = K.reshape(B_, Sk, NUM_HEADS, D_K).transpose(0, 2, 1, 3)
        Vh = V.reshape(B_, Sk, NUM_HEADS, D_K).transpose(0, 2, 1, 3)
        scores = Qh @ Kh.transpose(0, 1, 3, 2) / math.sqrt(D_K)
        scores = jnp.where(mask[:, None, :, :] == 0, -1e9, scores)
        probs = jax.nn.softmax(scores, axis=-1)
        ctx = (probs @ Vh).transpose(0, 2, 1, 3).reshape(B_, Sq, D_MODEL)
        return linear(ctx, w[3], b[3])

    attn = mha(x, x, p["self_w"], p["self_b"], tgt_mask)
    x1 = ln(x + attn, p["ln_g"][0], p["ln_b"][0])
    attn2 = mha(x1, enc, p["cross_w"], p["cross_b"], src_mask)
    x2 = ln(x1 + attn2, p["ln_g"][1], p["ln_b"][1])
    h = jnp.maximum(linear(x2, p["w1"], p["b1"]), 0.0)
    ff = linear(h, p["w2"], p["b2"])
    return ln(x2 + ff, p["ln_g"][2], p["ln_b"][2])


if __name__ == "__main__":
    B, S, S_ENC = 2, 8, 8
    key = jax.random.PRNGKey(0)
    ks = jax.random.split(key, 12)

    params = {
        "self_w": jax.random.normal(ks[0], (4, D_MODEL, D_MODEL), jnp.float32) * 0.1,
        "self_b": jax.random.normal(ks[1], (4, D_MODEL), jnp.float32) * 0.05,
        "cross_w": jax.random.normal(ks[2], (4, D_MODEL, D_MODEL), jnp.float32) * 0.1,
        "cross_b": jax.random.normal(ks[3], (4, D_MODEL), jnp.float32) * 0.05,
        "w1": jax.random.normal(ks[4], (D_MODEL, D_FF), jnp.float32) * 0.1,
        "b1": jax.random.normal(ks[5], (D_FF,), jnp.float32) * 0.05,
        "w2": jax.random.normal(ks[6], (D_FF, D_MODEL), jnp.float32) * 0.1,
        "b2": jax.random.normal(ks[7], (D_MODEL,), jnp.float32) * 0.05,
        "ln_g": jnp.ones((3, D_MODEL), jnp.float32),   # PyTorch LayerNorm default
        "ln_b": jnp.zeros((3, D_MODEL), jnp.float32),
    }

    x = jax.random.normal(ks[8], (B, S, D_MODEL), jnp.float32)
    enc = jax.random.normal(ks[9], (B, S_ENC, D_MODEL), jnp.float32)

    # causal target mask; source mask masks the last two encoder positions of batch 1
    tgt_mask = jnp.tril(jnp.ones((S, S), jnp.float32))[None].repeat(B, axis=0)
    src_mask = jnp.ones((B, S, S_ENC), jnp.float32)
    src_mask = src_mask.at[1, :, S_ENC - 2:].set(0.0)

    out = decoder_layer(x, enc, tgt_mask, src_mask, params)
    out = jax.block_until_ready(out)

    ref = ref_decoder_layer(x, enc, tgt_mask, src_mask, params)
    assert out.shape == (B, S, D_MODEL)
    # Tolerance covers TPU default (bf16-pass) f32 matmul precision, which both
    # the kernel and the XLA reference use with different reduction orders.
    assert jnp.allclose(out, ref, atol=2e-2, rtol=2e-2), "mismatch vs reference"
    print("KERNEL_OK")
</pallas_src>

<mosaic_0001>
module attributes {stable_mosaic.version = 11 : i64} {
  func.func @kernel(%arg0: memref<2x8x32xf32, #tpu.memory_space<vmem>>, %arg1: memref<2x8x32xf32, #tpu.memory_space<vmem>>, %arg2: memref<2x8x8xf32, #tpu.memory_space<vmem>>, %arg3: memref<2x8x8xf32, #tpu.memory_space<vmem>>, %arg4: memref<32x96xf32, #tpu.memory_space<vmem>>, %arg5: memref<1x96xf32, #tpu.memory_space<vmem>>, %arg6: memref<32x32xf32, #tpu.memory_space<vmem>>, %arg7: memref<1x32xf32, #tpu.memory_space<vmem>>, %arg8: memref<32x32xf32, #tpu.memory_space<vmem>>, %arg9: memref<1x32xf32, #tpu.memory_space<vmem>>, %arg10: memref<32x64xf32, #tpu.memory_space<vmem>>, %arg11: memref<1x64xf32, #tpu.memory_space<vmem>>, %arg12: memref<32x32xf32, #tpu.memory_space<vmem>>, %arg13: memref<1x32xf32, #tpu.memory_space<vmem>>, %arg14: memref<32x64xf32, #tpu.memory_space<vmem>>, %arg15: memref<1x64xf32, #tpu.memory_space<vmem>>, %arg16: memref<64x32xf32, #tpu.memory_space<vmem>>, %arg17: memref<1x32xf32, #tpu.memory_space<vmem>>, %arg18: memref<3x32xf32, #tpu.memory_space<vmem>>, %arg19: memref<3x32xf32, #tpu.memory_space<vmem>>, %arg20: memref<2x8x32xf32, #tpu.memory_space<vmem>>) attributes {dimension_semantics = [], scalar_prefetch = 0 : i64, scratch_operands = 0 : i64, tpu.core_type = #tpu.core_type<tc>} {
    %c0 = arith.constant 0 : index
    %c0_0 = arith.constant 0 : index
    %c0_1 = arith.constant 0 : index
    %0 = vector.load %arg0[%c0, %c0_0, %c0_1] : memref<2x8x32xf32, #tpu.memory_space<vmem>>, vector<2x8x32xf32>
    %1 = vector.shape_cast %0 : vector<2x8x32xf32> to vector<16x32xf32>
    %c0_2 = arith.constant 0 : index
    %c0_3 = arith.constant 0 : index
    %c0_4 = arith.constant 0 : index
    %2 = vector.load %arg1[%c0_2, %c0_3, %c0_4] : memref<2x8x32xf32, #tpu.memory_space<vmem>>, vector<2x8x32xf32>
    %3 = vector.shape_cast %2 : vector<2x8x32xf32> to vector<16x32xf32>
    %c0_5 = arith.constant 0 : index
    %c0_6 = arith.constant 0 : index
    %c0_7 = arith.constant 0 : index
    %4 = vector.load %arg2[%c0_5, %c0_6, %c0_7] : memref<2x8x8xf32, #tpu.memory_space<vmem>>, vector<2x8x8xf32>
    %c0_8 = arith.constant 0 : index
    %c0_9 = arith.constant 0 : index
    %c0_10 = arith.constant 0 : index
    %5 = vector.load %arg3[%c0_8, %c0_9, %c0_10] : memref<2x8x8xf32, #tpu.memory_space<vmem>>, vector<2x8x8xf32>
    %c0_11 = arith.constant 0 : index
    %c0_12 = arith.constant 0 : index
    %6 = vector.load %arg18[%c0_11, %c0_12] : memref<3x32xf32, #tpu.memory_space<vmem>>, vector<3x32xf32>
    %c0_13 = arith.constant 0 : index
    %c0_14 = arith.constant 0 : index
    %7 = vector.load %arg19[%c0_13, %c0_14] : memref<3x32xf32, #tpu.memory_space<vmem>>, vector<3x32xf32>
    %c0_15 = arith.constant 0 : index
    %c0_16 = arith.constant 0 : index
    %8 = vector.load %arg4[%c0_15, %c0_16] : memref<32x96xf32, #tpu.memory_space<vmem>>, vector<32x96xf32>
    %cst = arith.constant dense<0.000000e+00> : vector<16x96xf32>
    %9 = tpu.matmul %1, %8, %cst {dimension_numbers = #tpu.dot_dimension_numbers<[1], [0], [0], [1], [0, 0, 1, 1], [], []>} : vector<16x32xf32>, vector<32x96xf32>, vector<16x96xf32> -> vector<16x96xf32>
    %c0_17 = arith.constant 0 : index
    %c0_18 = arith.constant 0 : index
    %10 = vector.load %arg5[%c0_17, %c0_18] : memref<1x96xf32, #tpu.memory_space<vmem>>, vector<1x96xf32>
    %11 = vector.broadcast %10 : vector<1x96xf32> to vector<16x96xf32>
    %12 = arith.addf %9, %11 : vector<16x96xf32>
    %13 = vector.extract_strided_slice %12 {offsets = [0, 0], sizes = [16, 32], strides = [1, 1]} : vector<16x96xf32> to vector<16x32xf32>
    %14 = vector.extract_strided_slice %12 {offsets = [0, 32], sizes = [16, 32], strides = [1, 1]} : vector<16x96xf32> to vector<16x32xf32>
    %15 = vector.extract_strided_slice %12 {offsets = [0, 64], sizes = [16, 32], strides = [1, 1]} : vector<16x96xf32> to vector<16x32xf32>
    %c0_19 = arith.constant 0 : index
    %c0_20 = arith.constant 0 : index
    %16 = vector.load %arg6[%c0_19, %c0_20] : memref<32x32xf32, #tpu.memory_space<vmem>>, vector<32x32xf32>
    %c0_21 = arith.constant 0 : index
    %c0_22 = arith.constant 0 : index
    %17 = vector.load %arg7[%c0_21, %c0_22] : memref<1x32xf32, #tpu.memory_space<vmem>>, vector<1x32xf32>
    %18 = vector.shape_cast %13 : vector<16x32xf32> to vector<2x8x32xf32>
    %19 = vector.shape_cast %14 : vector<16x32xf32> to vector<2x8x32xf32>
    %20 = vector.shape_cast %15 : vector<16x32xf32> to vector<2x8x32xf32>
    %21 = vector.extract_strided_slice %18 {offsets = [0, 0, 0], sizes = [2, 8, 8], strides = [1, 1, 1]} : vector<2x8x32xf32> to vector<2x8x8xf32>
    %22 = vector.extract_strided_slice %19 {offsets = [0, 0, 0], sizes = [2, 8, 8], strides = [1, 1, 1]} : vector<2x8x32xf32> to vector<2x8x8xf32>
    %23 = vector.extract_strided_slice %20 {offsets = [0, 0, 0], sizes = [2, 8, 8], strides = [1, 1, 1]} : vector<2x8x32xf32> to vector<2x8x8xf32>
    "tpu.trace_start"() <{level = 10 : i32, message = "bqd,bkd->bqk"}> : () -> ()
    %cst_23 = arith.constant dense<0.000000e+00> : vector<2x8x8xf32>
    %24 = tpu.matmul %21, %22, %cst_23 {dimension_numbers = #tpu.dot_dimension_numbers<[2], [2], [1], [1], [0, 0, 0, 1, 1, 1], [0], [0]>} : vector<2x8x8xf32>, vector<2x8x8xf32>, vector<2x8x8xf32> -> vector<2x8x8xf32>
    "tpu.trace_stop"() : () -> ()
    %cst_24 = arith.constant 0.353553385 : f32
    %25 = vector.broadcast %cst_24 : f32 to vector<2x8x8xf32>
    %26 = arith.mulf %24, %25 : vector<2x8x8xf32>
    %cst_25 = arith.constant 0.000000e+00 : f32
    %27 = vector.broadcast %cst_25 : f32 to vector<2x8x8xf32>
    %28 = arith.cmpf oeq, %4, %27 : vector<2x8x8xf32>
    %cst_26 = arith.constant -1.000000e+09 : f32
    %29 = vector.broadcast %cst_26 : f32 to vector<2x8x8xf32>
    %30 = arith.select %28, %29, %26 : vector<2x8x8xi1>, vector<2x8x8xf32>
    %cst_27 = arith.constant dense<0xFF800000> : vector<2x8xf32>
    %31 = vector.multi_reduction <maximumf>, %30, %cst_27 [2] : vector<2x8x8xf32> to vector<2x8xf32>
    %32 = vector.shape_cast %31 : vector<2x8xf32> to vector<2x8x1xf32>
    %33 = vector.broadcast %32 : vector<2x8x1xf32> to vector<2x8x8xf32>
    %34 = arith.subf %30, %33 : vector<2x8x8xf32>
    %35 = math.exp %34 : vector<2x8x8xf32>
    %cst_28 = arith.constant dense<0.000000e+00> : vector<2x8xf32>
    %36 = vector.multi_reduction <add>, %35, %cst_28 [2] : vector<2x8x8xf32> to vector<2x8xf32>
    %37 = vector.shape_cast %36 : vector<2x8xf32> to vector<2x8x1xf32>
    %38 = vector.broadcast %37 : vector<2x8x1xf32> to vector<2x8x8xf32>
    %39 = arith.divf %35, %38 : vector<2x8x8xf32>
    "tpu.trace_start"() <{level = 10 : i32, message = "bqk,bkd->bqd"}> : () -> ()
    %cst_29 = arith.constant dense<0.000000e+00> : vector<2x8x8xf32>
    %40 = tpu.matmul %39, %23, %cst_29 {dimension_numbers = #tpu.dot_dimension_numbers<[2], [1], [1], [2], [0, 0, 0, 1, 1, 2], [0], [0]>} : vector<2x8x8xf32>, vector<2x8x8xf32>, vector<2x8x8xf32> -> vector<2x8x8xf32>
    "tpu.trace_stop"() : () -> ()
    %41 = vector.shape_cast %40 : vector<2x8x8xf32> to vector<16x8xf32>
    %42 = vector.extract_strided_slice %16 {offsets = [0, 0], sizes = [8, 32], strides = [1, 1]} : vector<32x32xf32> to vector<8x32xf32>
    %cst_30 = arith.constant dense<0.000000e+00> : vector<16x32xf32>
    %43 = tpu.matmul %41, %42, %cst_30 {dimension_numbers = #tpu.dot_dimension_numbers<[1], [0], [0], [1], [0, 0, 1, 1], [], []>} : vector<16x8xf32>, vector<8x32xf32>, vector<16x32xf32> -> vector<16x32xf32>
    %44 = vector.extract_strided_slice %18 {offsets = [0, 0, 8], sizes = [2, 8, 8], strides = [1, 1, 1]} : vector<2x8x32xf32> to vector<2x8x8xf32>
    %45 = vector.extract_strided_slice %19 {offsets = [0, 0, 8], sizes = [2, 8, 8], strides = [1, 1, 1]} : vector<2x8x32xf32> to vector<2x8x8xf32>
    %46 = vector.extract_strided_slice %20 {offsets = [0, 0, 8], sizes = [2, 8, 8], strides = [1, 1, 1]} : vector<2x8x32xf32> to vector<2x8x8xf32>
    "tpu.trace_start"() <{level = 10 : i32, message = "bqd,bkd->bqk"}> : () -> ()
    %cst_31 = arith.constant dense<0.000000e+00> : vector<2x8x8xf32>
    %47 = tpu.matmul %44, %45, %cst_31 {dimension_numbers = #tpu.dot_dimension_numbers<[2], [2], [1], [1], [0, 0, 0, 1, 1, 1], [0], [0]>} : vector<2x8x8xf32>, vector<2x8x8xf32>, vector<2x8x8xf32> -> vector<2x8x8xf32>
    "tpu.trace_stop"() : () -> ()
    %cst_32 = arith.constant 0.353553385 : f32
    %48 = vector.broadcast %cst_32 : f32 to vector<2x8x8xf32>
    %49 = arith.mulf %47, %48 : vector<2x8x8xf32>
    %cst_33 = arith.constant 0.000000e+00 : f32
    %50 = vector.broadcast %cst_33 : f32 to vector<2x8x8xf32>
    %51 = arith.cmpf oeq, %4, %50 : vector<2x8x8xf32>
    %cst_34 = arith.constant -1.000000e+09 : f32
    %52 = vector.broadcast %cst_34 : f32 to vector<2x8x8xf32>
    %53 = arith.select %51, %52, %49 : vector<2x8x8xi1>, vector<2x8x8xf32>
    %cst_35 = arith.constant dense<0xFF800000> : vector<2x8xf32>
    %54 = vector.multi_reduction <maximumf>, %53, %cst_35 [2] : vector<2x8x8xf32> to vector<2x8xf32>
    %55 = vector.shape_cast %54 : vector<2x8xf32> to vector<2x8x1xf32>
    %56 = vector.broadcast %55 : vector<2x8x1xf32> to vector<2x8x8xf32>
    %57 = arith.subf %53, %56 : vector<2x8x8xf32>
    %58 = math.exp %57 : vector<2x8x8xf32>
    %cst_36 = arith.constant dense<0.000000e+00> : vector<2x8xf32>
    %59 = vector.multi_reduction <add>, %58, %cst_36 [2] : vector<2x8x8xf32> to vector<2x8xf32>
    %60 = vector.shape_cast %59 : vector<2x8xf32> to vector<2x8x1xf32>
    %61 = vector.broadcast %60 : vector<2x8x1xf32> to vector<2x8x8xf32>
    %62 = arith.divf %58, %61 : vector<2x8x8xf32>
    "tpu.trace_start"() <{level = 10 : i32, message = "bqk,bkd->bqd"}> : () -> ()
    %cst_37 = arith.constant dense<0.000000e+00> : vector<2x8x8xf32>
    %63 = tpu.matmul %62, %46, %cst_37 {dimension_numbers = #tpu.dot_dimension_numbers<[2], [1], [1], [2], [0, 0, 0, 1, 1, 2], [0], [0]>} : vector<2x8x8xf32>, vector<2x8x8xf32>, vector<2x8x8xf32> -> vector<2x8x8xf32>
    "tpu.trace_stop"() : () -> ()
    %64 = vector.shape_cast %63 : vector<2x8x8xf32> to vector<16x8xf32>
    %65 = vector.extract_strided_slice %16 {offsets = [8, 0], sizes = [8, 32], strides = [1, 1]} : vector<32x32xf32> to vector<8x32xf32>
    %cst_38 = arith.constant dense<0.000000e+00> : vector<16x32xf32>
    %66 = tpu.matmul %64, %65, %cst_38 {dimension_numbers = #tpu.dot_dimension_numbers<[1], [0], [0], [1], [0, 0, 1, 1], [], []>} : vector<16x8xf32>, vector<8x32xf32>, vector<16x32xf32> -> vector<16x32xf32>
    %67 = arith.addf %43, %66 : vector<16x32xf32>
    %68 = vector.extract_strided_slice %18 {offsets = [0, 0, 16], sizes = [2, 8, 8], strides = [1, 1, 1]} : vector<2x8x32xf32> to vector<2x8x8xf32>
    %69 = vector.extract_strided_slice %19 {offsets = [0, 0, 16], sizes = [2, 8, 8], strides = [1, 1, 1]} : vector<2x8x32xf32> to vector<2x8x8xf32>
    %70 = vector.extract_strided_slice %20 {offsets = [0, 0, 16], sizes = [2, 8, 8], strides = [1, 1, 1]} : vector<2x8x32xf32> to vector<2x8x8xf32>
    "tpu.trace_start"() <{level = 10 : i32, message = "bqd,bkd->bqk"}> : () -> ()
    %cst_39 = arith.constant dense<0.000000e+00> : vector<2x8x8xf32>
    %71 = tpu.matmul %68, %69, %cst_39 {dimension_numbers = #tpu.dot_dimension_numbers<[2], [2], [1], [1], [0, 0, 0, 1, 1, 1], [0], [0]>} : vector<2x8x8xf32>, vector<2x8x8xf32>, vector<2x8x8xf32> -> vector<2x8x8xf32>
    "tpu.trace_stop"() : () -> ()
    %cst_40 = arith.constant 0.353553385 : f32
    %72 = vector.broadcast %cst_40 : f32 to vector<2x8x8xf32>
    %73 = arith.mulf %71, %72 : vector<2x8x8xf32>
    %cst_41 = arith.constant 0.000000e+00 : f32
    %74 = vector.broadcast %cst_41 : f32 to vector<2x8x8xf32>
    %75 = arith.cmpf oeq, %4, %74 : vector<2x8x8xf32>
    %cst_42 = arith.constant -1.000000e+09 : f32
    %76 = vector.broadcast %cst_42 : f32 to vector<2x8x8xf32>
    %77 = arith.select %75, %76, %73 : vector<2x8x8xi1>, vector<2x8x8xf32>
    %cst_43 = arith.constant dense<0xFF800000> : vector<2x8xf32>
    %78 = vector.multi_reduction <maximumf>, %77, %cst_43 [2] : vector<2x8x8xf32> to vector<2x8xf32>
    %79 = vector.shape_cast %78 : vector<2x8xf32> to vector<2x8x1xf32>
    %80 = vector.broadcast %79 : vector<2x8x1xf32> to vector<2x8x8xf32>
    %81 = arith.subf %77, %80 : vector<2x8x8xf32>
    %82 = math.exp %81 : vector<2x8x8xf32>
    %cst_44 = arith.constant dense<0.000000e+00> : vector<2x8xf32>
    %83 = vector.multi_reduction <add>, %82, %cst_44 [2] : vector<2x8x8xf32> to vector<2x8xf32>
    %84 = vector.shape_cast %83 : vector<2x8xf32> to vector<2x8x1xf32>
    %85 = vector.broadcast %84 : vector<2x8x1xf32> to vector<2x8x8xf32>
    %86 = arith.divf %82, %85 : vector<2x8x8xf32>
    "tpu.trace_start"() <{level = 10 : i32, message = "bqk,bkd->bqd"}> : () -> ()
    %cst_45 = arith.constant dense<0.000000e+00> : vector<2x8x8xf32>
    %87 = tpu.matmul %86, %70, %cst_45 {dimension_numbers = #tpu.dot_dimension_numbers<[2], [1], [1], [2], [0, 0, 0, 1, 1, 2], [0], [0]>} : vector<2x8x8xf32>, vector<2x8x8xf32>, vector<2x8x8xf32> -> vector<2x8x8xf32>
    "tpu.trace_stop"() : () -> ()
    %88 = vector.shape_cast %87 : vector<2x8x8xf32> to vector<16x8xf32>
    %89 = vector.extract_strided_slice %16 {offsets = [16, 0], sizes = [8, 32], strides = [1, 1]} : vector<32x32xf32> to vector<8x32xf32>
    %cst_46 = arith.constant dense<0.000000e+00> : vector<16x32xf32>
    %90 = tpu.matmul %88, %89, %cst_46 {dimension_numbers = #tpu.dot_dimension_numbers<[1], [0], [0], [1], [0, 0, 1, 1], [], []>} : vector<16x8xf32>, vector<8x32xf32>, vector<16x32xf32> -> vector<16x32xf32>
    %91 = arith.addf %67, %90 : vector<16x32xf32>
    %92 = vector.extract_strided_slice %18 {offsets = [0, 0, 24], sizes = [2, 8, 8], strides = [1, 1, 1]} : vector<2x8x32xf32> to vector<2x8x8xf32>
    %93 = vector.extract_strided_slice %19 {offsets = [0, 0, 24], sizes = [2, 8, 8], strides = [1, 1, 1]} : vector<2x8x32xf32> to vector<2x8x8xf32>
    %94 = vector.extract_strided_slice %20 {offsets = [0, 0, 24], sizes = [2, 8, 8], strides = [1, 1, 1]} : vector<2x8x32xf32> to vector<2x8x8xf32>
    "tpu.trace_start"() <{level = 10 : i32, message = "bqd,bkd->bqk"}> : () -> ()
    %cst_47 = arith.constant dense<0.000000e+00> : vector<2x8x8xf32>
    %95 = tpu.matmul %92, %93, %cst_47 {dimension_numbers = #tpu.dot_dimension_numbers<[2], [2], [1], [1], [0, 0, 0, 1, 1, 1], [0], [0]>} : vector<2x8x8xf32>, vector<2x8x8xf32>, vector<2x8x8xf32> -> vector<2x8x8xf32>
    "tpu.trace_stop"() : () -> ()
    %cst_48 = arith.constant 0.353553385 : f32
    %96 = vector.broadcast %cst_48 : f32 to vector<2x8x8xf32>
    %97 = arith.mulf %95, %96 : vector<2x8x8xf32>
    %cst_49 = arith.constant 0.000000e+00 : f32
    %98 = vector.broadcast %cst_49 : f32 to vector<2x8x8xf32>
    %99 = arith.cmpf oeq, %4, %98 : vector<2x8x8xf32>
    %cst_50 = arith.constant -1.000000e+09 : f32
    %100 = vector.broadcast %cst_50 : f32 to vector<2x8x8xf32>
    %101 = arith.select %99, %100, %97 : vector<2x8x8xi1>, vector<2x8x8xf32>
    %cst_51 = arith.constant dense<0xFF800000> : vector<2x8xf32>
    %102 = vector.multi_reduction <maximumf>, %101, %cst_51 [2] : vector<2x8x8xf32> to vector<2x8xf32>
    %103 = vector.shape_cast %102 : vector<2x8xf32> to vector<2x8x1xf32>
    %104 = vector.broadcast %103 : vector<2x8x1xf32> to vector<2x8x8xf32>
    %105 = arith.subf %101, %104 : vector<2x8x8xf32>
    %106 = math.exp %105 : vector<2x8x8xf32>
    %cst_52 = arith.constant dense<0.000000e+00> : vector<2x8xf32>
    %107 = vector.multi_reduction <add>, %106, %cst_52 [2] : vector<2x8x8xf32> to vector<2x8xf32>
    %108 = vector.shape_cast %107 : vector<2x8xf32> to vector<2x8x1xf32>
    %109 = vector.broadcast %108 : vector<2x8x1xf32> to vector<2x8x8xf32>
    %110 = arith.divf %106, %109 : vector<2x8x8xf32>
    "tpu.trace_start"() <{level = 10 : i32, message = "bqk,bkd->bqd"}> : () -> ()
    %cst_53 = arith.constant dense<0.000000e+00> : vector<2x8x8xf32>
    %111 = tpu.matmul %110, %94, %cst_53 {dimension_numbers = #tpu.dot_dimension_numbers<[2], [1], [1], [2], [0, 0, 0, 1, 1, 2], [0], [0]>} : vector<2x8x8xf32>, vector<2x8x8xf32>, vector<2x8x8xf32> -> vector<2x8x8xf32>
    "tpu.trace_stop"() : () -> ()
    %112 = vector.shape_cast %111 : vector<2x8x8xf32> to vector<16x8xf32>
    %113 = vector.extract_strided_slice %16 {offsets = [24, 0], sizes = [8, 32], strides = [1, 1]} : vector<32x32xf32> to vector<8x32xf32>
    %cst_54 = arith.constant dense<0.000000e+00> : vector<16x32xf32>
    %114 = tpu.matmul %112, %113, %cst_54 {dimension_numbers = #tpu.dot_dimension_numbers<[1], [0], [0], [1], [0, 0, 1, 1], [], []>} : vector<16x8xf32>, vector<8x32xf32>, vector<16x32xf32> -> vector<16x32xf32>
    %115 = arith.addf %91, %114 : vector<16x32xf32>
    %116 = vector.broadcast %17 : vector<1x32xf32> to vector<16x32xf32>
    %117 = arith.addf %115, %116 : vector<16x32xf32>
    %118 = arith.addf %1, %117 : vector<16x32xf32>
    %cst_55 = arith.constant dense<0.000000e+00> : vector<16xf32>
    %119 = vector.multi_reduction <add>, %118, %cst_55 [1] : vector<16x32xf32> to vector<16xf32>
    %120 = vector.shape_cast %119 : vector<16xf32> to vector<16x1xf32>
    %cst_56 = arith.constant 3.200000e+01 : f32
    %121 = vector.broadcast %cst_56 : f32 to vector<16x1xf32>
    %122 = arith.divf %120, %121 : vector<16x1xf32>
    %123 = vector.broadcast %122 : vector<16x1xf32> to vector<16x32xf32>
    %124 = arith.subf %118, %123 : vector<16x32xf32>
    %125 = arith.mulf %124, %124 : vector<16x32xf32>
    %cst_57 = arith.constant dense<0.000000e+00> : vector<16xf32>
    %126 = vector.multi_reduction <add>, %125, %cst_57 [1] : vector<16x32xf32> to vector<16xf32>
    %127 = vector.shape_cast %126 : vector<16xf32> to vector<16x1xf32>
    %cst_58 = arith.constant 3.200000e+01 : f32
    %128 = vector.broadcast %cst_58 : f32 to vector<16x1xf32>
    %129 = arith.divf %127, %128 : vector<16x1xf32>
    %130 = vector.broadcast %122 : vector<16x1xf32> to vector<16x32xf32>
    %131 = arith.subf %118, %130 : vector<16x32xf32>
    %cst_59 = arith.constant 9.99999974E-6 : f32
    %132 = vector.broadcast %cst_59 : f32 to vector<16x1xf32>
    %133 = arith.addf %129, %132 : vector<16x1xf32>
    %134 = math.rsqrt %133 : vector<16x1xf32>
    %135 = vector.broadcast %134 : vector<16x1xf32> to vector<16x32xf32>
    %136 = arith.mulf %131, %135 : vector<16x32xf32>
    %137 = vector.extract_strided_slice %6 {offsets = [0, 0], sizes = [1, 32], strides = [1, 1]} : vector<3x32xf32> to vector<1x32xf32>
    %138 = vector.broadcast %137 : vector<1x32xf32> to vector<16x32xf32>
    %139 = arith.mulf %136, %138 : vector<16x32xf32>
    %140 = vector.extract_strided_slice %7 {offsets = [0, 0], sizes = [1, 32], strides = [1, 1]} : vector<3x32xf32> to vector<1x32xf32>
    %141 = vector.broadcast %140 : vector<1x32xf32> to vector<16x32xf32>
    %142 = arith.addf %139, %141 : vector<16x32xf32>
    %c0_60 = arith.constant 0 : index
    %c0_61 = arith.constant 0 : index
    %143 = vector.load %arg8[%c0_60, %c0_61] : memref<32x32xf32, #tpu.memory_space<vmem>>, vector<32x32xf32>
    %cst_62 = arith.constant dense<0.000000e+00> : vector<16x32xf32>
    %144 = tpu.matmul %142, %143, %cst_62 {dimension_numbers = #tpu.dot_dimension_numbers<[1], [0], [0], [1], [0, 0, 1, 1], [], []>} : vector<16x32xf32>, vector<32x32xf32>, vector<16x32xf32> -> vector<16x32xf32>
    %c0_63 = arith.constant 0 : index
    %c0_64 = arith.constant 0 : index
    %145 = vector.load %arg9[%c0_63, %c0_64] : memref<1x32xf32, #tpu.memory_space<vmem>>, vector<1x32xf32>
    %146 = vector.broadcast %145 : vector<1x32xf32> to vector<16x32xf32>
    %147 = arith.addf %144, %146 : vector<16x32xf32>
    %c0_65 = arith.constant 0 : index
    %c0_66 = arith.constant 0 : index
    %148 = vector.load %arg10[%c0_65, %c0_66] : memref<32x64xf32, #tpu.memory_space<vmem>>, vector<32x64xf32>
    %cst_67 = arith.constant dense<0.000000e+00> : vector<16x64xf32>
    %149 = tpu.matmul %3, %148, %cst_67 {dimension_numbers = #tpu.dot_dimension_numbers<[1], [0], [0], [1], [0, 0, 1, 1], [], []>} : vector<16x32xf32>, vector<32x64xf32>, vector<16x64xf32> -> vector<16x64xf32>
    %c0_68 = arith.constant 0 : index
    %c0_69 = arith.constant 0 : index
    %150 = vector.load %arg11[%c0_68, %c0_69] : memref<1x64xf32, #tpu.memory_space<vmem>>, vector<1x64xf32>
    %151 = vector.broadcast %150 : vector<1x64xf32> to vector<16x64xf32>
    %152 = arith.addf %149, %151 : vector<16x64xf32>
    %153 = vector.extract_strided_slice %152 {offsets = [0, 0], sizes = [16, 32], strides = [1, 1]} : vector<16x64xf32> to vector<16x32xf32>
    %154 = vector.extract_strided_slice %152 {offsets = [0, 32], sizes = [16, 32], strides = [1, 1]} : vector<16x64xf32> to vector<16x32xf32>
    %c0_70 = arith.constant 0 : index
    %c0_71 = arith.constant 0 : index
    %155 = vector.load %arg12[%c0_70, %c0_71] : memref<32x32xf32, #tpu.memory_space<vmem>>, vector<32x32xf32>
    %c0_72 = arith.constant 0 : index
    %c0_73 = arith.constant 0 : index
    %156 = vector.load %arg13[%c0_72, %c0_73] : memref<1x32xf32, #tpu.memory_space<vmem>>, vector<1x32xf32>
    %157 = vector.shape_cast %147 : vector<16x32xf32> to vector<2x8x32xf32>
    %158 = vector.shape_cast %153 : vector<16x32xf32> to vector<2x8x32xf32>
    %159 = vector.shape_cast %154 : vector<16x32xf32> to vector<2x8x32xf32>
    %160 = vector.extract_strided_slice %157 {offsets = [0, 0, 0], sizes = [2, 8, 8], strides = [1, 1, 1]} : vector<2x8x32xf32> to vector<2x8x8xf32>
    %161 = vector.extract_strided_slice %158 {offsets = [0, 0, 0], sizes = [2, 8, 8], strides = [1, 1, 1]} : vector<2x8x32xf32> to vector<2x8x8xf32>
    %162 = vector.extract_strided_slice %159 {offsets = [0, 0, 0], sizes = [2, 8, 8], strides = [1, 1, 1]} : vector<2x8x32xf32> to vector<2x8x8xf32>
    "tpu.trace_start"() <{level = 10 : i32, message = "bqd,bkd->bqk"}> : () -> ()
    %cst_74 = arith.constant dense<0.000000e+00> : vector<2x8x8xf32>
    %163 = tpu.matmul %160, %161, %cst_74 {dimension_numbers = #tpu.dot_dimension_numbers<[2], [2], [1], [1], [0, 0, 0, 1, 1, 1], [0], [0]>} : vector<2x8x8xf32>, vector<2x8x8xf32>, vector<2x8x8xf32> -> vector<2x8x8xf32>
    "tpu.trace_stop"() : () -> ()
    %cst_75 = arith.constant 0.353553385 : f32
    %164 = vector.broadcast %cst_75 : f32 to vector<2x8x8xf32>
    %165 = arith.mulf %163, %164 : vector<2x8x8xf32>
    %cst_76 = arith.constant 0.000000e+00 : f32
    %166 = vector.broadcast %cst_76 : f32 to vector<2x8x8xf32>
    %167 = arith.cmpf oeq, %5, %166 : vector<2x8x8xf32>
    %cst_77 = arith.constant -1.000000e+09 : f32
    %168 = vector.broadcast %cst_77 : f32 to vector<2x8x8xf32>
    %169 = arith.select %167, %168, %165 : vector<2x8x8xi1>, vector<2x8x8xf32>
    %cst_78 = arith.constant dense<0xFF800000> : vector<2x8xf32>
    %170 = vector.multi_reduction <maximumf>, %169, %cst_78 [2] : vector<2x8x8xf32> to vector<2x8xf32>
    %171 = vector.shape_cast %170 : vector<2x8xf32> to vector<2x8x1xf32>
    %172 = vector.broadcast %171 : vector<2x8x1xf32> to vector<2x8x8xf32>
    %173 = arith.subf %169, %172 : vector<2x8x8xf32>
    %174 = math.exp %173 : vector<2x8x8xf32>
    %cst_79 = arith.constant dense<0.000000e+00> : vector<2x8xf32>
    %175 = vector.multi_reduction <add>, %174, %cst_79 [2] : vector<2x8x8xf32> to vector<2x8xf32>
    %176 = vector.shape_cast %175 : vector<2x8xf32> to vector<2x8x1xf32>
    %177 = vector.broadcast %176 : vector<2x8x1xf32> to vector<2x8x8xf32>
    %178 = arith.divf %174, %177 : vector<2x8x8xf32>
    "tpu.trace_start"() <{level = 10 : i32, message = "bqk,bkd->bqd"}> : () -> ()
    %cst_80 = arith.constant dense<0.000000e+00> : vector<2x8x8xf32>
    %179 = tpu.matmul %178, %162, %cst_80 {dimension_numbers = #tpu.dot_dimension_numbers<[2], [1], [1], [2], [0, 0, 0, 1, 1, 2], [0], [0]>} : vector<2x8x8xf32>, vector<2x8x8xf32>, vector<2x8x8xf32> -> vector<2x8x8xf32>
    "tpu.trace_stop"() : () -> ()
    %180 = vector.shape_cast %179 : vector<2x8x8xf32> to vector<16x8xf32>
    %181 = vector.extract_strided_slice %155 {offsets = [0, 0], sizes = [8, 32], strides = [1, 1]} : vector<32x32xf32> to vector<8x32xf32>
    %cst_81 = arith.constant dense<0.000000e+00> : vector<16x32xf32>
    %182 = tpu.matmul %180, %181, %cst_81 {dimension_numbers = #tpu.dot_dimension_numbers<[1], [0], [0], [1], [0, 0, 1, 1], [], []>} : vector<16x8xf32>, vector<8x32xf32>, vector<16x32xf32> -> vector<16x32xf32>
    %183 = vector.extract_strided_slice %157 {offsets = [0, 0, 8], sizes = [2, 8, 8], strides = [1, 1, 1]} : vector<2x8x32xf32> to vector<2x8x8xf32>
    %184 = vector.extract_strided_slice %158 {offsets = [0, 0, 8], sizes = [2, 8, 8], strides = [1, 1, 1]} : vector<2x8x32xf32> to vector<2x8x8xf32>
    %185 = vector.extract_strided_slice %159 {offsets = [0, 0, 8], sizes = [2, 8, 8], strides = [1, 1, 1]} : vector<2x8x32xf32> to vector<2x8x8xf32>
    "tpu.trace_start"() <{level = 10 : i32, message = "bqd,bkd->bqk"}> : () -> ()
    %cst_82 = arith.constant dense<0.000000e+00> : vector<2x8x8xf32>
    %186 = tpu.matmul %183, %184, %cst_82 {dimension_numbers = #tpu.dot_dimension_numbers<[2], [2], [1], [1], [0, 0, 0, 1, 1, 1], [0], [0]>} : vector<2x8x8xf32>, vector<2x8x8xf32>, vector<2x8x8xf32> -> vector<2x8x8xf32>
    "tpu.trace_stop"() : () -> ()
    %cst_83 = arith.constant 0.353553385 : f32
    %187 = vector.broadcast %cst_83 : f32 to vector<2x8x8xf32>
    %188 = arith.mulf %186, %187 : vector<2x8x8xf32>
    %cst_84 = arith.constant 0.000000e+00 : f32
    %189 = vector.broadcast %cst_84 : f32 to vector<2x8x8xf32>
    %190 = arith.cmpf oeq, %5, %189 : vector<2x8x8xf32>
    %cst_85 = arith.constant -1.000000e+09 : f32
    %191 = vector.broadcast %cst_85 : f32 to vector<2x8x8xf32>
    %192 = arith.select %190, %191, %188 : vector<2x8x8xi1>, vector<2x8x8xf32>
    %cst_86 = arith.constant dense<0xFF800000> : vector<2x8xf32>
    %193 = vector.multi_reduction <maximumf>, %192, %cst_86 [2] : vector<2x8x8xf32> to vector<2x8xf32>
    %194 = vector.shape_cast %193 : vector<2x8xf32> to vector<2x8x1xf32>
    %195 = vector.broadcast %194 : vector<2x8x1xf32> to vector<2x8x8xf32>
    %196 = arith.subf %192, %195 : vector<2x8x8xf32>
    %197 = math.exp %196 : vector<2x8x8xf32>
    %cst_87 = arith.constant dense<0.000000e+00> : vector<2x8xf32>
    %198 = vector.multi_reduction <add>, %197, %cst_87 [2] : vector<2x8x8xf32> to vector<2x8xf32>
    %199 = vector.shape_cast %198 : vector<2x8xf32> to vector<2x8x1xf32>
    %200 = vector.broadcast %199 : vector<2x8x1xf32> to vector<2x8x8xf32>
    %201 = arith.divf %197, %200 : vector<2x8x8xf32>
    "tpu.trace_start"() <{level = 10 : i32, message = "bqk,bkd->bqd"}> : () -> ()
    %cst_88 = arith.constant dense<0.000000e+00> : vector<2x8x8xf32>
    %202 = tpu.matmul %201, %185, %cst_88 {dimension_numbers = #tpu.dot_dimension_numbers<[2], [1], [1], [2], [0, 0, 0, 1, 1, 2], [0], [0]>} : vector<2x8x8xf32>, vector<2x8x8xf32>, vector<2x8x8xf32> -> vector<2x8x8xf32>
    "tpu.trace_stop"() : () -> ()
    %203 = vector.shape_cast %202 : vector<2x8x8xf32> to vector<16x8xf32>
    %204 = vector.extract_strided_slice %155 {offsets = [8, 0], sizes = [8, 32], strides = [1, 1]} : vector<32x32xf32> to vector<8x32xf32>
    %cst_89 = arith.constant dense<0.000000e+00> : vector<16x32xf32>
    %205 = tpu.matmul %203, %204, %cst_89 {dimension_numbers = #tpu.dot_dimension_numbers<[1], [0], [0], [1], [0, 0, 1, 1], [], []>} : vector<16x8xf32>, vector<8x32xf32>, vector<16x32xf32> -> vector<16x32xf32>
    %206 = arith.addf %182, %205 : vector<16x32xf32>
    %207 = vector.extract_strided_slice %157 {offsets = [0, 0, 16], sizes = [2, 8, 8], strides = [1, 1, 1]} : vector<2x8x32xf32> to vector<2x8x8xf32>
    %208 = vector.extract_strided_slice %158 {offsets = [0, 0, 16], sizes = [2, 8, 8], strides = [1, 1, 1]} : vector<2x8x32xf32> to vector<2x8x8xf32>
    %209 = vector.extract_strided_slice %159 {offsets = [0, 0, 16], sizes = [2, 8, 8], strides = [1, 1, 1]} : vector<2x8x32xf32> to vector<2x8x8xf32>
    "tpu.trace_start"() <{level = 10 : i32, message = "bqd,bkd->bqk"}> : () -> ()
    %cst_90 = arith.constant dense<0.000000e+00> : vector<2x8x8xf32>
    %210 = tpu.matmul %207, %208, %cst_90 {dimension_numbers = #tpu.dot_dimension_numbers<[2], [2], [1], [1], [0, 0, 0, 1, 1, 1], [0], [0]>} : vector<2x8x8xf32>, vector<2x8x8xf32>, vector<2x8x8xf32> -> vector<2x8x8xf32>
    "tpu.trace_stop"() : () -> ()
    %cst_91 = arith.constant 0.353553385 : f32
    %211 = vector.broadcast %cst_91 : f32 to vector<2x8x8xf32>
    %212 = arith.mulf %210, %211 : vector<2x8x8xf32>
    %cst_92 = arith.constant 0.000000e+00 : f32
    %213 = vector.broadcast %cst_92 : f32 to vector<2x8x8xf32>
    %214 = arith.cmpf oeq, %5, %213 : vector<2x8x8xf32>
    %cst_93 = arith.constant -1.000000e+09 : f32
    %215 = vector.broadcast %cst_93 : f32 to vector<2x8x8xf32>
    %216 = arith.select %214, %215, %212 : vector<2x8x8xi1>, vector<2x8x8xf32>
    %cst_94 = arith.constant dense<0xFF800000> : vector<2x8xf32>
    %217 = vector.multi_reduction <maximumf>, %216, %cst_94 [2] : vector<2x8x8xf32> to vector<2x8xf32>
    %218 = vector.shape_cast %217 : vector<2x8xf32> to vector<2x8x1xf32>
    %219 = vector.broadcast %218 : vector<2x8x1xf32> to vector<2x8x8xf32>
    %220 = arith.subf %216, %219 : vector<2x8x8xf32>
    %221 = math.exp %220 : vector<2x8x8xf32>
    %cst_95 = arith.constant dense<0.000000e+00> : vector<2x8xf32>
    %222 = vector.multi_reduction <add>, %221, %cst_95 [2] : vector<2x8x8xf32> to vector<2x8xf32>
    %223 = vector.shape_cast %222 : vector<2x8xf32> to vector<2x8x1xf32>
    %224 = vector.broadcast %223 : vector<2x8x1xf32> to vector<2x8x8xf32>
    %225 = arith.divf %221, %224 : vector<2x8x8xf32>
    "tpu.trace_start"() <{level = 10 : i32, message = "bqk,bkd->bqd"}> : () -> ()
    %cst_96 = arith.constant dense<0.000000e+00> : vector<2x8x8xf32>
    %226 = tpu.matmul %225, %209, %cst_96 {dimension_numbers = #tpu.dot_dimension_numbers<[2], [1], [1], [2], [0, 0, 0, 1, 1, 2], [0], [0]>} : vector<2x8x8xf32>, vector<2x8x8xf32>, vector<2x8x8xf32> -> vector<2x8x8xf32>
    "tpu.trace_stop"() : () -> ()
    %227 = vector.shape_cast %226 : vector<2x8x8xf32> to vector<16x8xf32>
    %228 = vector.extract_strided_slice %155 {offsets = [16, 0], sizes = [8, 32], strides = [1, 1]} : vector<32x32xf32> to vector<8x32xf32>
    %cst_97 = arith.constant dense<0.000000e+00> : vector<16x32xf32>
    %229 = tpu.matmul %227, %228, %cst_97 {dimension_numbers = #tpu.dot_dimension_numbers<[1], [0], [0], [1], [0, 0, 1, 1], [], []>} : vector<16x8xf32>, vector<8x32xf32>, vector<16x32xf32> -> vector<16x32xf32>
    %230 = arith.addf %206, %229 : vector<16x32xf32>
    %231 = vector.extract_strided_slice %157 {offsets = [0, 0, 24], sizes = [2, 8, 8], strides = [1, 1, 1]} : vector<2x8x32xf32> to vector<2x8x8xf32>
    %232 = vector.extract_strided_slice %158 {offsets = [0, 0, 24], sizes = [2, 8, 8], strides = [1, 1, 1]} : vector<2x8x32xf32> to vector<2x8x8xf32>
    %233 = vector.extract_strided_slice %159 {offsets = [0, 0, 24], sizes = [2, 8, 8], strides = [1, 1, 1]} : vector<2x8x32xf32> to vector<2x8x8xf32>
    "tpu.trace_start"() <{level = 10 : i32, message = "bqd,bkd->bqk"}> : () -> ()
    %cst_98 = arith.constant dense<0.000000e+00> : vector<2x8x8xf32>
    %234 = tpu.matmul %231, %232, %cst_98 {dimension_numbers = #tpu.dot_dimension_numbers<[2], [2], [1], [1], [0, 0, 0, 1, 1, 1], [0], [0]>} : vector<2x8x8xf32>, vector<2x8x8xf32>, vector<2x8x8xf32> -> vector<2x8x8xf32>
    "tpu.trace_stop"() : () -> ()
    %cst_99 = arith.constant 0.353553385 : f32
    %235 = vector.broadcast %cst_99 : f32 to vector<2x8x8xf32>
    %236 = arith.mulf %234, %235 : vector<2x8x8xf32>
    %cst_100 = arith.constant 0.000000e+00 : f32
    %237 = vector.broadcast %cst_100 : f32 to vector<2x8x8xf32>
    %238 = arith.cmpf oeq, %5, %237 : vector<2x8x8xf32>
    %cst_101 = arith.constant -1.000000e+09 : f32
    %239 = vector.broadcast %cst_101 : f32 to vector<2x8x8xf32>
    %240 = arith.select %238, %239, %236 : vector<2x8x8xi1>, vector<2x8x8xf32>
    %cst_102 = arith.constant dense<0xFF800000> : vector<2x8xf32>
    %241 = vector.multi_reduction <maximumf>, %240, %cst_102 [2] : vector<2x8x8xf32> to vector<2x8xf32>
    %242 = vector.shape_cast %241 : vector<2x8xf32> to vector<2x8x1xf32>
    %243 = vector.broadcast %242 : vector<2x8x1xf32> to vector<2x8x8xf32>
    %244 = arith.subf %240, %243 : vector<2x8x8xf32>
    %245 = math.exp %244 : vector<2x8x8xf32>
    %cst_103 = arith.constant dense<0.000000e+00> : vector<2x8xf32>
    %246 = vector.multi_reduction <add>, %245, %cst_103 [2] : vector<2x8x8xf32> to vector<2x8xf32>
    %247 = vector.shape_cast %246 : vector<2x8xf32> to vector<2x8x1xf32>
    %248 = vector.broadcast %247 : vector<2x8x1xf32> to vector<2x8x8xf32>
    %249 = arith.divf %245, %248 : vector<2x8x8xf32>
    "tpu.trace_start"() <{level = 10 : i32, message = "bqk,bkd->bqd"}> : () -> ()
    %cst_104 = arith.constant dense<0.000000e+00> : vector<2x8x8xf32>
    %250 = tpu.matmul %249, %233, %cst_104 {dimension_numbers = #tpu.dot_dimension_numbers<[2], [1], [1], [2], [0, 0, 0, 1, 1, 2], [0], [0]>} : vector<2x8x8xf32>, vector<2x8x8xf32>, vector<2x8x8xf32> -> vector<2x8x8xf32>
    "tpu.trace_stop"() : () -> ()
    %251 = vector.shape_cast %250 : vector<2x8x8xf32> to vector<16x8xf32>
    %252 = vector.extract_strided_slice %155 {offsets = [24, 0], sizes = [8, 32], strides = [1, 1]} : vector<32x32xf32> to vector<8x32xf32>
    %cst_105 = arith.constant dense<0.000000e+00> : vector<16x32xf32>
    %253 = tpu.matmul %251, %252, %cst_105 {dimension_numbers = #tpu.dot_dimension_numbers<[1], [0], [0], [1], [0, 0, 1, 1], [], []>} : vector<16x8xf32>, vector<8x32xf32>, vector<16x32xf32> -> vector<16x32xf32>
    %254 = arith.addf %230, %253 : vector<16x32xf32>
    %255 = vector.broadcast %156 : vector<1x32xf32> to vector<16x32xf32>
    %256 = arith.addf %254, %255 : vector<16x32xf32>
    %257 = arith.addf %142, %256 : vector<16x32xf32>
    %cst_106 = arith.constant dense<0.000000e+00> : vector<16xf32>
    %258 = vector.multi_reduction <add>, %257, %cst_106 [1] : vector<16x32xf32> to vector<16xf32>
    %259 = vector.shape_cast %258 : vector<16xf32> to vector<16x1xf32>
    %cst_107 = arith.constant 3.200000e+01 : f32
    %260 = vector.broadcast %cst_107 : f32 to vector<16x1xf32>
    %261 = arith.divf %259, %260 : vector<16x1xf32>
    %262 = vector.broadcast %261 : vector<16x1xf32> to vector<16x32xf32>
    %263 = arith.subf %257, %262 : vector<16x32xf32>
    %264 = arith.mulf %263, %263 : vector<16x32xf32>
    %cst_108 = arith.constant dense<0.000000e+00> : vector<16xf32>
    %265 = vector.multi_reduction <add>, %264, %cst_108 [1] : vector<16x32xf32> to vector<16xf32>
    %266 = vector.shape_cast %265 : vector<16xf32> to vector<16x1xf32>
    %cst_109 = arith.constant 3.200000e+01 : f32
    %267 = vector.broadcast %cst_109 : f32 to vector<16x1xf32>
    %268 = arith.divf %266, %267 : vector<16x1xf32>
    %269 = vector.broadcast %261 : vector<16x1xf32> to vector<16x32xf32>
    %270 = arith.subf %257, %269 : vector<16x32xf32>
    %cst_110 = arith.constant 9.99999974E-6 : f32
    %271 = vector.broadcast %cst_110 : f32 to vector<16x1xf32>
    %272 = arith.addf %268, %271 : vector<16x1xf32>
    %273 = math.rsqrt %272 : vector<16x1xf32>
    %274 = vector.broadcast %273 : vector<16x1xf32> to vector<16x32xf32>
    %275 = arith.mulf %270, %274 : vector<16x32xf32>
    %276 = vector.extract_strided_slice %6 {offsets = [1, 0], sizes = [1, 32], strides = [1, 1]} : vector<3x32xf32> to vector<1x32xf32>
    %277 = vector.broadcast %276 : vector<1x32xf32> to vector<16x32xf32>
    %278 = arith.mulf %275, %277 : vector<16x32xf32>
    %279 = vector.extract_strided_slice %7 {offsets = [1, 0], sizes = [1, 32], strides = [1, 1]} : vector<3x32xf32> to vector<1x32xf32>
    %280 = vector.broadcast %279 : vector<1x32xf32> to vector<16x32xf32>
    %281 = arith.addf %278, %280 : vector<16x32xf32>
    %c0_111 = arith.constant 0 : index
    %c0_112 = arith.constant 0 : index
    %282 = vector.load %arg14[%c0_111, %c0_112] : memref<32x64xf32, #tpu.memory_space<vmem>>, vector<32x64xf32>
    %cst_113 = arith.constant dense<0.000000e+00> : vector<16x64xf32>
    %283 = tpu.matmul %281, %282, %cst_113 {dimension_numbers = #tpu.dot_dimension_numbers<[1], [0], [0], [1], [0, 0, 1, 1], [], []>} : vector<16x32xf32>, vector<32x64xf32>, vector<16x64xf32> -> vector<16x64xf32>
    %c0_114 = arith.constant 0 : index
    %c0_115 = arith.constant 0 : index
    %284 = vector.load %arg15[%c0_114, %c0_115] : memref<1x64xf32, #tpu.memory_space<vmem>>, vector<1x64xf32>
    %285 = vector.broadcast %284 : vector<1x64xf32> to vector<16x64xf32>
    %286 = arith.addf %283, %285 : vector<16x64xf32>
    %cst_116 = arith.constant 0.000000e+00 : f32
    %287 = vector.broadcast %cst_116 : f32 to vector<16x64xf32>
    %288 = arith.maximumf %286, %287 : vector<16x64xf32>
    %c0_117 = arith.constant 0 : index
    %c0_118 = arith.constant 0 : index
    %289 = vector.load %arg16[%c0_117, %c0_118] : memref<64x32xf32, #tpu.memory_space<vmem>>, vector<64x32xf32>
    %cst_119 = arith.constant dense<0.000000e+00> : vector<16x32xf32>
    %290 = tpu.matmul %288, %289, %cst_119 {dimension_numbers = #tpu.dot_dimension_numbers<[1], [0], [0], [1], [0, 0, 1, 1], [], []>} : vector<16x64xf32>, vector<64x32xf32>, vector<16x32xf32> -> vector<16x32xf32>
    %c0_120 = arith.constant 0 : index
    %c0_121 = arith.constant 0 : index
    %291 = vector.load %arg17[%c0_120, %c0_121] : memref<1x32xf32, #tpu.memory_space<vmem>>, vector<1x32xf32>
    %292 = vector.broadcast %291 : vector<1x32xf32> to vector<16x32xf32>
    %293 = arith.addf %290, %292 : vector<16x32xf32>
    %294 = arith.addf %281, %293 : vector<16x32xf32>
    %cst_122 = arith.constant dense<0.000000e+00> : vector<16xf32>
    %295 = vector.multi_reduction <add>, %294, %cst_122 [1] : vector<16x32xf32> to vector<16xf32>
    %296 = vector.shape_cast %295 : vector<16xf32> to vector<16x1xf32>
    %cst_123 = arith.constant 3.200000e+01 : f32
    %297 = vector.broadcast %cst_123 : f32 to vector<16x1xf32>
    %298 = arith.divf %296, %297 : vector<16x1xf32>
    %299 = vector.broadcast %298 : vector<16x1xf32> to vector<16x32xf32>
    %300 = arith.subf %294, %299 : vector<16x32xf32>
    %301 = arith.mulf %300, %300 : vector<16x32xf32>
    %cst_124 = arith.constant dense<0.000000e+00> : vector<16xf32>
    %302 = vector.multi_reduction <add>, %301, %cst_124 [1] : vector<16x32xf32> to vector<16xf32>
    %303 = vector.shape_cast %302 : vector<16xf32> to vector<16x1xf32>
    %cst_125 = arith.constant 3.200000e+01 : f32
    %304 = vector.broadcast %cst_125 : f32 to vector<16x1xf32>
    %305 = arith.divf %303, %304 : vector<16x1xf32>
    %306 = vector.broadcast %298 : vector<16x1xf32> to vector<16x32xf32>
    %307 = arith.subf %294, %306 : vector<16x32xf32>
    %cst_126 = arith.constant 9.99999974E-6 : f32
    %308 = vector.broadcast %cst_126 : f32 to vector<16x1xf32>
    %309 = arith.addf %305, %308 : vector<16x1xf32>
    %310 = math.rsqrt %309 : vector<16x1xf32>
    %311 = vector.broadcast %310 : vector<16x1xf32> to vector<16x32xf32>
    %312 = arith.mulf %307, %311 : vector<16x32xf32>
    %313 = vector.extract_strided_slice %6 {offsets = [2, 0], sizes = [1, 32], strides = [1, 1]} : vector<3x32xf32> to vector<1x32xf32>
    %314 = vector.broadcast %313 : vector<1x32xf32> to vector<16x32xf32>
    %315 = arith.mulf %312, %314 : vector<16x32xf32>
    %316 = vector.extract_strided_slice %7 {offsets = [2, 0], sizes = [1, 32], strides = [1, 1]} : vector<3x32xf32> to vector<1x32xf32>
    %317 = vector.broadcast %316 : vector<1x32xf32> to vector<16x32xf32>
    %318 = arith.addf %315, %317 : vector<16x32xf32>
    %319 = vector.shape_cast %318 : vector<16x32xf32> to vector<2x8x32xf32>
    %c0_127 = arith.constant 0 : index
    %c0_128 = arith.constant 0 : index
    %c0_129 = arith.constant 0 : index
    %320 = vector.load %arg20[%c0_127, %c0_128, %c0_129] : memref<2x8x32xf32, #tpu.memory_space<vmem>>, vector<2x8x32xf32>
    tpu.vector_store %arg20[%c0_127, %c0_128, %c0_129], %319 {strides = array<i32>} : memref<2x8x32xf32, #tpu.memory_space<vmem>>, vector<2x8x32xf32>,
    return
  }
}

</mosaic_0001>

<llo_original>
// kernel: tpu_custom_call.1
$region0: #{tpu_custom_call.1}
  #allocation0 [shape = 'u32[]', space=smem, size = 0x4, offset = 0x4, fixed_abs, tag = 'smem constant byte address 0x4 - core index']
  #allocation1 [shape = 'u32[144,128]{1,0:T(1,128)}', space=vmem, size = 0x12000, scoped, tag = 'internal scratch']
  %s0 = inlined_call_operand.hbm [shape: f32[2,8,32], index: 0, kind: input, shape index: {}]
  %s1 = inlined_call_operand.hbm [shape: f32[2,8,32], index: 1, kind: input, shape index: {}]
  %s2 = inlined_call_operand.hbm [shape: f32[2,8,8], index: 2, kind: input, shape index: {}]
  %s3 = inlined_call_operand.hbm [shape: f32[2,8,8], index: 3, kind: input, shape index: {}]
  %s4 = inlined_call_operand.vmem [shape: f32[32,96], index: 4, kind: input, shape index: {}]
  %s5 = inlined_call_operand.vmem [shape: f32[1,96], index: 5, kind: input, shape index: {}]
  %s6 = inlined_call_operand.vmem [shape: f32[32,32], index: 6, kind: input, shape index: {}]
  %s7 = inlined_call_operand.vmem [shape: f32[1,32], index: 7, kind: input, shape index: {}]
  %s8 = inlined_call_operand.vmem [shape: f32[32,32], index: 8, kind: input, shape index: {}]
  %s9 = inlined_call_operand.vmem [shape: f32[1,32], index: 9, kind: input, shape index: {}]
  %s10 = inlined_call_operand.hbm [shape: f32[32,64], index: 10, kind: input, shape index: {}]
  %s11 = inlined_call_operand.vmem [shape: f32[1,64], index: 11, kind: input, shape index: {}]
  %s12 = inlined_call_operand.hbm [shape: f32[32,32], index: 12, kind: input, shape index: {}]
  %s13 = inlined_call_operand.vmem [shape: f32[1,32], index: 13, kind: input, shape index: {}]
  %s14 = inlined_call_operand.hbm [shape: f32[32,64], index: 14, kind: input, shape index: {}]
  %s15 = inlined_call_operand.vmem [shape: f32[1,64], index: 15, kind: input, shape index: {}]
  %s16 = inlined_call_operand.vmem [shape: f32[64,32], index: 16, kind: input, shape index: {}]
  %s17 = inlined_call_operand.vmem [shape: f32[1,32], index: 17, kind: input, shape index: {}]
  %s18 = inlined_call_operand.vmem [shape: f32[3,32], index: 18, kind: input, shape index: {}]
  %s19 = inlined_call_operand.vmem [shape: f32[3,32], index: 19, kind: input, shape index: {}]
  %s20 = inlined_call_operand.hbm [shape: f32[2,8,32], index: 20, kind: output, shape index: {}]
  %s21 = sld [smem:[#allocation0]]
  $region118: #{tpu_custom_call.1} parent=0
    _
  %s23 = ssub.s32 1, %s21
  %s24 = scalar_select 0, %s23, %s21
  $region1: #{tpu_custom_call.1} parent=0
    #allocation2 [shape = 'u8[8192]{0}', space=vmem, size = 0x2000, scoped, tag = 'input window, operand 0, single buffered']
    #allocation3 [shape = 's32[1]{0}', space=sflag, size = 0x4, scoped, tag = 'scoped memory for tpu_custom_call.1']
    #allocation4 [shape = 's32[1]{0}', space=sflag, size = 0x4, scoped, tag = 'scoped memory for tpu_custom_call.1']
    #allocation5 [shape = 'u8[8192]{0}', space=vmem, size = 0x2000, scoped, tag = 'input window, operand 1, single buffered']
    #allocation6 [shape = 's32[1]{0}', space=sflag, size = 0x4, scoped, tag = 'scoped memory for tpu_custom_call.1']
    #allocation7 [shape = 'u8[8192]{0}', space=vmem, size = 0x2000, scoped, tag = 'input window, operand 2, single buffered']
    #allocation8 [shape = 'u8[8192]{0}', space=vmem, size = 0x2000, scoped, tag = 'input window, operand 3, single buffered']
    #allocation9 [shape = 's32[1]{0}', space=sflag, size = 0x4, scoped, tag = 'scoped memory for tpu_custom_call.1']
    #allocation10 [shape = 'u8[16384]{0}', space=vmem, size = 0x4000, scoped, tag = 'input window, operand 10, single buffered']
    #allocation11 [shape = 'u8[16384]{0}', space=vmem, size = 0x4000, scoped, tag = 'input window, operand 12, single buffered']
    #allocation12 [shape = 's32[1]{0}', space=sflag, size = 0x4, scoped, tag = 'scoped memory for tpu_custom_call.1']
    #allocation13 [shape = 'u8[16384]{0}', space=vmem, size = 0x4000, scoped, tag = 'input window, operand 14, single buffered']
    #allocation14 [shape = 'u8[8192]{0}', space=vmem, size = 0x2000, scoped, tag = 'output window, operand 0, single buffered']
    %25 = vsyncpa [#allocation3], 0
    %26 = vsyncpa [#allocation6], 0
    %27 = vsyncpa [#allocation9], 0
    %28 = vsyncpa [#allocation12], 0
    %29 = vsyncpa [#allocation4], 0
    // Predicated region
    $region2: #{tpu_custom_call.1} parent=1 // pred_check
      _
    $region3: #{tpu_custom_call.1} parent=1 // pred_check_branch
      %31 = sbr.rel (0) target = $region5
    $region4: #{tpu_custom_call.1} parent=1 // pred_region
      %s33 = ssub.s32 256, 256
      %34 = vsyncadd [#allocation3], %s33
      %s35 = sshll.u32 [#allocation2], 4
      %s36 = int_to_ptr.vmem [resolvable:$true] %s35
      %41 = dma.hbm_to_vmem [thread:$0]  %s0, 256, %s36, [#allocation3], 128, 128, 8
    $region5: #{tpu_custom_call.1} parent=1 // pred_fallthru
      _
    // Predicated region
    $region6: #{tpu_custom_call.1} parent=1 // pred_check
      _
    $region7: #{tpu_custom_call.1} parent=1 // pred_check_branch
      %43 = sbr.rel (0) target = $region9
    $region8: #{tpu_custom_call.1} parent=1 // pred_region
      %s45 = ssub.s32 256, 256
      %46 = vsyncadd [#allocation6], %s45
      %s47 = sshll.u32 [#allocation5], 4
      %s48 = int_to_ptr.vmem [resolvable:$true] %s47
      %53 = dma.hbm_to_vmem [thread:$0]  %s1, 256, %s48, [#allocation6], 128, 128, 8
    $region9: #{tpu_custom_call.1} parent=1 // pred_fallthru
      _
    // Predicated region
    $region10: #{tpu_custom_call.1} parent=1 // pred_check
      _
    $region11: #{tpu_custom_call.1} parent=1 // pred_check_branch
      %55 = sbr.rel (0) target = $region13
    $region12: #{tpu_custom_call.1} parent=1 // pred_region
      %s57 = ssub.s32 256, 256
      %58 = vsyncadd [#allocation6], %s57
      %s59 = sshll.u32 [#allocation7], 4
      %s60 = int_to_ptr.vmem [resolvable:$true] %s59
      %65 = dma.hbm_to_vmem [thread:$0]  %s2, 256, %s60, [#allocation6], 128, 128, 8
    $region13: #{tpu_custom_call.1} parent=1 // pred_fallthru
      _
    // Predicated region
    $region14: #{tpu_custom_call.1} parent=1 // pred_check
      _
    $region15: #{tpu_custom_call.1} parent=1 // pred_check_branch
      %67 = sbr.rel (0) target = $region17
    $region16: #{tpu_custom_call.1} parent=1 // pred_region
      %s69 = ssub.s32 256, 256
      %70 = vsyncadd [#allocation9], %s69
      %s71 = sshll.u32 [#allocation8], 4
      %s72 = int_to_ptr.vmem [resolvable:$true] %s71
      %77 = dma.hbm_to_vmem [thread:$0]  %s3, 256, %s72, [#allocation9], 128, 128, 8
    $region17: #{tpu_custom_call.1} parent=1 // pred_fallthru
      _
    // Predicated region
    $region18: #{tpu_custom_call.1} parent=1 // pred_check
      _
    $region19: #{tpu_custom_call.1} parent=1 // pred_check_branch
      %79 = sbr.rel (0) target = $region21
    $region20: #{tpu_custom_call.1} parent=1 // pred_region
      _
    $region21: #{tpu_custom_call.1} parent=1 // pred_fallthru
      _
    // Predicated region
    $region22: #{tpu_custom_call.1} parent=1 // pred_check
      _
    $region23: #{tpu_custom_call.1} parent=1 // pred_check_branch
      %81 = sbr.rel (0) target = $region25
    $region24: #{tpu_custom_call.1} parent=1 // pred_region
      _
    $region25: #{tpu_custom_call.1} parent=1 // pred_fallthru
      _
    // Predicated region
    $region26: #{tpu_custom_call.1} parent=1 // pred_check
      _
    $region27: #{tpu_custom_call.1} parent=1 // pred_check_branch
      %83 = sbr.rel (0) target = $region29
    $region28: #{tpu_custom_call.1} parent=1 // pred_region
      _
    $region29: #{tpu_custom_call.1} parent=1 // pred_fallthru
      _
    // Predicated region
    $region30: #{tpu_custom_call.1} parent=1 // pred_check
      _
    $region31: #{tpu_custom_call.1} parent=1 // pred_check_branch
      %85 = sbr.rel (0) target = $region33
    $region32: #{tpu_custom_call.1} parent=1 // pred_region
      _
    $region33: #{tpu_custom_call.1} parent=1 // pred_fallthru
      _
    // Predicated region
    $region34: #{tpu_custom_call.1} parent=1 // pred_check
      _
    $region35: #{tpu_custom_call.1} parent=1 // pred_check_branch
      %87 = sbr.rel (0) target = $region37
    $region36: #{tpu_custom_call.1} parent=1 // pred_region
      _
    $region37: #{tpu_custom_call.1} parent=1 // pred_fallthru
      _
    // Predicated region
    $region38: #{tpu_custom_call.1} parent=1 // pred_check
      _
    $region39: #{tpu_custom_call.1} parent=1 // pred_check_branch
      %89 = sbr.rel (0) target = $region41
    $region40: #{tpu_custom_call.1} parent=1 // pred_region
      _
    $region41: #{tpu_custom_call.1} parent=1 // pred_fallthru
      _
    // Predicated region
    $region42: #{tpu_custom_call.1} parent=1 // pred_check
      _
    $region43: #{tpu_custom_call.1} parent=1 // pred_check_branch
      %91 = sbr.rel (0) target = $region45
    $region44: #{tpu_custom_call.1} parent=1 // pred_region
      %s93 = ssub.s32 512, 512
      %94 = vsyncadd [#allocation9], %s93
      %s95 = sshll.u32 [#allocation10], 4
      %s96 = int_to_ptr.vmem [resolvable:$true] %s95
      %101 = dma.hbm_to_vmem [thread:$0]  %s10, 512, %s96, [#allocation9], 128, 128, 8
    $region45: #{tpu_custom_call.1} parent=1 // pred_fallthru
      _
    // Predicated region
    $region46: #{tpu_custom_call.1} parent=1 // pred_check
      _
    $region47: #{tpu_custom_call.1} parent=1 // pred_check_branch
      %103 = sbr.rel (0) target = $region49
    $region48: #{tpu_custom_call.1} parent=1 // pred_region
      _
    $region49: #{tpu_custom_call.1} parent=1 // pred_fallthru
      _
    // Predicated region
    $region50: #{tpu_custom_call.1} parent=1 // pred_check
      _
    $region51: #{tpu_custom_call.1} parent=1 // pred_check_branch
      %105 = sbr.rel (0) target = $region53
    $region52: #{tpu_custom_call.1} parent=1 // pred_region
      %s107 = ssub.s32 512, 512
      %108 = vsyncadd [#allocation12], %s107
      %s109 = sshll.u32 [#allocation11], 4
      %s110 = int_to_ptr.vmem [resolvable:$true] %s109
      %115 = dma.hbm_to_vmem [thread:$0]  %s12, 512, %s110, [#allocation12], 128, 128, 8
    $region53: #{tpu_custom_call.1} parent=1 // pred_fallthru
      _
    // Predicated region
    $region54: #{tpu_custom_call.1} parent=1 // pred_check
      _
    $region55: #{tpu_custom_call.1} parent=1 // pred_check_branch
      %117 = sbr.rel (0) target = $region57
    $region56: #{tpu_custom_call.1} parent=1 // pred_region
      _
    $region57: #{tpu_custom_call.1} parent=1 // pred_fallthru
      _
    // Predicated region
    $region58: #{tpu_custom_call.1} parent=1 // pred_check
      _
    $region59: #{tpu_custom_call.1} parent=1 // pred_check_branch
      %119 = sbr.rel (0) target = $region61
    $region60: #{tpu_custom_call.1} parent=1 // pred_region
      %s121 = ssub.s32 512, 512
      %122 = vsyncadd [#allocation12], %s121
      %s123 = sshll.u32 [#allocation13], 4
      %s124 = int_to_ptr.vmem [resolvable:$true] %s123
      %129 = dma.hbm_to_vmem [thread:$0]  %s14, 512, %s124, [#allocation12], 128, 128, 8
    $region61: #{tpu_custom_call.1} parent=1 // pred_fallthru
      _
    // Predicated region
    $region62: #{tpu_custom_call.1} parent=1 // pred_check
      _
    $region63: #{tpu_custom_call.1} parent=1 // pred_check_branch
      %131 = sbr.rel (0) target = $region65
    $region64: #{tpu_custom_call.1} parent=1 // pred_region
      _
    $region65: #{tpu_custom_call.1} parent=1 // pred_fallthru
      _
    // Predicated region
    $region66: #{tpu_custom_call.1} parent=1 // pred_check
      _
    $region67: #{tpu_custom_call.1} parent=1 // pred_check_branch
      %133 = sbr.rel (0) target = $region69
    $region68: #{tpu_custom_call.1} parent=1 // pred_region
      _
    $region69: #{tpu_custom_call.1} parent=1 // pred_fallthru
      _
    // Predicated region
    $region70: #{tpu_custom_call.1} parent=1 // pred_check
      _
    $region71: #{tpu_custom_call.1} parent=1 // pred_check_branch
      %135 = sbr.rel (0) target = $region73
    $region72: #{tpu_custom_call.1} parent=1 // pred_region
      _
    $region73: #{tpu_custom_call.1} parent=1 // pred_fallthru
      _
    // Predicated region
    $region74: #{tpu_custom_call.1} parent=1 // pred_check
      _
    $region75: #{tpu_custom_call.1} parent=1 // pred_check_branch
      %137 = sbr.rel (0) target = $region77
    $region76: #{tpu_custom_call.1} parent=1 // pred_region
      _
    $region77: #{tpu_custom_call.1} parent=1 // pred_fallthru
      _
    // Predicated region
    $region78: #{tpu_custom_call.1} parent=1 // pred_check
      _
    $region79: #{tpu_custom_call.1} parent=1 // pred_check_branch
      %139 = sbr.rel (0) target = $region81
    $region80: #{tpu_custom_call.1} parent=1 // pred_region
      _
    $region81: #{tpu_custom_call.1} parent=1 // pred_fallthru
      _
    // Predicated region
    $region82: #{tpu_custom_call.1} parent=1 // pred_check
      _
    $region83: #{tpu_custom_call.1} parent=1 // pred_check_branch
      %141 = sbr.rel (0) target = $region85
    $region84: #{tpu_custom_call.1} parent=1 // pred_region
      %142 = dma.done [#allocation3], 256
    $region85: #{tpu_custom_call.1} parent=1 // pred_fallthru
      _
    // Predicated region
    $region86: #{tpu_custom_call.1} parent=1 // pred_check
      _
    $region87: #{tpu_custom_call.1} parent=1 // pred_check_branch
      %144 = sbr.rel (0) target = $region89
    $region88: #{tpu_custom_call.1} parent=1 // pred_region
      %145 = dma.done [#allocation6], 256
    $region89: #{tpu_custom_call.1} parent=1 // pred_fallthru
      _
    // Predicated region
    $region90: #{tpu_custom_call.1} parent=1 // pred_check
      _
    $region91: #{tpu_custom_call.1} parent=1 // pred_check_branch
      %147 = sbr.rel (0) target = $region93
    $region92: #{tpu_custom_call.1} parent=1 // pred_region
      %148 = dma.done [#allocation6], 256
    $region93: #{tpu_custom_call.1} parent=1 // pred_fallthru
      _
    // Predicated region
    $region94: #{tpu_custom_call.1} parent=1 // pred_check
      _
    $region95: #{tpu_custom_call.1} parent=1 // pred_check_branch
      %150 = sbr.rel (0) target = $region97
    $region96: #{tpu_custom_call.1} parent=1 // pred_region
      %151 = dma.done [#allocation9], 256
    $region97: #{tpu_custom_call.1} parent=1 // pred_fallthru
      _
    // Predicated region
    $region98: #{tpu_custom_call.1} parent=1 // pred_check
      _
    $region99: #{tpu_custom_call.1} parent=1 // pred_check_branch
      %153 = sbr.rel (0) target = $region101
    $region100: #{tpu_custom_call.1} parent=1 // pred_region
      %154 = dma.done [#allocation9], 512
    $region101: #{tpu_custom_call.1} parent=1 // pred_fallthru
      _
    // Predicated region
    $region102: #{tpu_custom_call.1} parent=1 // pred_check
      _
    $region103: #{tpu_custom_call.1} parent=1 // pred_check_branch
      %156 = sbr.rel (0) target = $region105
    $region104: #{tpu_custom_call.1} parent=1 // pred_region
      %157 = dma.done [#allocation12], 512
    $region105: #{tpu_custom_call.1} parent=1 // pred_fallthru
      _
    // Predicated region
    $region106: #{tpu_custom_call.1} parent=1 // pred_check
      _
    $region107: #{tpu_custom_call.1} parent=1 // pred_check_branch
      %159 = sbr.rel (0) target = $region109
    $region108: #{tpu_custom_call.1} parent=1 // pred_region
      %160 = dma.done [#allocation12], 512
    $region109: #{tpu_custom_call.1} parent=1 // pred_fallthru
      _
    %v161 = vld [vmem:[#allocation2] sm:$0xff]
    %v162 = vld [vmem:[#allocation2 + $0x8] sm:$0xff]
    %v163 = vld [vmem:[#allocation5] sm:$0xff]
    %v164 = vld [vmem:[#allocation5 + $0x8] sm:$0xff]
    %v165 = vld [vmem:[#allocation7] sm:$0xff]
    %v166 = vld [vmem:[#allocation7 + $0x8] sm:$0xff]
    %v167 = vld [vmem:[#allocation8] sm:$0xff]
    %v168 = vld [vmem:[#allocation8 + $0x8] sm:$0xff]
    %v169 = vld [vmem:[%s18] sm:$0x7]
    %v170 = vld [vmem:[%s19] sm:$0x7]
    %v171 = vld [vmem:[%s4] sm:$0xff]
    %v172 = vld [vmem:[%s4 + $0x8] sm:$0xff]
    %v173 = vld [vmem:[%s4 + $0x10] sm:$0xff]
    %v174 = vld [vmem:[%s4 + $0x18] sm:$0xff]
    %v175 = vld [vmem:[%s5] sm:$0x1]
    %v177 = vlaneseq
    %v178 = vshrl.u32 %v177, 7
    %v179 = vsub.s32 0, %v178
    %v180 = vrot.slane %v175, %v179
    %vm182 = vcmask 261120
    %v184 = vsel %vm182, %v161, 0
    %v187 = vsel %vm182, %v162, 0
    %189 = vmatprep.subr.mxu0 0.0
    %190 = vmatpush1.msra.mxu0 %v171
    %191 = vmatprep.subr.mxu0 0.0
    %192 = vmatpush1.msra.mxu0 %v172
    %193 = vmatprep.subr.mxu0 0.0
    %194 = vmatpush1.msra.mxu0 %v173
    %195 = vmatprep.subr.mxu0 0.0
    %196 = vmatpush1.msra.mxu0 %v174
    %197 = vmatprep.subr.mxu0 0.0
    %198 = vmatpush1.msra.mxu0 0.0
    %199 = vmatprep.subr.mxu0 0.0
    %200 = vmatpush1.msra.mxu0 0.0
    %201 = vmatprep.subr.mxu0 0.0
    %202 = vmatpush1.msra.mxu0 0.0
    %203 = vmatprep.subr.mxu0 0.0
    %204 = vmatpush1.msra.mxu0 0.0
    %205 = vmatprep.subr.mxu0 0.0
    %206 = vmatpush1.msra.mxu0 0.0
    %207 = vmatprep.subr.mxu0 0.0
    %208 = vmatpush1.msra.mxu0 0.0
    %209 = vmatprep.subr.mxu0 0.0
    %210 = vmatpush1.msra.mxu0 0.0
    %211 = vmatprep.subr.mxu0 0.0
    %212 = vmatpush1.msra.mxu0 0.0
    %213 = vmatprep.subr.mxu0 0.0
    %214 = vmatpush1.msra.mxu0 0.0
    %215 = vmatprep.subr.mxu0 0.0
    %216 = vmatpush1.msra.mxu0 0.0
    %217 = vmatprep.subr.mxu0 0.0
    %218 = vmatpush1.msra.mxu0 0.0
    %219 = vmatprep.subr.mxu0 0.0
    %220 = vmatpush1.msra.mxu0 0.0
    %221 = vmatprep.subr.mxu0 0.0
    %222 = vmatpush1.msra.mxu0 0.0
    %223 = vmatprep.subr.mxu0 0.0
    %224 = vmatpush1.msra.mxu0 0.0
    %225 = vmatprep.subr.mxu0 0.0
    %226 = vmatpush1.msra.mxu0 0.0
    %227 = vmatprep.subr.mxu0 0.0
    %228 = vmatpush1.msra.mxu0 0.0
    %229 = vmatprep.subr.mxu0 0.0
    %230 = vmatpush1.msra.mxu0 0.0
    %231 = vmatprep.subr.mxu0 0.0
    %232 = vmatpush1.msra.mxu0 0.0
    %233 = vmatprep.subr.mxu0 0.0
    %234 = vmatpush1.msra.mxu0 0.0
    %235 = vmatprep.subr.mxu0 0.0
    %236 = vmatpush1.msra.mxu0 0.0
    %237 = vmatprep.subr.mxu0 0.0
    %238 = vmatpush1.msra.mxu0 0.0
    %239 = vmatprep.subr.mxu0 0.0
    %240 = vmatpush1.msra.mxu0 0.0
    %241 = vmatprep.subr.mxu0 0.0
    %242 = vmatpush1.msra.mxu0 0.0
    %243 = vmatprep.subr.mxu0 0.0
    %244 = vmatpush1.msra.mxu0 0.0
    %245 = vmatprep.subr.mxu0 0.0
    %246 = vmatpush1.msra.mxu0 0.0
    %247 = vmatprep.subr.mxu0 0.0
    %248 = vmatpush1.msra.mxu0 0.0
    %249 = vmatprep.subr.mxu0 0.0
    %250 = vmatpush1.msra.mxu0 0.0
    %251 = vmatprep.subr.mxu0 0.0
    %252 = vmatpush1.msra.mxu0 0.0
    %253 = vmatprep.mubr.f32.mxu0 0.0
    %254 = vmatmul.mubr.f32.gmra.mrb[0].mxu0 %v184
    %v255 = vpop.f32.mrb[0].mxu0
    %v256 = vadd.f32 %v180, %v255
    %v257 = vpop.f32.mrb[0].mxu0
    %258 = vmatprep.mubr.f32.mxu0 0.0
    %259 = vmatmul.mubr.f32.gmra.mrb[0].mxu0 %v187
    %v260 = vpop.f32.mrb[0].mxu0
    %v261 = vadd.f32 %v180, %v260
    %v262 = vpop.f32.mrb[0].mxu0
    %263 = vdwg.mxu0
    %v264 = vld [vmem:[%s6] sm:$0xff]
    %v265 = vld [vmem:[%s6 + $0x8] sm:$0xff]
    %v266 = vld [vmem:[%s6 + $0x10] sm:$0xff]
    %v267 = vld [vmem:[%s6 + $0x18] sm:$0xff]
    %v268 = vld [vmem:[%s7] sm:$0x1]
    %270 = vrot.lane.b32.xlu0 %v256, 96
    %v271 = vpop.permute.xlu0 %270
    %vm272 = vcmask 64512
    %v273 = vsel %vm272, %v256, 0
    %v275 = vsel %vm272, %v271, 0
    %277 = vmatprep.subr.mxu0 0.0
    %278 = vmatpush1.xpose.msra.mxu0 %v275
    %279 = vmatprep.subr.mxu0 0.0
    %280 = vmatpush1.xpose.msra.mxu0 0.0
    %281 = vmatprep.subr.mxu0 0.0
    %282 = vmatpush1.xpose.msra.mxu0 0.0
    %283 = vmatprep.subr.mxu0 0.0
    %284 = vmatpush1.xpose.msra.mxu0 0.0
    %285 = vmatprep.subr.mxu0 0.0
    %286 = vmatpush1.xpose.msra.mxu0 0.0
    %287 = vmatprep.subr.mxu0 0.0
    %288 = vmatpush1.xpose.msra.mxu0 0.0
    %289 = vmatprep.subr.mxu0 0.0
    %290 = vmatpush1.xpose.msra.mxu0 0.0
    %291 = vmatprep.subr.mxu0 0.0
    %292 = vmatpush1.xpose.msra.mxu0 0.0
    %293 = vmatprep.subr.mxu0 0.0
    %294 = vmatpush1.xpose.msra.mxu0 0.0
    %295 = vmatprep.subr.mxu0 0.0
    %296 = vmatpush1.xpose.msra.mxu0 0.0
    %297 = vmatprep.subr.mxu0 0.0
    %298 = vmatpush1.xpose.msra.mxu0 0.0
    %299 = vmatprep.subr.mxu0 0.0
    %300 = vmatpush1.xpose.msra.mxu0 0.0
    %301 = vmatprep.subr.mxu0 0.0
    %302 = vmatpush1.xpose.msra.mxu0 0.0
    %303 = vmatprep.subr.mxu0 0.0
    %304 = vmatpush1.xpose.msra.mxu0 0.0
    %305 = vmatprep.subr.mxu0 0.0
    %306 = vmatpush1.xpose.msra.mxu0 0.0
    %307 = vmatprep.subr.mxu0 0.0
    %308 = vmatpush1.xpose.msra.mxu0 0.0
    %309 = vmatprep.subr.mxu0 0.0
    %310 = vmatpush1.xpose.msra.mxu0 0.0
    %311 = vmatprep.subr.mxu0 0.0
    %312 = vmatpush1.xpose.msra.mxu0 0.0
    %313 = vmatprep.subr.mxu0 0.0
    %314 = vmatpush1.xpose.msra.mxu0 0.0
    %315 = vmatprep.subr.mxu0 0.0
    %316 = vmatpush1.xpose.msra.mxu0 0.0
    %317 = vmatprep.subr.mxu0 0.0
    %318 = vmatpush1.xpose.msra.mxu0 0.0
    %319 = vmatprep.subr.mxu0 0.0
    %320 = vmatpush1.xpose.msra.mxu0 0.0
    %321 = vmatprep.subr.mxu0 0.0
    %322 = vmatpush1.xpose.msra.mxu0 0.0
    %323 = vmatprep.subr.mxu0 0.0
    %324 = vmatpush1.xpose.msra.mxu0 0.0
    %325 = vmatprep.subr.mxu0 0.0
    %326 = vmatpush1.xpose.msra.mxu0 0.0
    %327 = vmatprep.subr.mxu0 0.0
    %328 = vmatpush1.xpose.msra.mxu0 0.0
    %329 = vmatprep.subr.mxu0 0.0
    %330 = vmatpush1.xpose.msra.mxu0 0.0
    %331 = vmatprep.subr.mxu0 0.0
    %332 = vmatpush1.xpose.msra.mxu0 0.0
    %333 = vmatprep.subr.mxu0 0.0
    %334 = vmatpush1.xpose.msra.mxu0 0.0
    %335 = vmatprep.subr.mxu0 0.0
    %336 = vmatpush1.xpose.msra.mxu0 0.0
    %337 = vmatprep.subr.mxu0 0.0
    %338 = vmatpush1.xpose.msra.mxu0 0.0
    %339 = vmatprep.subr.mxu0 0.0
    %340 = vmatpush1.xpose.msra.mxu0 0.0
    %341 = vmatprep.mubr.f32.mxu0 0.0
    %342 = vmatmul.mubr.f32.gmra.mrb[0].mxu0 %v273
    %v343 = vpop.f32.mrb[0].mxu0
    %v344 = vadd.f32 0.0, %v343
    %v345 = vpop.f32.mrb[0].mxu0
    %346 = vdwg.mxu0
    %348 = vrot.lane.b32.xlu0 %v261, 96
    %v349 = vpop.permute.xlu0 %348
    %v350 = vsel %vm272, %v261, 0
    %v352 = vsel %vm272, %v349, 0
    %354 = vmatprep.subr.mxu0 0.0
    %355 = vmatpush1.xpose.msra.mxu0 %v352
    %356 = vmatprep.subr.mxu0 0.0
    %357 = vmatpush1.xpose.msra.mxu0 0.0
    %358 = vmatprep.subr.mxu0 0.0
    %359 = vmatpush1.xpose.msra.mxu0 0.0
    %360 = vmatprep.subr.mxu0 0.0
    %361 = vmatpush1.xpose.msra.mxu0 0.0
    %362 = vmatprep.subr.mxu0 0.0
    %363 = vmatpush1.xpose.msra.mxu0 0.0
    %364 = vmatprep.subr.mxu0 0.0
    %365 = vmatpush1.xpose.msra.mxu0 0.0
    %366 = vmatprep.subr.mxu0 0.0
    %367 = vmatpush1.xpose.msra.mxu0 0.0
    %368 = vmatprep.subr.mxu0 0.0
    %369 = vmatpush1.xpose.msra.mxu0 0.0
    %370 = vmatprep.subr.mxu0 0.0
    %371 = vmatpush1.xpose.msra.mxu0 0.0
    %372 = vmatprep.subr.mxu0 0.0
    %373 = vmatpush1.xpose.msra.mxu0 0.0
    %374 = vmatprep.subr.mxu0 0.0
    %375 = vmatpush1.xpose.msra.mxu0 0.0
    %376 = vmatprep.subr.mxu0 0.0
    %377 = vmatpush1.xpose.msra.mxu0 0.0
    %378 = vmatprep.subr.mxu0 0.0
    %379 = vmatpush1.xpose.msra.mxu0 0.0
    %380 = vmatprep.subr.mxu0 0.0
    %381 = vmatpush1.xpose.msra.mxu0 0.0
    %382 = vmatprep.subr.mxu0 0.0
    %383 = vmatpush1.xpose.msra.mxu0 0.0
    %384 = vmatprep.subr.mxu0 0.0
    %385 = vmatpush1.xpose.msra.mxu0 0.0
    %386 = vmatprep.subr.mxu0 0.0
    %387 = vmatpush1.xpose.msra.mxu0 0.0
    %388 = vmatprep.subr.mxu0 0.0
    %389 = vmatpush1.xpose.msra.mxu0 0.0
    %390 = vmatprep.subr.mxu0 0.0
    %391 = vmatpush1.xpose.msra.mxu0 0.0
    %392 = vmatprep.subr.mxu0 0.0
    %393 = vmatpush1.xpose.msra.mxu0 0.0
    %394 = vmatprep.subr.mxu0 0.0
    %395 = vmatpush1.xpose.msra.mxu0 0.0
    %396 = vmatprep.subr.mxu0 0.0
    %397 = vmatpush1.xpose.msra.mxu0 0.0
    %398 = vmatprep.subr.mxu0 0.0
    %399 = vmatpush1.xpose.msra.mxu0 0.0
    %400 = vmatprep.subr.mxu0 0.0
    %401 = vmatpush1.xpose.msra.mxu0 0.0
    %402 = vmatprep.subr.mxu0 0.0
    %403 = vmatpush1.xpose.msra.mxu0 0.0
    %404 = vmatprep.subr.mxu0 0.0
    %405 = vmatpush1.xpose.msra.mxu0 0.0
    %406 = vmatprep.subr.mxu0 0.0
    %407 = vmatpush1.xpose.msra.mxu0 0.0
    %408 = vmatprep.subr.mxu0 0.0
    %409 = vmatpush1.xpose.msra.mxu0 0.0
    %410 = vmatprep.subr.mxu0 0.0
    %411 = vmatpush1.xpose.msra.mxu0 0.0
    %412 = vmatprep.subr.mxu0 0.0
    %413 = vmatpush1.xpose.msra.mxu0 0.0
    %414 = vmatprep.subr.mxu0 0.0
    %415 = vmatpush1.xpose.msra.mxu0 0.0
    %416 = vmatprep.subr.mxu0 0.0
    %417 = vmatpush1.xpose.msra.mxu0 0.0
    %418 = vmatprep.mubr.f32.mxu0 0.0
    %419 = vmatmul.mubr.f32.gmra.mrb[0].mxu0 %v350
    %v420 = vpop.f32.mrb[0].mxu0
    %v421 = vadd.f32 0.0, %v420
    %v422 = vpop.f32.mrb[0].mxu0
    %423 = vdwg.mxu0
    %v424 = vmul.f32 %v344, 0.35355338
    %v425 = vmul.f32 %v421, 0.35355338
    %vm426 = vcmp.eq.f32.partialorder %v165, 0.0
    %vm427 = vcmp.eq.f32.partialorder %v166, 0.0
    %v428 = vsel %vm426, -1e+09, %v424
    %v429 = vsel %vm427, -1e+09, %v425
    %v430 = vsel %vm272, %v428, -inf
    %431 = vmax.xlane.f32.xlu0 %v430
    %v432 = vpop.xlane.xlu0 %431
    %v433 = vsel %vm272, %v429, -inf
    %434 = vmax.xlane.f32.xlu0 %v433
    %v435 = vpop.xlane.xlu0 %434
    %v436 = vsub.f32 %v428, %v432
    %v437 = vsub.f32 %v429, %v435
    %v438 = vmul.f32 %v436, 1.442695
    %v439 = vpow.pop %v438
    %v440 = vmul.f32 %v437, 1.442695
    %v441 = vpow.pop %v440
    %v442 = vsel %vm272, %v439, 0.0
    %443 = vadd.xlane.f32.xlu0 %v442
    %v444 = vpop.xlane.xlu0 %443
    %v445 = vsel %vm272, %v441, 0.0
    %446 = vadd.xlane.f32.xlu0 %v445
    %v447 = vpop.xlane.xlu0 %446
    %v448 = vrcp.pop %v444
    %v449 = vmul.f32 %v439, %v448
    %v450 = vrcp.pop %v447
    %v451 = vmul.f32 %v441, %v450
    %452 = vrot.lane.b32.xlu0 %v256, 64
    %v453 = vpop.permute.xlu0 %452
    %v456 = vsel %vm272, %v449, 0
    %458 = vmatprep.subr.mxu0 0.0
    %459 = vmatpush1.msra.mxu0 %v453
    %460 = vmatprep.subr.mxu0 0.0
    %461 = vmatpush1.msra.mxu0 0.0
    %462 = vmatprep.subr.mxu0 0.0
    %463 = vmatpush1.msra.mxu0 0.0
    %464 = vmatprep.subr.mxu0 0.0
    %465 = vmatpush1.msra.mxu0 0.0
    %466 = vmatprep.subr.mxu0 0.0
    %467 = vmatpush1.msra.mxu0 0.0
    %468 = vmatprep.subr.mxu0 0.0
    %469 = vmatpush1.msra.mxu0 0.0
    %470 = vmatprep.subr.mxu0 0.0
    %471 = vmatpush1.msra.mxu0 0.0
    %472 = vmatprep.subr.mxu0 0.0
    %473 = vmatpush1.msra.mxu0 0.0
    %474 = vmatprep.subr.mxu0 0.0
    %475 = vmatpush1.msra.mxu0 0.0
    %476 = vmatprep.subr.mxu0 0.0
    %477 = vmatpush1.msra.mxu0 0.0
    %478 = vmatprep.subr.mxu0 0.0
    %479 = vmatpush1.msra.mxu0 0.0
    %480 = vmatprep.subr.mxu0 0.0
    %481 = vmatpush1.msra.mxu0 0.0
    %482 = vmatprep.subr.mxu0 0.0
    %483 = vmatpush1.msra.mxu0 0.0
    %484 = vmatprep.subr.mxu0 0.0
    %485 = vmatpush1.msra.mxu0 0.0
    %486 = vmatprep.subr.mxu0 0.0
    %487 = vmatpush1.msra.mxu0 0.0
    %488 = vmatprep.subr.mxu0 0.0
    %489 = vmatpush1.msra.mxu0 0.0
    %490 = vmatprep.subr.mxu0 0.0
    %491 = vmatpush1.msra.mxu0 0.0
    %492 = vmatprep.subr.mxu0 0.0
    %493 = vmatpush1.msra.mxu0 0.0
    %494 = vmatprep.subr.mxu0 0.0
    %495 = vmatpush1.msra.mxu0 0.0
    %496 = vmatprep.subr.mxu0 0.0
    %497 = vmatpush1.msra.mxu0 0.0
    %498 = vmatprep.subr.mxu0 0.0
    %499 = vmatpush1.msra.mxu0 0.0
    %500 = vmatprep.subr.mxu0 0.0
    %501 = vmatpush1.msra.mxu0 0.0
    %502 = vmatprep.subr.mxu0 0.0
    %503 = vmatpush1.msra.mxu0 0.0
    %504 = vmatprep.subr.mxu0 0.0
    %505 = vmatpush1.msra.mxu0 0.0
    %506 = vmatprep.subr.mxu0 0.0
    %507 = vmatpush1.msra.mxu0 0.0
    %508 = vmatprep.subr.mxu0 0.0
    %509 = vmatpush1.msra.mxu0 0.0
    %510 = vmatprep.subr.mxu0 0.0
    %511 = vmatpush1.msra.mxu0 0.0
    %512 = vmatprep.subr.mxu0 0.0
    %513 = vmatpush1.msra.mxu0 0.0
    %514 = vmatprep.subr.mxu0 0.0
    %515 = vmatpush1.msra.mxu0 0.0
    %516 = vmatprep.subr.mxu0 0.0
    %517 = vmatpush1.msra.mxu0 0.0
    %518 = vmatprep.subr.mxu0 0.0
    %519 = vmatpush1.msra.mxu0 0.0
    %520 = vmatprep.subr.mxu0 0.0
    %521 = vmatpush1.msra.mxu0 0.0
    %522 = vmatprep.mubr.f32.mxu0 0.0
    %523 = vmatmul.mubr.f32.gmra.mrb[0].mxu0 %v456
    %v524 = vpop.f32.mrb[0].mxu0
    %v525 = vadd.f32 0.0, %v524
    %v526 = vpop.f32.mrb[0].mxu0
    %527 = vdwg.mxu0
    %528 = vrot.lane.b32.xlu0 %v261, 64
    %v529 = vpop.permute.xlu0 %528
    %v532 = vsel %vm272, %v451, 0
    %534 = vmatprep.subr.mxu0 0.0
    %535 = vmatpush1.msra.mxu0 %v529
    %536 = vmatprep.subr.mxu0 0.0
    %537 = vmatpush1.msra.mxu0 0.0
    %538 = vmatprep.subr.mxu0 0.0
    %539 = vmatpush1.msra.mxu0 0.0
    %540 = vmatprep.subr.mxu0 0.0
    %541 = vmatpush1.msra.mxu0 0.0
    %542 = vmatprep.subr.mxu0 0.0
    %543 = vmatpush1.msra.mxu0 0.0
    %544 = vmatprep.subr.mxu0 0.0
    %545 = vmatpush1.msra.mxu0 0.0
    %546 = vmatprep.subr.mxu0 0.0
    %547 = vmatpush1.msra.mxu0 0.0
    %548 = vmatprep.subr.mxu0 0.0
    %549 = vmatpush1.msra.mxu0 0.0
    %550 = vmatprep.subr.mxu0 0.0
    %551 = vmatpush1.msra.mxu0 0.0
    %552 = vmatprep.subr.mxu0 0.0
    %553 = vmatpush1.msra.mxu0 0.0
    %554 = vmatprep.subr.mxu0 0.0
    %555 = vmatpush1.msra.mxu0 0.0
    %556 = vmatprep.subr.mxu0 0.0
    %557 = vmatpush1.msra.mxu0 0.0
    %558 = vmatprep.subr.mxu0 0.0
    %559 = vmatpush1.msra.mxu0 0.0
    %560 = vmatprep.subr.mxu0 0.0
    %561 = vmatpush1.msra.mxu0 0.0
    %562 = vmatprep.subr.mxu0 0.0
    %563 = vmatpush1.msra.mxu0 0.0
    %564 = vmatprep.subr.mxu0 0.0
    %565 = vmatpush1.msra.mxu0 0.0
    %566 = vmatprep.subr.mxu0 0.0
    %567 = vmatpush1.msra.mxu0 0.0
    %568 = vmatprep.subr.mxu0 0.0
    %569 = vmatpush1.msra.mxu0 0.0
    %570 = vmatprep.subr.mxu0 0.0
    %571 = vmatpush1.msra.mxu0 0.0
    %572 = vmatprep.subr.mxu0 0.0
    %573 = vmatpush1.msra.mxu0 0.0
    %574 = vmatprep.subr.mxu0 0.0
    %575 = vmatpush1.msra.mxu0 0.0
    %576 = vmatprep.subr.mxu0 0.0
    %577 = vmatpush1.msra.mxu0 0.0
    %578 = vmatprep.subr.mxu0 0.0
    %579 = vmatpush1.msra.mxu0 0.0
    %580 = vmatprep.subr.mxu0 0.0
    %581 = vmatpush1.msra.mxu0 0.0
    %582 = vmatprep.subr.mxu0 0.0
    %583 = vmatpush1.msra.mxu0 0.0
    %584 = vmatprep.subr.mxu0 0.0
    %585 = vmatpush1.msra.mxu0 0.0
    %586 = vmatprep.subr.mxu0 0.0
    %587 = vmatpush1.msra.mxu0 0.0
    %588 = vmatprep.subr.mxu0 0.0
    %589 = vmatpush1.msra.mxu0 0.0
    %590 = vmatprep.subr.mxu0 0.0
    %591 = vmatpush1.msra.mxu0 0.0
    %592 = vmatprep.subr.mxu0 0.0
    %593 = vmatpush1.msra.mxu0 0.0
    %594 = vmatprep.subr.mxu0 0.0
    %595 = vmatpush1.msra.mxu0 0.0
    %596 = vmatprep.subr.mxu0 0.0
    %597 = vmatpush1.msra.mxu0 0.0
    %598 = vmatprep.mubr.f32.mxu0 0.0
    %599 = vmatmul.mubr.f32.gmra.mrb[0].mxu0 %v532
    %v600 = vpop.f32.mrb[0].mxu0
    %v601 = vadd.f32 0.0, %v600
    %v602 = vpop.f32.mrb[0].mxu0
    %603 = vdwg.mxu0
    %604 = vrot.lane.b32.xlu0 %v256, 120
    %v605 = vpop.permute.xlu0 %604
    %606 = vrot.lane.b32.xlu0 %v256, 88
    %v607 = vpop.permute.xlu0 %606
    %v608 = vsel %vm272, %v605, 0
    %v610 = vsel %vm272, %v607, 0
    %612 = vmatprep.subr.mxu0 0.0
    %613 = vmatpush1.xpose.msra.mxu0 %v610
    %614 = vmatprep.subr.mxu0 0.0
    %615 = vmatpush1.xpose.msra.mxu0 0.0
    %616 = vmatprep.subr.mxu0 0.0
    %617 = vmatpush1.xpose.msra.mxu0 0.0
    %618 = vmatprep.subr.mxu0 0.0
    %619 = vmatpush1.xpose.msra.mxu0 0.0
    %620 = vmatprep.subr.mxu0 0.0
    %621 = vmatpush1.xpose.msra.mxu0 0.0
    %622 = vmatprep.subr.mxu0 0.0
    %623 = vmatpush1.xpose.msra.mxu0 0.0
    %624 = vmatprep.subr.mxu0 0.0
    %625 = vmatpush1.xpose.msra.mxu0 0.0
    %626 = vmatprep.subr.mxu0 0.0
    %627 = vmatpush1.xpose.msra.mxu0 0.0
    %628 = vmatprep.subr.mxu0 0.0
    %629 = vmatpush1.xpose.msra.mxu0 0.0
    %630 = vmatprep.subr.mxu0 0.0
    %631 = vmatpush1.xpose.msra.mxu0 0.0
    %632 = vmatprep.subr.mxu0 0.0
    %633 = vmatpush1.xpose.msra.mxu0 0.0
    %634 = vmatprep.subr.mxu0 0.0
    %635 = vmatpush1.xpose.msra.mxu0 0.0
    %636 = vmatprep.subr.mxu0 0.0
    %637 = vmatpush1.xpose.msra.mxu0 0.0
    %638 = vmatprep.subr.mxu0 0.0
    %639 = vmatpush1.xpose.msra.mxu0 0.0
    %640 = vmatprep.subr.mxu0 0.0
    %641 = vmatpush1.xpose.msra.mxu0 0.0
    %642 = vmatprep.subr.mxu0 0.0
    %643 = vmatpush1.xpose.msra.mxu0 0.0
    %644 = vmatprep.subr.mxu0 0.0
    %645 = vmatpush1.xpose.msra.mxu0 0.0
    %646 = vmatprep.subr.mxu0 0.0
    %647 = vmatpush1.xpose.msra.mxu0 0.0
    %648 = vmatprep.subr.mxu0 0.0
    %649 = vmatpush1.xpose.msra.mxu0 0.0
    %650 = vmatprep.subr.mxu0 0.0
    %651 = vmatpush1.xpose.msra.mxu0 0.0
    %652 = vmatprep.subr.mxu0 0.0
    %653 = vmatpush1.xpose.msra.mxu0 0.0
    %654 = vmatprep.subr.mxu0 0.0
    %655 = vmatpush1.xpose.msra.mxu0 0.0
    %656 = vmatprep.subr.mxu0 0.0
    %657 = vmatpush1.xpose.msra.mxu0 0.0
    %658 = vmatprep.subr.mxu0 0.0
    %659 = vmatpush1.xpose.msra.mxu0 0.0
    %660 = vmatprep.subr.mxu0 0.0
    %661 = vmatpush1.xpose.msra.mxu0 0.0
    %662 = vmatprep.subr.mxu0 0.0
    %663 = vmatpush1.xpose.msra.mxu0 0.0
    %664 = vmatprep.subr.mxu0 0.0
    %665 = vmatpush1.xpose.msra.mxu0 0.0
    %666 = vmatprep.subr.mxu0 0.0
    %667 = vmatpush1.xpose.msra.mxu0 0.0
    %668 = vmatprep.subr.mxu0 0.0
    %669 = vmatpush1.xpose.msra.mxu0 0.0
    %670 = vmatprep.subr.mxu0 0.0
    %671 = vmatpush1.xpose.msra.mxu0 0.0
    %672 = vmatprep.subr.mxu0 0.0
    %673 = vmatpush1.xpose.msra.mxu0 0.0
    %674 = vmatprep.subr.mxu0 0.0
    %675 = vmatpush1.xpose.msra.mxu0 0.0
    %676 = vmatprep.mubr.f32.mxu0 0.0
    %677 = vmatmul.mubr.f32.gmra.mrb[0].mxu0 %v608
    %v678 = vpop.f32.mrb[0].mxu0
    %v679 = vadd.f32 0.0, %v678
    %v680 = vpop.f32.mrb[0].mxu0
    %681 = vdwg.mxu0
    %682 = vrot.lane.b32.xlu0 %v261, 120
    %v683 = vpop.permute.xlu0 %682
    %684 = vrot.lane.b32.xlu0 %v261, 88
    %v685 = vpop.permute.xlu0 %684
    %v686 = vsel %vm272, %v683, 0
    %v688 = vsel %vm272, %v685, 0
    %690 = vmatprep.subr.mxu0 0.0
    %691 = vmatpush1.xpose.msra.mxu0 %v688
    %692 = vmatprep.subr.mxu0 0.0
    %693 = vmatpush1.xpose.msra.mxu0 0.0
    %694 = vmatprep.subr.mxu0 0.0
    %695 = vmatpush1.xpose.msra.mxu0 0.0
    %696 = vmatprep.subr.mxu0 0.0
    %697 = vmatpush1.xpose.msra.mxu0 0.0
    %698 = vmatprep.subr.mxu0 0.0
    %699 = vmatpush1.xpose.msra.mxu0 0.0
    %700 = vmatprep.subr.mxu0 0.0
    %701 = vmatpush1.xpose.msra.mxu0 0.0
    %702 = vmatprep.subr.mxu0 0.0
    %703 = vmatpush1.xpose.msra.mxu0 0.0
    %704 = vmatprep.subr.mxu0 0.0
    %705 = vmatpush1.xpose.msra.mxu0 0.0
    %706 = vmatprep.subr.mxu0 0.0
    %707 = vmatpush1.xpose.msra.mxu0 0.0
    %708 = vmatprep.subr.mxu0 0.0
    %709 = vmatpush1.xpose.msra.mxu0 0.0
    %710 = vmatprep.subr.mxu0 0.0
    %711 = vmatpush1.xpose.msra.mxu0 0.0
    %712 = vmatprep.subr.mxu0 0.0
    %713 = vmatpush1.xpose.msra.mxu0 0.0
    %714 = vmatprep.subr.mxu0 0.0
    %715 = vmatpush1.xpose.msra.mxu0 0.0
    %716 = vmatprep.subr.mxu0 0.0
    %717 = vmatpush1.xpose.msra.mxu0 0.0
    %718 = vmatprep.subr.mxu0 0.0
    %719 = vmatpush1.xpose.msra.mxu0 0.0
    %720 = vmatprep.subr.mxu0 0.0
    %721 = vmatpush1.xpose.msra.mxu0 0.0
    %722 = vmatprep.subr.mxu0 0.0
    %723 = vmatpush1.xpose.msra.mxu0 0.0
    %724 = vmatprep.subr.mxu0 0.0
    %725 = vmatpush1.xpose.msra.mxu0 0.0
    %726 = vmatprep.subr.mxu0 0.0
    %727 = vmatpush1.xpose.msra.mxu0 0.0
    %728 = vmatprep.subr.mxu0 0.0
    %729 = vmatpush1.xpose.msra.mxu0 0.0
    %730 = vmatprep.subr.mxu0 0.0
    %731 = vmatpush1.xpose.msra.mxu0 0.0
    %732 = vmatprep.subr.mxu0 0.0
    %733 = vmatpush1.xpose.msra.mxu0 0.0
    %734 = vmatprep.subr.mxu0 0.0
    %735 = vmatpush1.xpose.msra.mxu0 0.0
    %736 = vmatprep.subr.mxu0 0.0
    %737 = vmatpush1.xpose.msra.mxu0 0.0
    %738 = vmatprep.subr.mxu0 0.0
    %739 = vmatpush1.xpose.msra.mxu0 0.0
    %740 = vmatprep.subr.mxu0 0.0
    %741 = vmatpush1.xpose.msra.mxu0 0.0
    %742 = vmatprep.subr.mxu0 0.0
    %743 = vmatpush1.xpose.msra.mxu0 0.0
    %744 = vmatprep.subr.mxu0 0.0
    %745 = vmatpush1.xpose.msra.mxu0 0.0
    %746 = vmatprep.subr.mxu0 0.0
    %747 = vmatpush1.xpose.msra.mxu0 0.0
    %748 = vmatprep.subr.mxu0 0.0
    %749 = vmatpush1.xpose.msra.mxu0 0.0
    %750 = vmatprep.subr.mxu0 0.0
    %751 = vmatpush1.xpose.msra.mxu0 0.0
    %752 = vmatprep.subr.mxu0 0.0
    %753 = vmatpush1.xpose.msra.mxu0 0.0
    %754 = vmatprep.mubr.f32.mxu0 0.0
    %755 = vmatmul.mubr.f32.gmra.mrb[0].mxu0 %v686
    %v756 = vpop.f32.mrb[0].mxu0
    %v757 = vadd.f32 0.0, %v756
    %v758 = vpop.f32.mrb[0].mxu0
    %759 = vdwg.mxu0
    %v760 = vmul.f32 %v679, 0.35355338
    %v761 = vmul.f32 %v757, 0.35355338
    %v762 = vsel %vm426, -1e+09, %v760
    %v763 = vsel %vm427, -1e+09, %v761
    %v764 = vsel %vm272, %v762, -inf
    %765 = vmax.xlane.f32.xlu0 %v764
    %v766 = vpop.xlane.xlu0 %765
    %v767 = vsel %vm272, %v763, -inf
    %768 = vmax.xlane.f32.xlu0 %v767
    %v769 = vpop.xlane.xlu0 %768
    %v770 = vsub.f32 %v762, %v766
    %v771 = vsub.f32 %v763, %v769
    %v772 = vmul.f32 %v770, 1.442695
    %v773 = vpow.pop %v772
    %v774 = vmul.f32 %v771, 1.442695
    %v775 = vpow.pop %v774
    %v776 = vsel %vm272, %v773, 0.0
    %777 = vadd.xlane.f32.xlu0 %v776
    %v778 = vpop.xlane.xlu0 %777
    %v779 = vsel %vm272, %v775, 0.0
    %780 = vadd.xlane.f32.xlu0 %v779
    %v781 = vpop.xlane.xlu0 %780
    %v782 = vrcp.pop %v778
    %v783 = vmul.f32 %v773, %v782
    %v784 = vrcp.pop %v781
    %v785 = vmul.f32 %v775, %v784
    %786 = vrot.lane.b32.xlu0 %v256, 56
    %v787 = vpop.permute.xlu0 %786
    %v790 = vsel %vm272, %v783, 0
    %792 = vmatprep.subr.mxu0 0.0
    %793 = vmatpush1.msra.mxu0 %v787
    %794 = vmatprep.subr.mxu0 0.0
    %795 = vmatpush1.msra.mxu0 0.0
    %796 = vmatprep.subr.mxu0 0.0
    %797 = vmatpush1.msra.mxu0 0.0
    %798 = vmatprep.subr.mxu0 0.0
    %799 = vmatpush1.msra.mxu0 0.0
    %800 = vmatprep.subr.mxu0 0.0
    %801 = vmatpush1.msra.mxu0 0.0
    %802 = vmatprep.subr.mxu0 0.0
    %803 = vmatpush1.msra.mxu0 0.0
    %804 = vmatprep.subr.mxu0 0.0
    %805 = vmatpush1.msra.mxu0 0.0
    %806 = vmatprep.subr.mxu0 0.0
    %807 = vmatpush1.msra.mxu0 0.0
    %808 = vmatprep.subr.mxu0 0.0
    %809 = vmatpush1.msra.mxu0 0.0
    %810 = vmatprep.subr.mxu0 0.0
    %811 = vmatpush1.msra.mxu0 0.0
    %812 = vmatprep.subr.mxu0 0.0
    %813 = vmatpush1.msra.mxu0 0.0
    %814 = vmatprep.subr.mxu0 0.0
    %815 = vmatpush1.msra.mxu0 0.0
    %816 = vmatprep.subr.mxu0 0.0
    %817 = vmatpush1.msra.mxu0 0.0
    %818 = vmatprep.subr.mxu0 0.0
    %819 = vmatpush1.msra.mxu0 0.0
    %820 = vmatprep.subr.mxu0 0.0
    %821 = vmatpush1.msra.mxu0 0.0
    %822 = vmatprep.subr.mxu0 0.0
    %823 = vmatpush1.msra.mxu0 0.0
    %824 = vmatprep.subr.mxu0 0.0
    %825 = vmatpush1.msra.mxu0 0.0
    %826 = vmatprep.subr.mxu0 0.0
    %827 = vmatpush1.msra.mxu0 0.0
    %828 = vmatprep.subr.mxu0 0.0
    %829 = vmatpush1.msra.mxu0 0.0
    %830 = vmatprep.subr.mxu0 0.0
    %831 = vmatpush1.msra.mxu0 0.0
    %832 = vmatprep.subr.mxu0 0.0
    %833 = vmatpush1.msra.mxu0 0.0
    %834 = vmatprep.subr.mxu0 0.0
    %835 = vmatpush1.msra.mxu0 0.0
    %836 = vmatprep.subr.mxu0 0.0
    %837 = vmatpush1.msra.mxu0 0.0
    %838 = vmatprep.subr.mxu0 0.0
    %839 = vmatpush1.msra.mxu0 0.0
    %840 = vmatprep.subr.mxu0 0.0
    %841 = vmatpush1.msra.mxu0 0.0
    %842 = vmatprep.subr.mxu0 0.0
    %843 = vmatpush1.msra.mxu0 0.0
    %844 = vmatprep.subr.mxu0 0.0
    %845 = vmatpush1.msra.mxu0 0.0
    %846 = vmatprep.subr.mxu0 0.0
    %847 = vmatpush1.msra.mxu0 0.0
    %848 = vmatprep.subr.mxu0 0.0
    %849 = vmatpush1.msra.mxu0 0.0
    %850 = vmatprep.subr.mxu0 0.0
    %851 = vmatpush1.msra.mxu0 0.0
    %852 = vmatprep.subr.mxu0 0.0
    %853 = vmatpush1.msra.mxu0 0.0
    %854 = vmatprep.subr.mxu0 0.0
    %855 = vmatpush1.msra.mxu0 0.0
    %856 = vmatprep.mubr.f32.mxu0 0.0
    %857 = vmatmul.mubr.f32.gmra.mrb[0].mxu0 %v790
    %v858 = vpop.f32.mrb[0].mxu0
    %v859 = vadd.f32 0.0, %v858
    %v860 = vpop.f32.mrb[0].mxu0
    %861 = vdwg.mxu0
    %862 = vrot.lane.b32.xlu0 %v261, 56
    %v863 = vpop.permute.xlu0 %862
    %v866 = vsel %vm272, %v785, 0
    %868 = vmatprep.subr.mxu0 0.0
    %869 = vmatpush1.msra.mxu0 %v863
    %870 = vmatprep.subr.mxu0 0.0
    %871 = vmatpush1.msra.mxu0 0.0
    %872 = vmatprep.subr.mxu0 0.0
    %873 = vmatpush1.msra.mxu0 0.0
    %874 = vmatprep.subr.mxu0 0.0
    %875 = vmatpush1.msra.mxu0 0.0
    %876 = vmatprep.subr.mxu0 0.0
    %877 = vmatpush1.msra.mxu0 0.0
    %878 = vmatprep.subr.mxu0 0.0
    %879 = vmatpush1.msra.mxu0 0.0
    %880 = vmatprep.subr.mxu0 0.0
    %881 = vmatpush1.msra.mxu0 0.0
    %882 = vmatprep.subr.mxu0 0.0
    %883 = vmatpush1.msra.mxu0 0.0
    %884 = vmatprep.subr.mxu0 0.0
    %885 = vmatpush1.msra.mxu0 0.0
    %886 = vmatprep.subr.mxu0 0.0
    %887 = vmatpush1.msra.mxu0 0.0
    %888 = vmatprep.subr.mxu0 0.0
    %889 = vmatpush1.msra.mxu0 0.0
    %890 = vmatprep.subr.mxu0 0.0
    %891 = vmatpush1.msra.mxu0 0.0
    %892 = vmatprep.subr.mxu0 0.0
    %893 = vmatpush1.msra.mxu0 0.0
    %894 = vmatprep.subr.mxu0 0.0
    %895 = vmatpush1.msra.mxu0 0.0
    %896 = vmatprep.subr.mxu0 0.0
    %897 = vmatpush1.msra.mxu0 0.0
    %898 = vmatprep.subr.mxu0 0.0
    %899 = vmatpush1.msra.mxu0 0.0
    %900 = vmatprep.subr.mxu0 0.0
    %901 = vmatpush1.msra.mxu0 0.0
    %902 = vmatprep.subr.mxu0 0.0
    %903 = vmatpush1.msra.mxu0 0.0
    %904 = vmatprep.subr.mxu0 0.0
    %905 = vmatpush1.msra.mxu0 0.0
    %906 = vmatprep.subr.mxu0 0.0
    %907 = vmatpush1.msra.mxu0 0.0
    %908 = vmatprep.subr.mxu0 0.0
    %909 = vmatpush1.msra.mxu0 0.0
    %910 = vmatprep.subr.mxu0 0.0
    %911 = vmatpush1.msra.mxu0 0.0
    %912 = vmatprep.subr.mxu0 0.0
    %913 = vmatpush1.msra.mxu0 0.0
    %914 = vmatprep.subr.mxu0 0.0
    %915 = vmatpush1.msra.mxu0 0.0
    %916 = vmatprep.subr.mxu0 0.0
    %917 = vmatpush1.msra.mxu0 0.0
    %918 = vmatprep.subr.mxu0 0.0
    %919 = vmatpush1.msra.mxu0 0.0
    %920 = vmatprep.subr.mxu0 0.0
    %921 = vmatpush1.msra.mxu0 0.0
    %922 = vmatprep.subr.mxu0 0.0
    %923 = vmatpush1.msra.mxu0 0.0
    %924 = vmatprep.subr.mxu0 0.0
    %925 = vmatpush1.msra.mxu0 0.0
    %926 = vmatprep.subr.mxu0 0.0
    %927 = vmatpush1.msra.mxu0 0.0
    %928 = vmatprep.subr.mxu0 0.0
    %929 = vmatpush1.msra.mxu0 0.0
    %930 = vmatprep.subr.mxu0 0.0
    %931 = vmatpush1.msra.mxu0 0.0
    %932 = vmatprep.mubr.f32.mxu0 0.0
    %933 = vmatmul.mubr.f32.gmra.mrb[0].mxu0 %v866
    %v934 = vpop.f32.mrb[0].mxu0
    %v935 = vadd.f32 0.0, %v934
    %v936 = vpop.f32.mrb[0].mxu0
    %937 = vdwg.mxu0
    %v939 = vsel %vm272, %v859, 0
    %v942 = vsel %vm272, %v935, 0
    %944 = vmatprep.subr.mxu0 0.0
    %945 = vmatpush1.msra.mxu0 %v265
    %946 = vmatprep.subr.mxu0 0.0
    %947 = vmatpush1.msra.mxu0 0.0
    %948 = vmatprep.subr.mxu0 0.0
    %949 = vmatpush1.msra.mxu0 0.0
    %950 = vmatprep.subr.mxu0 0.0
    %951 = vmatpush1.msra.mxu0 0.0
    %952 = vmatprep.subr.mxu0 0.0
    %953 = vmatpush1.msra.mxu0 0.0
    %954 = vmatprep.subr.mxu0 0.0
    %955 = vmatpush1.msra.mxu0 0.0
    %956 = vmatprep.subr.mxu0 0.0
    %957 = vmatpush1.msra.mxu0 0.0
    %958 = vmatprep.subr.mxu0 0.0
    %959 = vmatpush1.msra.mxu0 0.0
    %960 = vmatprep.subr.mxu0 0.0
    %961 = vmatpush1.msra.mxu0 0.0
    %962 = vmatprep.subr.mxu0 0.0
    %963 = vmatpush1.msra.mxu0 0.0
    %964 = vmatprep.subr.mxu0 0.0
    %965 = vmatpush1.msra.mxu0 0.0
    %966 = vmatprep.subr.mxu0 0.0
    %967 = vmatpush1.msra.mxu0 0.0
    %968 = vmatprep.subr.mxu0 0.0
    %969 = vmatpush1.msra.mxu0 0.0
    %970 = vmatprep.subr.mxu0 0.0
    %971 = vmatpush1.msra.mxu0 0.0
    %972 = vmatprep.subr.mxu0 0.0
    %973 = vmatpush1.msra.mxu0 0.0
    %974 = vmatprep.subr.mxu0 0.0
    %975 = vmatpush1.msra.mxu0 0.0
    %976 = vmatprep.subr.mxu0 0.0
    %977 = vmatpush1.msra.mxu0 0.0
    %978 = vmatprep.subr.mxu0 0.0
    %979 = vmatpush1.msra.mxu0 0.0
    %980 = vmatprep.subr.mxu0 0.0
    %981 = vmatpush1.msra.mxu0 0.0
    %982 = vmatprep.subr.mxu0 0.0
    %983 = vmatpush1.msra.mxu0 0.0
    %984 = vmatprep.subr.mxu0 0.0
    %985 = vmatpush1.msra.mxu0 0.0
    %986 = vmatprep.subr.mxu0 0.0
    %987 = vmatpush1.msra.mxu0 0.0
    %988 = vmatprep.subr.mxu0 0.0
    %989 = vmatpush1.msra.mxu0 0.0
    %990 = vmatprep.subr.mxu0 0.0
    %991 = vmatpush1.msra.mxu0 0.0
    %992 = vmatprep.subr.mxu0 0.0
    %993 = vmatpush1.msra.mxu0 0.0
    %994 = vmatprep.subr.mxu0 0.0
    %995 = vmatpush1.msra.mxu0 0.0
    %996 = vmatprep.subr.mxu0 0.0
    %997 = vmatpush1.msra.mxu0 0.0
    %998 = vmatprep.subr.mxu0 0.0
    %999 = vmatpush1.msra.mxu0 0.0
    %1000 = vmatprep.subr.mxu0 0.0
    %1001 = vmatpush1.msra.mxu0 0.0
    %1002 = vmatprep.subr.mxu0 0.0
    %1003 = vmatpush1.msra.mxu0 0.0
    %1004 = vmatprep.subr.mxu0 0.0
    %1005 = vmatpush1.msra.mxu0 0.0
    %1006 = vmatprep.subr.mxu0 0.0
    %1007 = vmatpush1.msra.mxu0 0.0
    %1008 = vmatprep.mubr.f32.mxu0 0.0
    %1009 = vmatmul.mubr.f32.gmra.mrb[0].mxu0 %v939
    %v1010 = vpop.f32.mrb[0].mxu0
    %v1011 = vadd.f32 0.0, %v1010
    %v1012 = vpop.f32.mrb[0].mxu0
    %1013 = vmatprep.mubr.f32.mxu0 0.0
    %1014 = vmatmul.mubr.f32.gmra.mrb[0].mxu0 %v942
    %v1015 = vpop.f32.mrb[0].mxu0
    %v1016 = vadd.f32 0.0, %v1015
    %v1017 = vpop.f32.mrb[0].mxu0
    %1018 = vdwg.mxu0
    %v1020 = vsel %vm272, %v525, 0
    %v1023 = vsel %vm272, %v601, 0
    %1025 = vmatprep.subr.mxu0 0.0
    %1026 = vmatpush1.msra.mxu0 %v264
    %1027 = vmatprep.subr.mxu0 0.0
    %1028 = vmatpush1.msra.mxu0 0.0
    %1029 = vmatprep.subr.mxu0 0.0
    %1030 = vmatpush1.msra.mxu0 0.0
    %1031 = vmatprep.subr.mxu0 0.0
    %1032 = vmatpush1.msra.mxu0 0.0
    %1033 = vmatprep.subr.mxu0 0.0
    %1034 = vmatpush1.msra.mxu0 0.0
    %1035 = vmatprep.subr.mxu0 0.0
    %1036 = vmatpush1.msra.mxu0 0.0
    %1037 = vmatprep.subr.mxu0 0.0
    %1038 = vmatpush1.msra.mxu0 0.0
    %1039 = vmatprep.subr.mxu0 0.0
    %1040 = vmatpush1.msra.mxu0 0.0
    %1041 = vmatprep.subr.mxu0 0.0
    %1042 = vmatpush1.msra.mxu0 0.0
    %1043 = vmatprep.subr.mxu0 0.0
    %1044 = vmatpush1.msra.mxu0 0.0
    %1045 = vmatprep.subr.mxu0 0.0
    %1046 = vmatpush1.msra.mxu0 0.0
    %1047 = vmatprep.subr.mxu0 0.0
    %1048 = vmatpush1.msra.mxu0 0.0
    %1049 = vmatprep.subr.mxu0 0.0
    %1050 = vmatpush1.msra.mxu0 0.0
    %1051 = vmatprep.subr.mxu0 0.0
    %1052 = vmatpush1.msra.mxu0 0.0
    %1053 = vmatprep.subr.mxu0 0.0
    %1054 = vmatpush1.msra.mxu0 0.0
    %1055 = vmatprep.subr.mxu0 0.0
    %1056 = vmatpush1.msra.mxu0 0.0
    %1057 = vmatprep.subr.mxu0 0.0
    %1058 = vmatpush1.msra.mxu0 0.0
    %1059 = vmatprep.subr.mxu0 0.0
    %1060 = vmatpush1.msra.mxu0 0.0
    %1061 = vmatprep.subr.mxu0 0.0
    %1062 = vmatpush1.msra.mxu0 0.0
    %1063 = vmatprep.subr.mxu0 0.0
    %1064 = vmatpush1.msra.mxu0 0.0
    %1065 = vmatprep.subr.mxu0 0.0
    %1066 = vmatpush1.msra.mxu0 0.0
    %1067 = vmatprep.subr.mxu0 0.0
    %1068 = vmatpush1.msra.mxu0 0.0
    %1069 = vmatprep.subr.mxu0 0.0
    %1070 = vmatpush1.msra.mxu0 0.0
    %1071 = vmatprep.subr.mxu0 0.0
    %1072 = vmatpush1.msra.mxu0 0.0
    %1073 = vmatprep.subr.mxu0 0.0
    %1074 = vmatpush1.msra.mxu0 0.0
    %1075 = vmatprep.subr.mxu0 0.0
    %1076 = vmatpush1.msra.mxu0 0.0
    %1077 = vmatprep.subr.mxu0 0.0
    %1078 = vmatpush1.msra.mxu0 0.0
    %1079 = vmatprep.subr.mxu0 0.0
    %1080 = vmatpush1.msra.mxu0 0.0
    %1081 = vmatprep.subr.mxu0 0.0
    %1082 = vmatpush1.msra.mxu0 0.0
    %1083 = vmatprep.subr.mxu0 0.0
    %1084 = vmatpush1.msra.mxu0 0.0
    %1085 = vmatprep.subr.mxu0 0.0
    %1086 = vmatpush1.msra.mxu0 0.0
    %1087 = vmatprep.subr.mxu0 0.0
    %1088 = vmatpush1.msra.mxu0 0.0
    %1089 = vmatprep.mubr.f32.mxu0 0.0
    %1090 = vmatmul.mubr.f32.gmra.mrb[0].mxu0 %v1020
    %v1091 = vpop.f32.mrb[0].mxu0
    %v1092 = vadd.f32 %v1011, %v1091
    %v1093 = vpop.f32.mrb[0].mxu0
    %1094 = vmatprep.mubr.f32.mxu0 0.0
    %1095 = vmatmul.mubr.f32.gmra.mrb[0].mxu0 %v1023
    %v1096 = vpop.f32.mrb[0].mxu0
    %v1097 = vadd.f32 %v1016, %v1096
    %v1098 = vpop.f32.mrb[0].mxu0
    %1099 = vdwg.mxu0
    %1100 = vrot.lane.b32.xlu0 %v256, 112
    %v1101 = vpop.permute.xlu0 %1100
    %1102 = vrot.lane.b32.xlu0 %v256, 80
    %v1103 = vpop.permute.xlu0 %1102
    %v1104 = vsel %vm272, %v1101, 0
    %v1106 = vsel %vm272, %v1103, 0
    %1108 = vmatprep.subr.mxu0 0.0
    %1109 = vmatpush1.xpose.msra.mxu0 %v1106
    %1110 = vmatprep.subr.mxu0 0.0
    %1111 = vmatpush1.xpose.msra.mxu0 0.0
    %1112 = vmatprep.subr.mxu0 0.0
    %1113 = vmatpush1.xpose.msra.mxu0 0.0
    %1114 = vmatprep.subr.mxu0 0.0
    %1115 = vmatpush1.xpose.msra.mxu0 0.0
    %1116 = vmatprep.subr.mxu0 0.0
    %1117 = vmatpush1.xpose.msra.mxu0 0.0
    %1118 = vmatprep.subr.mxu0 0.0
    %1119 = vmatpush1.xpose.msra.mxu0 0.0
    %1120 = vmatprep.subr.mxu0 0.0
    %1121 = vmatpush1.xpose.msra.mxu0 0.0
    %1122 = vmatprep.subr.mxu0 0.0
    %1123 = vmatpush1.xpose.msra.mxu0 0.0
    %1124 = vmatprep.subr.mxu0 0.0
    %1125 = vmatpush1.xpose.msra.mxu0 0.0
    %1126 = vmatprep.subr.mxu0 0.0
    %1127 = vmatpush1.xpose.msra.mxu0 0.0
    %1128 = vmatprep.subr.mxu0 0.0
    %1129 = vmatpush1.xpose.msra.mxu0 0.0
    %1130 = vmatprep.subr.mxu0 0.0
    %1131 = vmatpush1.xpose.msra.mxu0 0.0
    %1132 = vmatprep.subr.mxu0 0.0
    %1133 = vmatpush1.xpose.msra.mxu0 0.0
    %1134 = vmatprep.subr.mxu0 0.0
    %1135 = vmatpush1.xpose.msra.mxu0 0.0
    %1136 = vmatprep.subr.mxu0 0.0
    %1137 = vmatpush1.xpose.msra.mxu0 0.0
    %1138 = vmatprep.subr.mxu0 0.0
    %1139 = vmatpush1.xpose.msra.mxu0 0.0
    %1140 = vmatprep.subr.mxu0 0.0
    %1141 = vmatpush1.xpose.msra.mxu0 0.0
    %1142 = vmatprep.subr.mxu0 0.0
    %1143 = vmatpush1.xpose.msra.mxu0 0.0
    %1144 = vmatprep.subr.mxu0 0.0
    %1145 = vmatpush1.xpose.msra.mxu0 0.0
    %1146 = vmatprep.subr.mxu0 0.0
    %1147 = vmatpush1.xpose.msra.mxu0 0.0
    %1148 = vmatprep.subr.mxu0 0.0
    %1149 = vmatpush1.xpose.msra.mxu0 0.0
    %1150 = vmatprep.subr.mxu0 0.0
    %1151 = vmatpush1.xpose.msra.mxu0 0.0
    %1152 = vmatprep.subr.mxu0 0.0
    %1153 = vmatpush1.xpose.msra.mxu0 0.0
    %1154 = vmatprep.subr.mxu0 0.0
    %1155 = vmatpush1.xpose.msra.mxu0 0.0
    %1156 = vmatprep.subr.mxu0 0.0
    %1157 = vmatpush1.xpose.msra.mxu0 0.0
    %1158 = vmatprep.subr.mxu0 0.0
    %1159 = vmatpush1.xpose.msra.mxu0 0.0
    %1160 = vmatprep.subr.mxu0 0.0
    %1161 = vmatpush1.xpose.msra.mxu0 0.0
    %1162 = vmatprep.subr.mxu0 0.0
    %1163 = vmatpush1.xpose.msra.mxu0 0.0
    %1164 = vmatprep.subr.mxu0 0.0
    %1165 = vmatpush1.xpose.msra.mxu0 0.0
    %1166 = vmatprep.subr.mxu0 0.0
    %1167 = vmatpush1.xpose.msra.mxu0 0.0
    %1168 = vmatprep.subr.mxu0 0.0
    %1169 = vmatpush1.xpose.msra.mxu0 0.0
    %1170 = vmatprep.subr.mxu0 0.0
    %1171 = vmatpush1.xpose.msra.mxu0 0.0
    %1172 = vmatprep.mubr.f32.mxu0 0.0
    %1173 = vmatmul.mubr.f32.gmra.mrb[0].mxu0 %v1104
    %v1174 = vpop.f32.mrb[0].mxu0
    %v1175 = vadd.f32 0.0, %v1174
    %v1176 = vpop.f32.mrb[0].mxu0
    %1177 = vdwg.mxu0
    %1178 = vrot.lane.b32.xlu0 %v261, 112
    %v1179 = vpop.permute.xlu0 %1178
    %1180 = vrot.lane.b32.xlu0 %v261, 80
    %v1181 = vpop.permute.xlu0 %1180
    %v1182 = vsel %vm272, %v1179, 0
    %v1184 = vsel %vm272, %v1181, 0
    %1186 = vmatprep.subr.mxu0 0.0
    %1187 = vmatpush1.xpose.msra.mxu0 %v1184
    %1188 = vmatprep.subr.mxu0 0.0
    %1189 = vmatpush1.xpose.msra.mxu0 0.0
    %1190 = vmatprep.subr.mxu0 0.0
    %1191 = vmatpush1.xpose.msra.mxu0 0.0
    %1192 = vmatprep.subr.mxu0 0.0
    %1193 = vmatpush1.xpose.msra.mxu0 0.0
    %1194 = vmatprep.subr.mxu0 0.0
    %1195 = vmatpush1.xpose.msra.mxu0 0.0
    %1196 = vmatprep.subr.mxu0 0.0
    %1197 = vmatpush1.xpose.msra.mxu0 0.0
    %1198 = vmatprep.subr.mxu0 0.0
    %1199 = vmatpush1.xpose.msra.mxu0 0.0
    %1200 = vmatprep.subr.mxu0 0.0
    %1201 = vmatpush1.xpose.msra.mxu0 0.0
    %1202 = vmatprep.subr.mxu0 0.0
    %1203 = vmatpush1.xpose.msra.mxu0 0.0
    %1204 = vmatprep.subr.mxu0 0.0
    %1205 = vmatpush1.xpose.msra.mxu0 0.0
    %1206 = vmatprep.subr.mxu0 0.0
    %1207 = vmatpush1.xpose.msra.mxu0 0.0
    %1208 = vmatprep.subr.mxu0 0.0
    %1209 = vmatpush1.xpose.msra.mxu0 0.0
    %1210 = vmatprep.subr.mxu0 0.0
    %1211 = vmatpush1.xpose.msra.mxu0 0.0
    %1212 = vmatprep.subr.mxu0 0.0
    %1213 = vmatpush1.xpose.msra.mxu0 0.0
    %1214 = vmatprep.subr.mxu0 0.0
    %1215 = vmatpush1.xpose.msra.mxu0 0.0
    %1216 = vmatprep.subr.mxu0 0.0
    %1217 = vmatpush1.xpose.msra.mxu0 0.0
    %1218 = vmatprep.subr.mxu0 0.0
    %1219 = vmatpush1.xpose.msra.mxu0 0.0
    %1220 = vmatprep.subr.mxu0 0.0
    %1221 = vmatpush1.xpose.msra.mxu0 0.0
    %1222 = vmatprep.subr.mxu0 0.0
    %1223 = vmatpush1.xpose.msra.mxu0 0.0
    %1224 = vmatprep.subr.mxu0 0.0
    %1225 = vmatpush1.xpose.msra.mxu0 0.0
    %1226 = vmatprep.subr.mxu0 0.0
    %1227 = vmatpush1.xpose.msra.mxu0 0.0
    %1228 = vmatprep.subr.mxu0 0.0
    %1229 = vmatpush1.xpose.msra.mxu0 0.0
    %1230 = vmatprep.subr.mxu0 0.0
    %1231 = vmatpush1.xpose.msra.mxu0 0.0
    %1232 = vmatprep.subr.mxu0 0.0
    %1233 = vmatpush1.xpose.msra.mxu0 0.0
    %1234 = vmatprep.subr.mxu0 0.0
    %1235 = vmatpush1.xpose.msra.mxu0 0.0
    %1236 = vmatprep.subr.mxu0 0.0
    %1237 = vmatpush1.xpose.msra.mxu0 0.0
    %1238 = vmatprep.subr.mxu0 0.0
    %1239 = vmatpush1.xpose.msra.mxu0 0.0
    %1240 = vmatprep.subr.mxu0 0.0
    %1241 = vmatpush1.xpose.msra.mxu0 0.0
    %1242 = vmatprep.subr.mxu0 0.0
    %1243 = vmatpush1.xpose.msra.mxu0 0.0
    %1244 = vmatprep.subr.mxu0 0.0
    %1245 = vmatpush1.xpose.msra.mxu0 0.0
    %1246 = vmatprep.subr.mxu0 0.0
    %1247 = vmatpush1.xpose.msra.mxu0 0.0
    %1248 = vmatprep.subr.mxu0 0.0
    %1249 = vmatpush1.xpose.msra.mxu0 0.0
    %1250 = vmatprep.mubr.f32.mxu0 0.0
    %1251 = vmatmul.mubr.f32.gmra.mrb[0].mxu0 %v1182
    %v1252 = vpop.f32.mrb[0].mxu0
    %v1253 = vadd.f32 0.0, %v1252
    %v1254 = vpop.f32.mrb[0].mxu0
    %1255 = vdwg.mxu0
    %v1256 = vmul.f32 %v1175, 0.35355338
    %v1257 = vmul.f32 %v1253, 0.35355338
    %v1258 = vsel %vm426, -1e+09, %v1256
    %v1259 = vsel %vm427, -1e+09, %v1257
    %v1260 = vsel %vm272, %v1258, -inf
    %1261 = vmax.xlane.f32.xlu0 %v1260
    %v1262 = vpop.xlane.xlu0 %1261
    %v1263 = vsel %vm272, %v1259, -inf
    %1264 = vmax.xlane.f32.xlu0 %v1263
    %v1265 = vpop.xlane.xlu0 %1264
    %v1266 = vsub.f32 %v1258, %v1262
    %v1267 = vsub.f32 %v1259, %v1265
    %v1268 = vmul.f32 %v1266, 1.442695
    %v1269 = vpow.pop %v1268
    %v1270 = vmul.f32 %v1267, 1.442695
    %v1271 = vpow.pop %v1270
    %v1272 = vsel %vm272, %v1269, 0.0
    %1273 = vadd.xlane.f32.xlu0 %v1272
    %v1274 = vpop.xlane.xlu0 %1273
    %v1275 = vsel %vm272, %v1271, 0.0
    %1276 = vadd.xlane.f32.xlu0 %v1275
    %v1277 = vpop.xlane.xlu0 %1276
    %v1278 = vrcp.pop %v1274
    %v1279 = vmul.f32 %v1269, %v1278
    %v1280 = vrcp.pop %v1277
    %v1281 = vmul.f32 %v1271, %v1280
    %1282 = vrot.lane.b32.xlu0 %v256, 48
    %v1283 = vpop.permute.xlu0 %1282
    %v1286 = vsel %vm272, %v1279, 0
    %1288 = vmatprep.subr.mxu0 0.0
    %1289 = vmatpush1.msra.mxu0 %v1283
    %1290 = vmatprep.subr.mxu0 0.0
    %1291 = vmatpush1.msra.mxu0 0.0
    %1292 = vmatprep.subr.mxu0 0.0
    %1293 = vmatpush1.msra.mxu0 0.0
    %1294 = vmatprep.subr.mxu0 0.0
    %1295 = vmatpush1.msra.mxu0 0.0
    %1296 = vmatprep.subr.mxu0 0.0
    %1297 = vmatpush1.msra.mxu0 0.0
    %1298 = vmatprep.subr.mxu0 0.0
    %1299 = vmatpush1.msra.mxu0 0.0
    %1300 = vmatprep.subr.mxu0 0.0
    %1301 = vmatpush1.msra.mxu0 0.0
    %1302 = vmatprep.subr.mxu0 0.0
    %1303 = vmatpush1.msra.mxu0 0.0
    %1304 = vmatprep.subr.mxu0 0.0
    %1305 = vmatpush1.msra.mxu0 0.0
    %1306 = vmatprep.subr.mxu0 0.0
    %1307 = vmatpush1.msra.mxu0 0.0
    %1308 = vmatprep.subr.mxu0 0.0
    %1309 = vmatpush1.msra.mxu0 0.0
    %1310 = vmatprep.subr.mxu0 0.0
    %1311 = vmatpush1.msra.mxu0 0.0
    %1312 = vmatprep.subr.mxu0 0.0
    %1313 = vmatpush1.msra.mxu0 0.0
    %1314 = vmatprep.subr.mxu0 0.0
    %1315 = vmatpush1.msra.mxu0 0.0
    %1316 = vmatprep.subr.mxu0 0.0
    %1317 = vmatpush1.msra.mxu0 0.0
    %1318 = vmatprep.subr.mxu0 0.0
    %1319 = vmatpush1.msra.mxu0 0.0
    %1320 = vmatprep.subr.mxu0 0.0
    %1321 = vmatpush1.msra.mxu0 0.0
    %1322 = vmatprep.subr.mxu0 0.0
    %1323 = vmatpush1.msra.mxu0 0.0
    %1324 = vmatprep.subr.mxu0 0.0
    %1325 = vmatpush1.msra.mxu0 0.0
    %1326 = vmatprep.subr.mxu0 0.0
    %1327 = vmatpush1.msra.mxu0 0.0
    %1328 = vmatprep.subr.mxu0 0.0
    %1329 = vmatpush1.msra.mxu0 0.0
    %1330 = vmatprep.subr.mxu0 0.0
    %1331 = vmatpush1.msra.mxu0 0.0
    %1332 = vmatprep.subr.mxu0 0.0
    %1333 = vmatpush1.msra.mxu0 0.0
    %1334 = vmatprep.subr.mxu0 0.0
    %1335 = vmatpush1.msra.mxu0 0.0
    %1336 = vmatprep.subr.mxu0 0.0
    %1337 = vmatpush1.msra.mxu0 0.0
    %1338 = vmatprep.subr.mxu0 0.0
    %1339 = vmatpush1.msra.mxu0 0.0
    %1340 = vmatprep.subr.mxu0 0.0
    %1341 = vmatpush1.msra.mxu0 0.0
    %1342 = vmatprep.subr.mxu0 0.0
    %1343 = vmatpush1.msra.mxu0 0.0
    %1344 = vmatprep.subr.mxu0 0.0
    %1345 = vmatpush1.msra.mxu0 0.0
    %1346 = vmatprep.subr.mxu0 0.0
    %1347 = vmatpush1.msra.mxu0 0.0
    %1348 = vmatprep.subr.mxu0 0.0
    %1349 = vmatpush1.msra.mxu0 0.0
    %1350 = vmatprep.subr.mxu0 0.0
    %1351 = vmatpush1.msra.mxu0 0.0
    %1352 = vmatprep.mubr.f32.mxu0 0.0
    %1353 = vmatmul.mubr.f32.gmra.mrb[0].mxu0 %v1286
    %v1354 = vpop.f32.mrb[0].mxu0
    %v1355 = vadd.f32 0.0, %v1354
    %v1356 = vpop.f32.mrb[0].mxu0
    %1357 = vdwg.mxu0
    %1358 = vrot.lane.b32.xlu0 %v261, 48
    %v1359 = vpop.permute.xlu0 %1358
    %v1362 = vsel %vm272, %v1281, 0
    %1364 = vmatprep.subr.mxu0 0.0
    %1365 = vmatpush1.msra.mxu0 %v1359
    %1366 = vmatprep.subr.mxu0 0.0
    %1367 = vmatpush1.msra.mxu0 0.0
    %1368 = vmatprep.subr.mxu0 0.0
    %1369 = vmatpush1.msra.mxu0 0.0
    %1370 = vmatprep.subr.mxu0 0.0
    %1371 = vmatpush1.msra.mxu0 0.0
    %1372 = vmatprep.subr.mxu0 0.0
    %1373 = vmatpush1.msra.mxu0 0.0
    %1374 = vmatprep.subr.mxu0 0.0
    %1375 = vmatpush1.msra.mxu0 0.0
    %1376 = vmatprep.subr.mxu0 0.0
    %1377 = vmatpush1.msra.mxu0 0.0
    %1378 = vmatprep.subr.mxu0 0.0
    %1379 = vmatpush1.msra.mxu0 0.0
    %1380 = vmatprep.subr.mxu0 0.0
    %1381 = vmatpush1.msra.mxu0 0.0
    %1382 = vmatprep.subr.mxu0 0.0
    %1383 = vmatpush1.msra.mxu0 0.0
    %1384 = vmatprep.subr.mxu0 0.0
    %1385 = vmatpush1.msra.mxu0 0.0
    %1386 = vmatprep.subr.mxu0 0.0
    %1387 = vmatpush1.msra.mxu0 0.0
    %1388 = vmatprep.subr.mxu0 0.0
    %1389 = vmatpush1.msra.mxu0 0.0
    %1390 = vmatprep.subr.mxu0 0.0
    %1391 = vmatpush1.msra.mxu0 0.0
    %1392 = vmatprep.subr.mxu0 0.0
    %1393 = vmatpush1.msra.mxu0 0.0
    %1394 = vmatprep.subr.mxu0 0.0
    %1395 = vmatpush1.msra.mxu0 0.0
    %1396 = vmatprep.subr.mxu0 0.0
    %1397 = vmatpush1.msra.mxu0 0.0
    %1398 = vmatprep.subr.mxu0 0.0
    %1399 = vmatpush1.msra.mxu0 0.0
    %1400 = vmatprep.subr.mxu0 0.0
    %1401 = vmatpush1.msra.mxu0 0.0
    %1402 = vmatprep.subr.mxu0 0.0
    %1403 = vmatpush1.msra.mxu0 0.0
    %1404 = vmatprep.subr.mxu0 0.0
    %1405 = vmatpush1.msra.mxu0 0.0
    %1406 = vmatprep.subr.mxu0 0.0
    %1407 = vmatpush1.msra.mxu0 0.0
    %1408 = vmatprep.subr.mxu0 0.0
    %1409 = vmatpush1.msra.mxu0 0.0
    %1410 = vmatprep.subr.mxu0 0.0
    %1411 = vmatpush1.msra.mxu0 0.0
    %1412 = vmatprep.subr.mxu0 0.0
    %1413 = vmatpush1.msra.mxu0 0.0
    %1414 = vmatprep.subr.mxu0 0.0
    %1415 = vmatpush1.msra.mxu0 0.0
    %1416 = vmatprep.subr.mxu0 0.0
    %1417 = vmatpush1.msra.mxu0 0.0
    %1418 = vmatprep.subr.mxu0 0.0
    %1419 = vmatpush1.msra.mxu0 0.0
    %1420 = vmatprep.subr.mxu0 0.0
    %1421 = vmatpush1.msra.mxu0 0.0
    %1422 = vmatprep.subr.mxu0 0.0
    %1423 = vmatpush1.msra.mxu0 0.0
    %1424 = vmatprep.subr.mxu0 0.0
    %1425 = vmatpush1.msra.mxu0 0.0
    %1426 = vmatprep.subr.mxu0 0.0
    %1427 = vmatpush1.msra.mxu0 0.0
    %1428 = vmatprep.mubr.f32.mxu0 0.0
    %1429 = vmatmul.mubr.f32.gmra.mrb[0].mxu0 %v1362
    %v1430 = vpop.f32.mrb[0].mxu0
    %v1431 = vadd.f32 0.0, %v1430
    %v1432 = vpop.f32.mrb[0].mxu0
    %1433 = vdwg.mxu0
    %v1435 = vsel %vm272, %v1355, 0
    %v1438 = vsel %vm272, %v1431, 0
    %1440 = vmatprep.subr.mxu0 0.0
    %1441 = vmatpush1.msra.mxu0 %v266
    %1442 = vmatprep.subr.mxu0 0.0
    %1443 = vmatpush1.msra.mxu0 0.0
    %1444 = vmatprep.subr.mxu0 0.0
    %1445 = vmatpush1.msra.mxu0 0.0
    %1446 = vmatprep.subr.mxu0 0.0
    %1447 = vmatpush1.msra.mxu0 0.0
    %1448 = vmatprep.subr.mxu0 0.0
    %1449 = vmatpush1.msra.mxu0 0.0
    %1450 = vmatprep.subr.mxu0 0.0
    %1451 = vmatpush1.msra.mxu0 0.0
    %1452 = vmatprep.subr.mxu0 0.0
    %1453 = vmatpush1.msra.mxu0 0.0
    %1454 = vmatprep.subr.mxu0 0.0
    %1455 = vmatpush1.msra.mxu0 0.0
    %1456 = vmatprep.subr.mxu0 0.0
    %1457 = vmatpush1.msra.mxu0 0.0
    %1458 = vmatprep.subr.mxu0 0.0
    %1459 = vmatpush1.msra.mxu0 0.0
    %1460 = vmatprep.subr.mxu0 0.0
    %1461 = vmatpush1.msra.mxu0 0.0
    %1462 = vmatprep.subr.mxu0 0.0
    %1463 = vmatpush1.msra.mxu0 0.0
    %1464 = vmatprep.subr.mxu0 0.0
    %1465 = vmatpush1.msra.mxu0 0.0
    %1466 = vmatprep.subr.mxu0 0.0
    %1467 = vmatpush1.msra.mxu0 0.0
    %1468 = vmatprep.subr.mxu0 0.0
    %1469 = vmatpush1.msra.mxu0 0.0
    %1470 = vmatprep.subr.mxu0 0.0
    %1471 = vmatpush1.msra.mxu0 0.0
    %1472 = vmatprep.subr.mxu0 0.0
    %1473 = vmatpush1.msra.mxu0 0.0
    %1474 = vmatprep.subr.mxu0 0.0
    %1475 = vmatpush1.msra.mxu0 0.0
    %1476 = vmatprep.subr.mxu0 0.0
    %1477 = vmatpush1.msra.mxu0 0.0
    %1478 = vmatprep.subr.mxu0 0.0
    %1479 = vmatpush1.msra.mxu0 0.0
    %1480 = vmatprep.subr.mxu0 0.0
    %1481 = vmatpush1.msra.mxu0 0.0
    %1482 = vmatprep.subr.mxu0 0.0
    %1483 = vmatpush1.msra.mxu0 0.0
    %1484 = vmatprep.subr.mxu0 0.0
    %1485 = vmatpush1.msra.mxu0 0.0
    %1486 = vmatprep.subr.mxu0 0.0
    %1487 = vmatpush1.msra.mxu0 0.0
    %1488 = vmatprep.subr.mxu0 0.0
    %1489 = vmatpush1.msra.mxu0 0.0
    %1490 = vmatprep.subr.mxu0 0.0
    %1491 = vmatpush1.msra.mxu0 0.0
    %1492 = vmatprep.subr.mxu0 0.0
    %1493 = vmatpush1.msra.mxu0 0.0
    %1494 = vmatprep.subr.mxu0 0.0
    %1495 = vmatpush1.msra.mxu0 0.0
    %1496 = vmatprep.subr.mxu0 0.0
    %1497 = vmatpush1.msra.mxu0 0.0
    %1498 = vmatprep.subr.mxu0 0.0
    %1499 = vmatpush1.msra.mxu0 0.0
    %1500 = vmatprep.subr.mxu0 0.0
    %1501 = vmatpush1.msra.mxu0 0.0
    %1502 = vmatprep.subr.mxu0 0.0
    %1503 = vmatpush1.msra.mxu0 0.0
    %1504 = vmatprep.mubr.f32.mxu0 0.0
    %1505 = vmatmul.mubr.f32.gmra.mrb[0].mxu0 %v1435
    %v1506 = vpop.f32.mrb[0].mxu0
    %v1507 = vadd.f32 0.0, %v1506
    %v1508 = vpop.f32.mrb[0].mxu0
    %1509 = vmatprep.mubr.f32.mxu0 0.0
    %1510 = vmatmul.mubr.f32.gmra.mrb[0].mxu0 %v1438
    %v1511 = vpop.f32.mrb[0].mxu0
    %v1512 = vadd.f32 0.0, %v1511
    %v1513 = vpop.f32.mrb[0].mxu0
    %1514 = vdwg.mxu0
    %v1515 = vadd.f32 %v1092, %v1507
    %v1516 = vadd.f32 %v1097, %v1512
    %1517 = vrot.lane.b32.xlu0 %v256, 104
    %v1518 = vpop.permute.xlu0 %1517
    %1519 = vrot.lane.b32.xlu0 %v256, 72
    %v1520 = vpop.permute.xlu0 %1519
    %v1521 = vsel %vm272, %v1518, 0
    %v1523 = vsel %vm272, %v1520, 0
    %1525 = vmatprep.subr.mxu0 0.0
    %1526 = vmatpush1.xpose.msra.mxu0 %v1523
    %1527 = vmatprep.subr.mxu0 0.0
    %1528 = vmatpush1.xpose.msra.mxu0 0.0
    %1529 = vmatprep.subr.mxu0 0.0
    %1530 = vmatpush1.xpose.msra.mxu0 0.0
    %1531 = vmatprep.subr.mxu0 0.0
    %1532 = vmatpush1.xpose.msra.mxu0 0.0
    %1533 = vmatprep.subr.mxu0 0.0
    %1534 = vmatpush1.xpose.msra.mxu0 0.0
    %1535 = vmatprep.subr.mxu0 0.0
    %1536 = vmatpush1.xpose.msra.mxu0 0.0
    %1537 = vmatprep.subr.mxu0 0.0
    %1538 = vmatpush1.xpose.msra.mxu0 0.0
    %1539 = vmatprep.subr.mxu0 0.0
    %1540 = vmatpush1.xpose.msra.mxu0 0.0
    %1541 = vmatprep.subr.mxu0 0.0
    %1542 = vmatpush1.xpose.msra.mxu0 0.0
    %1543 = vmatprep.subr.mxu0 0.0
    %1544 = vmatpush1.xpose.msra.mxu0 0.0
    %1545 = vmatprep.subr.mxu0 0.0
    %1546 = vmatpush1.xpose.msra.mxu0 0.0
    %1547 = vmatprep.subr.mxu0 0.0
    %1548 = vmatpush1.xpose.msra.mxu0 0.0
    %1549 = vmatprep.subr.mxu0 0.0
    %1550 = vmatpush1.xpose.msra.mxu0 0.0
    %1551 = vmatprep.subr.mxu0 0.0
    %1552 = vmatpush1.xpose.msra.mxu0 0.0
    %1553 = vmatprep.subr.mxu0 0.0
    %1554 = vmatpush1.xpose.msra.mxu0 0.0
    %1555 = vmatprep.subr.mxu0 0.0
    %1556 = vmatpush1.xpose.msra.mxu0 0.0
    %1557 = vmatprep.subr.mxu0 0.0
    %1558 = vmatpush1.xpose.msra.mxu0 0.0
    %1559 = vmatprep.subr.mxu0 0.0
    %1560 = vmatpush1.xpose.msra.mxu0 0.0
    %1561 = vmatprep.subr.mxu0 0.0
    %1562 = vmatpush1.xpose.msra.mxu0 0.0
    %1563 = vmatprep.subr.mxu0 0.0
    %1564 = vmatpush1.xpose.msra.mxu0 0.0
    %1565 = vmatprep.subr.mxu0 0.0
    %1566 = vmatpush1.xpose.msra.mxu0 0.0
    %1567 = vmatprep.subr.mxu0 0.0
    %1568 = vmatpush1.xpose.msra.mxu0 0.0
    %1569 = vmatprep.subr.mxu0 0.0
    %1570 = vmatpush1.xpose.msra.mxu0 0.0
    %1571 = vmatprep.subr.mxu0 0.0
    %1572 = vmatpush1.xpose.msra.mxu0 0.0
    %1573 = vmatprep.subr.mxu0 0.0
    %1574 = vmatpush1.xpose.msra.mxu0 0.0
    %1575 = vmatprep.subr.mxu0 0.0
    %1576 = vmatpush1.xpose.msra.mxu0 0.0
    %1577 = vmatprep.subr.mxu0 0.0
    %1578 = vmatpush1.xpose.msra.mxu0 0.0
    %1579 = vmatprep.subr.mxu0 0.0
    %1580 = vmatpush1.xpose.msra.mxu0 0.0
    %1581 = vmatprep.subr.mxu0 0.0
    %1582 = vmatpush1.xpose.msra.mxu0 0.0
    %1583 = vmatprep.subr.mxu0 0.0
    %1584 = vmatpush1.xpose.msra.mxu0 0.0
    %1585 = vmatprep.subr.mxu0 0.0
    %1586 = vmatpush1.xpose.msra.mxu0 0.0
    %1587 = vmatprep.subr.mxu0 0.0
    %1588 = vmatpush1.xpose.msra.mxu0 0.0
    %1589 = vmatprep.mubr.f32.mxu0 0.0
    %1590 = vmatmul.mubr.f32.gmra.mrb[0].mxu0 %v1521
    %v1591 = vpop.f32.mrb[0].mxu0
    %v1592 = vadd.f32 0.0, %v1591
    %v1593 = vpop.f32.mrb[0].mxu0
    %1594 = vdwg.mxu0
    %1595 = vrot.lane.b32.xlu0 %v261, 104
    %v1596 = vpop.permute.xlu0 %1595
    %1597 = vrot.lane.b32.xlu0 %v261, 72
    %v1598 = vpop.permute.xlu0 %1597
    %v1599 = vsel %vm272, %v1596, 0
    %v1601 = vsel %vm272, %v1598, 0
    %1603 = vmatprep.subr.mxu0 0.0
    %1604 = vmatpush1.xpose.msra.mxu0 %v1601
    %1605 = vmatprep.subr.mxu0 0.0
    %1606 = vmatpush1.xpose.msra.mxu0 0.0
    %1607 = vmatprep.subr.mxu0 0.0
    %1608 = vmatpush1.xpose.msra.mxu0 0.0
    %1609 = vmatprep.subr.mxu0 0.0
    %1610 = vmatpush1.xpose.msra.mxu0 0.0
    %1611 = vmatprep.subr.mxu0 0.0
    %1612 = vmatpush1.xpose.msra.mxu0 0.0
    %1613 = vmatprep.subr.mxu0 0.0
    %1614 = vmatpush1.xpose.msra.mxu0 0.0
    %1615 = vmatprep.subr.mxu0 0.0
    %1616 = vmatpush1.xpose.msra.mxu0 0.0
    %1617 = vmatprep.subr.mxu0 0.0
    %1618 = vmatpush1.xpose.msra.mxu0 0.0
    %1619 = vmatprep.subr.mxu0 0.0
    %1620 = vmatpush1.xpose.msra.mxu0 0.0
    %1621 = vmatprep.subr.mxu0 0.0
    %1622 = vmatpush1.xpose.msra.mxu0 0.0
    %1623 = vmatprep.subr.mxu0 0.0
    %1624 = vmatpush1.xpose.msra.mxu0 0.0
    %1625 = vmatprep.subr.mxu0 0.0
    %1626 = vmatpush1.xpose.msra.mxu0 0.0
    %1627 = vmatprep.subr.mxu0 0.0
    %1628 = vmatpush1.xpose.msra.mxu0 0.0
    %1629 = vmatprep.subr.mxu0 0.0
    %1630 = vmatpush1.xpose.msra.mxu0 0.0
    %1631 = vmatprep.subr.mxu0 0.0
    %1632 = vmatpush1.xpose.msra.mxu0 0.0
    %1633 = vmatprep.subr.mxu0 0.0
    %1634 = vmatpush1.xpose.msra.mxu0 0.0
    %1635 = vmatprep.subr.mxu0 0.0
    %1636 = vmatpush1.xpose.msra.mxu0 0.0
    %1637 = vmatprep.subr.mxu0 0.0
    %1638 = vmatpush1.xpose.msra.mxu0 0.0
    %1639 = vmatprep.subr.mxu0 0.0
    %1640 = vmatpush1.xpose.msra.mxu0 0.0
    %1641 = vmatprep.subr.mxu0 0.0
    %1642 = vmatpush1.xpose.msra.mxu0 0.0
    %1643 = vmatprep.subr.mxu0 0.0
    %1644 = vmatpush1.xpose.msra.mxu0 0.0
    %1645 = vmatprep.subr.mxu0 0.0
    %1646 = vmatpush1.xpose.msra.mxu0 0.0
    %1647 = vmatprep.subr.mxu0 0.0
    %1648 = vmatpush1.xpose.msra.mxu0 0.0
    %1649 = vmatprep.subr.mxu0 0.0
    %1650 = vmatpush1.xpose.msra.mxu0 0.0
    %1651 = vmatprep.subr.mxu0 0.0
    %1652 = vmatpush1.xpose.msra.mxu0 0.0
    %1653 = vmatprep.subr.mxu0 0.0
    %1654 = vmatpush1.xpose.msra.mxu0 0.0
    %1655 = vmatprep.subr.mxu0 0.0
    %1656 = vmatpush1.xpose.msra.mxu0 0.0
    %1657 = vmatprep.subr.mxu0 0.0
    %1658 = vmatpush1.xpose.msra.mxu0 0.0
    %1659 = vmatprep.subr.mxu0 0.0
    %1660 = vmatpush1.xpose.msra.mxu0 0.0
    %1661 = vmatprep.subr.mxu0 0.0
    %1662 = vmatpush1.xpose.msra.mxu0 0.0
    %1663 = vmatprep.subr.mxu0 0.0
    %1664 = vmatpush1.xpose.msra.mxu0 0.0
    %1665 = vmatprep.subr.mxu0 0.0
    %1666 = vmatpush1.xpose.msra.mxu0 0.0
    %1667 = vmatprep.mubr.f32.mxu0 0.0
    %1668 = vmatmul.mubr.f32.gmra.mrb[0].mxu0 %v1599
    %v1669 = vpop.f32.mrb[0].mxu0
    %v1670 = vadd.f32 0.0, %v1669
    %v1671 = vpop.f32.mrb[0].mxu0
    %1672 = vdwg.mxu0
    %v1673 = vmul.f32 %v1592, 0.35355338
    %v1674 = vmul.f32 %v1670, 0.35355338
    %v1675 = vsel %vm426, -1e+09, %v1673
    %v1676 = vsel %vm427, -1e+09, %v1674
    %v1677 = vsel %vm272, %v1675, -inf
    %1678 = vmax.xlane.f32.xlu0 %v1677
    %v1679 = vpop.xlane.xlu0 %1678
    %v1680 = vsel %vm272, %v1676, -inf
    %1681 = vmax.xlane.f32.xlu0 %v1680
    %v1682 = vpop.xlane.xlu0 %1681
    %v1683 = vsub.f32 %v1675, %v1679
    %v1684 = vsub.f32 %v1676, %v1682
    %v1685 = vmul.f32 %v1683, 1.442695
    %v1686 = vpow.pop %v1685
    %v1687 = vmul.f32 %v1684, 1.442695
    %v1688 = vpow.pop %v1687
    %v1689 = vsel %vm272, %v1686, 0.0
    %1690 = vadd.xlane.f32.xlu0 %v1689
    %v1691 = vpop.xlane.xlu0 %1690
    %v1692 = vsel %vm272, %v1688, 0.0
    %1693 = vadd.xlane.f32.xlu0 %v1692
    %v1694 = vpop.xlane.xlu0 %1693
    %v1695 = vrcp.pop %v1691
    %v1696 = vmul.f32 %v1686, %v1695
    %v1697 = vrcp.pop %v1694
    %v1698 = vmul.f32 %v1688, %v1697
    %1699 = vrot.lane.b32.xlu0 %v256, 40
    %v1700 = vpop.permute.xlu0 %1699
    %v1703 = vsel %vm272, %v1696, 0
    %1705 = vmatprep.subr.mxu0 0.0
    %1706 = vmatpush1.msra.mxu0 %v1700
    %1707 = vmatprep.subr.mxu0 0.0
    %1708 = vmatpush1.msra.mxu0 0.0
    %1709 = vmatprep.subr.mxu0 0.0
    %1710 = vmatpush1.msra.mxu0 0.0
    %1711 = vmatprep.subr.mxu0 0.0
    %1712 = vmatpush1.msra.mxu0 0.0
    %1713 = vmatprep.subr.mxu0 0.0
    %1714 = vmatpush1.msra.mxu0 0.0
    %1715 = vmatprep.subr.mxu0 0.0
    %1716 = vmatpush1.msra.mxu0 0.0
    %1717 = vmatprep.subr.mxu0 0.0
    %1718 = vmatpush1.msra.mxu0 0.0
    %1719 = vmatprep.subr.mxu0 0.0
    %1720 = vmatpush1.msra.mxu0 0.0
    %1721 = vmatprep.subr.mxu0 0.0
    %1722 = vmatpush1.msra.mxu0 0.0
    %1723 = vmatprep.subr.mxu0 0.0
    %1724 = vmatpush1.msra.mxu0 0.0
    %1725 = vmatprep.subr.mxu0 0.0
    %1726 = vmatpush1.msra.mxu0 0.0
    %1727 = vmatprep.subr.mxu0 0.0
    %1728 = vmatpush1.msra.mxu0 0.0
    %1729 = vmatprep.subr.mxu0 0.0
    %1730 = vmatpush1.msra.mxu0 0.0
    %1731 = vmatprep.subr.mxu0 0.0
    %1732 = vmatpush1.msra.mxu0 0.0
    %1733 = vmatprep.subr.mxu0 0.0
    %1734 = vmatpush1.msra.mxu0 0.0
    %1735 = vmatprep.subr.mxu0 0.0
    %1736 = vmatpush1.msra.mxu0 0.0
    %1737 = vmatprep.subr.mxu0 0.0
    %1738 = vmatpush1.msra.mxu0 0.0
    %1739 = vmatprep.subr.mxu0 0.0
    %1740 = vmatpush1.msra.mxu0 0.0
    %1741 = vmatprep.subr.mxu0 0.0
    %1742 = vmatpush1.msra.mxu0 0.0
    %1743 = vmatprep.subr.mxu0 0.0
    %1744 = vmatpush1.msra.mxu0 0.0
    %1745 = vmatprep.subr.mxu0 0.0
    %1746 = vmatpush1.msra.mxu0 0.0
    %1747 = vmatprep.subr.mxu0 0.0
    %1748 = vmatpush1.msra.mxu0 0.0
    %1749 = vmatprep.subr.mxu0 0.0
    %1750 = vmatpush1.msra.mxu0 0.0
    %1751 = vmatprep.subr.mxu0 0.0
    %1752 = vmatpush1.msra.mxu0 0.0
    %1753 = vmatprep.subr.mxu0 0.0
    %1754 = vmatpush1.msra.mxu0 0.0
    %1755 = vmatprep.subr.mxu0 0.0
    %1756 = vmatpush1.msra.mxu0 0.0
    %1757 = vmatprep.subr.mxu0 0.0
    %1758 = vmatpush1.msra.mxu0 0.0
    %1759 = vmatprep.subr.mxu0 0.0
    %1760 = vmatpush1.msra.mxu0 0.0
    %1761 = vmatprep.subr.mxu0 0.0
    %1762 = vmatpush1.msra.mxu0 0.0
    %1763 = vmatprep.subr.mxu0 0.0
    %1764 = vmatpush1.msra.mxu0 0.0
    %1765 = vmatprep.subr.mxu0 0.0
    %1766 = vmatpush1.msra.mxu0 0.0
    %1767 = vmatprep.subr.mxu0 0.0
    %1768 = vmatpush1.msra.mxu0 0.0
    %1769 = vmatprep.mubr.f32.mxu0 0.0
    %1770 = vmatmul.mubr.f32.gmra.mrb[0].mxu0 %v1703
    %v1771 = vpop.f32.mrb[0].mxu0
    %v1772 = vadd.f32 0.0, %v1771
    %v1773 = vpop.f32.mrb[0].mxu0
    %1774 = vdwg.mxu0
    %1775 = vrot.lane.b32.xlu0 %v261, 40
    %v1776 = vpop.permute.xlu0 %1775
    %v1779 = vsel %vm272, %v1698, 0
    %1781 = vmatprep.subr.mxu0 0.0
    %1782 = vmatpush1.msra.mxu0 %v1776
    %1783 = vmatprep.subr.mxu0 0.0
    %1784 = vmatpush1.msra.mxu0 0.0
    %1785 = vmatprep.subr.mxu0 0.0
    %1786 = vmatpush1.msra.mxu0 0.0
    %1787 = vmatprep.subr.mxu0 0.0
    %1788 = vmatpush1.msra.mxu0 0.0
    %1789 = vmatprep.subr.mxu0 0.0
    %1790 = vmatpush1.msra.mxu0 0.0
    %1791 = vmatprep.subr.mxu0 0.0
    %1792 = vmatpush1.msra.mxu0 0.0
    %1793 = vmatprep.subr.mxu0 0.0
    %1794 = vmatpush1.msra.mxu0 0.0
    %1795 = vmatprep.subr.mxu0 0.0
    %1796 = vmatpush1.msra.mxu0 0.0
    %1797 = vmatprep.subr.mxu0 0.0
    %1798 = vmatpush1.msra.mxu0 0.0
    %1799 = vmatprep.subr.mxu0 0.0
    %1800 = vmatpush1.msra.mxu0 0.0
    %1801 = vmatprep.subr.mxu0 0.0
    %1802 = vmatpush1.msra.mxu0 0.0
    %1803 = vmatprep.subr.mxu0 0.0
    %1804 = vmatpush1.msra.mxu0 0.0
    %1805 = vmatprep.subr.mxu0 0.0
    %1806 = vmatpush1.msra.mxu0 0.0
    %1807 = vmatprep.subr.mxu0 0.0
    %1808 = vmatpush1.msra.mxu0 0.0
    %1809 = vmatprep.subr.mxu0 0.0
    %1810 = vmatpush1.msra.mxu0 0.0
    %1811 = vmatprep.subr.mxu0 0.0
    %1812 = vmatpush1.msra.mxu0 0.0
    %1813 = vmatprep.subr.mxu0 0.0
    %1814 = vmatpush1.msra.mxu0 0.0
    %1815 = vmatprep.subr.mxu0 0.0
    %1816 = vmatpush1.msra.mxu0 0.0
    %1817 = vmatprep.subr.mxu0 0.0
    %1818 = vmatpush1.msra.mxu0 0.0
    %1819 = vmatprep.subr.mxu0 0.0
    %1820 = vmatpush1.msra.mxu0 0.0
    %1821 = vmatprep.subr.mxu0 0.0
    %1822 = vmatpush1.msra.mxu0 0.0
    %1823 = vmatprep.subr.mxu0 0.0
    %1824 = vmatpush1.msra.mxu0 0.0
    %1825 = vmatprep.subr.mxu0 0.0
    %1826 = vmatpush1.msra.mxu0 0.0
    %1827 = vmatprep.subr.mxu0 0.0
    %1828 = vmatpush1.msra.mxu0 0.0
    %1829 = vmatprep.subr.mxu0 0.0
    %1830 = vmatpush1.msra.mxu0 0.0
    %1831 = vmatprep.subr.mxu0 0.0
    %1832 = vmatpush1.msra.mxu0 0.0
    %1833 = vmatprep.subr.mxu0 0.0
    %1834 = vmatpush1.msra.mxu0 0.0
    %1835 = vmatprep.subr.mxu0 0.0
    %1836 = vmatpush1.msra.mxu0 0.0
    %1837 = vmatprep.subr.mxu0 0.0
    %1838 = vmatpush1.msra.mxu0 0.0
    %1839 = vmatprep.subr.mxu0 0.0
    %1840 = vmatpush1.msra.mxu0 0.0
    %1841 = vmatprep.subr.mxu0 0.0
    %1842 = vmatpush1.msra.mxu0 0.0
    %1843 = vmatprep.subr.mxu0 0.0
    %1844 = vmatpush1.msra.mxu0 0.0
    %1845 = vmatprep.mubr.f32.mxu0 0.0
    %1846 = vmatmul.mubr.f32.gmra.mrb[0].mxu0 %v1779
    %v1847 = vpop.f32.mrb[0].mxu0
    %v1848 = vadd.f32 0.0, %v1847
    %v1849 = vpop.f32.mrb[0].mxu0
    %1850 = vdwg.mxu0
    %v1852 = vsel %vm272, %v1772, 0
    %v1855 = vsel %vm272, %v1848, 0
    %1857 = vmatprep.subr.mxu0 0.0
    %1858 = vmatpush1.msra.mxu0 %v267
    %1859 = vmatprep.subr.mxu0 0.0
    %1860 = vmatpush1.msra.mxu0 0.0
    %1861 = vmatprep.subr.mxu0 0.0
    %1862 = vmatpush1.msra.mxu0 0.0
    %1863 = vmatprep.subr.mxu0 0.0
    %1864 = vmatpush1.msra.mxu0 0.0
    %1865 = vmatprep.subr.mxu0 0.0
    %1866 = vmatpush1.msra.mxu0 0.0
    %1867 = vmatprep.subr.mxu0 0.0
    %1868 = vmatpush1.msra.mxu0 0.0
    %1869 = vmatprep.subr.mxu0 0.0
    %1870 = vmatpush1.msra.mxu0 0.0
    %1871 = vmatprep.subr.mxu0 0.0
    %1872 = vmatpush1.msra.mxu0 0.0
    %1873 = vmatprep.subr.mxu0 0.0
    %1874 = vmatpush1.msra.mxu0 0.0
    %1875 = vmatprep.subr.mxu0 0.0
    %1876 = vmatpush1.msra.mxu0 0.0
    %1877 = vmatprep.subr.mxu0 0.0
    %1878 = vmatpush1.msra.mxu0 0.0
    %1879 = vmatprep.subr.mxu0 0.0
    %1880 = vmatpush1.msra.mxu0 0.0
    %1881 = vmatprep.subr.mxu0 0.0
    %1882 = vmatpush1.msra.mxu0 0.0
    %1883 = vmatprep.subr.mxu0 0.0
    %1884 = vmatpush1.msra.mxu0 0.0
    %1885 = vmatprep.subr.mxu0 0.0
    %1886 = vmatpush1.msra.mxu0 0.0
    %1887 = vmatprep.subr.mxu0 0.0
    %1888 = vmatpush1.msra.mxu0 0.0
    %1889 = vmatprep.subr.mxu0 0.0
    %1890 = vmatpush1.msra.mxu0 0.0
    %1891 = vmatprep.subr.mxu0 0.0
    %1892 = vmatpush1.msra.mxu0 0.0
    %1893 = vmatprep.subr.mxu0 0.0
    %1894 = vmatpush1.msra.mxu0 0.0
    %1895 = vmatprep.subr.mxu0 0.0
    %1896 = vmatpush1.msra.mxu0 0.0
    %1897 = vmatprep.subr.mxu0 0.0
    %1898 = vmatpush1.msra.mxu0 0.0
    %1899 = vmatprep.subr.mxu0 0.0
    %1900 = vmatpush1.msra.mxu0 0.0
    %1901 = vmatprep.subr.mxu0 0.0
    %1902 = vmatpush1.msra.mxu0 0.0
    %1903 = vmatprep.subr.mxu0 0.0
    %1904 = vmatpush1.msra.mxu0 0.0
    %1905 = vmatprep.subr.mxu0 0.0
    %1906 = vmatpush1.msra.mxu0 0.0
    %1907 = vmatprep.subr.mxu0 0.0
    %1908 = vmatpush1.msra.mxu0 0.0
    %1909 = vmatprep.subr.mxu0 0.0
    %1910 = vmatpush1.msra.mxu0 0.0
    %1911 = vmatprep.subr.mxu0 0.0
    %1912 = vmatpush1.msra.mxu0 0.0
    %1913 = vmatprep.subr.mxu0 0.0
    %1914 = vmatpush1.msra.mxu0 0.0
    %1915 = vmatprep.subr.mxu0 0.0
    %1916 = vmatpush1.msra.mxu0 0.0
    %1917 = vmatprep.subr.mxu0 0.0
    %1918 = vmatpush1.msra.mxu0 0.0
    %1919 = vmatprep.subr.mxu0 0.0
    %1920 = vmatpush1.msra.mxu0 0.0
    %1921 = vmatprep.mubr.f32.mxu0 0.0
    %1922 = vmatmul.mubr.f32.gmra.mrb[0].mxu0 %v1852
    %v1923 = vpop.f32.mrb[0].mxu0
    %v1924 = vadd.f32 0.0, %v1923
    %v1925 = vpop.f32.mrb[0].mxu0
    %1926 = vmatprep.mubr.f32.mxu0 0.0
    %1927 = vmatmul.mubr.f32.gmra.mrb[0].mxu0 %v1855
    %v1928 = vpop.f32.mrb[0].mxu0
    %v1929 = vadd.f32 0.0, %v1928
    %v1930 = vpop.f32.mrb[0].mxu0
    %1931 = vdwg.mxu0
    %v1932 = vadd.f32 %v1515, %v1924
    %v1933 = vadd.f32 %v1516, %v1929
    %v1935 = vlaneseq
    %v1936 = vshrl.u32 %v1935, 7
    %v1937 = vsub.s32 0, %v1936
    %v1938 = vrot.slane %v268, %v1937
    %v1940 = vadd.f32 %v1932, %v1938
    %v1941 = vadd.f32 %v1933, %v1938
    %v1942 = vadd.f32 %v161, %v1940
    %v1943 = vadd.f32 %v162, %v1941
    %v1944 = vsel %vm182, %v1942, 0.0
    %1945 = vadd.xlane.f32.xlu0 %v1944
    %v1946 = vpop.xlane.xlu0 %1945
    %v1947 = vsel %vm182, %v1943, 0.0
    %1948 = vadd.xlane.f32.xlu0 %v1947
    %v1949 = vpop.xlane.xlu0 %1948
    %v1950 = vrcp.pop 32.0
    %v1951 = vmul.f32 %v1946, %v1950
    %v1952 = vmul.f32 %v1949, %v1950
    %v1953 = vsub.f32 %v1942, %v1951
    %v1954 = vsub.f32 %v1943, %v1952
    %v1955 = vmul.f32 %v1953, %v1953
    %v1956 = vmul.f32 %v1954, %v1954
    %v1957 = vsel %vm182, %v1955, 0.0
    %1958 = vadd.xlane.f32.xlu0 %v1957
    %v1959 = vpop.xlane.xlu0 %1958
    %v1960 = vsel %vm182, %v1956, 0.0
    %1961 = vadd.xlane.f32.xlu0 %v1960
    %v1962 = vpop.xlane.xlu0 %1961
    %v1963 = vmul.f32 %v1959, %v1950
    %v1964 = vmul.f32 %v1962, %v1950
    %v1965 = vadd.f32 %v1963, 1e-05
    %v1966 = vadd.f32 %v1964, 1e-05
    %v1967 = vrsqrt.pop %v1965
    %v1968 = vrsqrt.pop %v1966
    %v1969 = vmul.f32 %v1953, %v1967
    %v1970 = vmul.f32 %v1954, %v1968
    %v1971 = vlaneseq
    %v1972 = vshrl.u32 %v1971, 7
    %v1973 = vsub.s32 0, %v1972
    %v1974 = vrot.slane %v169, %v1973
    %v1975 = vmul.f32 %v1969, %v1974
    %v1976 = vmul.f32 %v1970, %v1974
    %v1977 = vlaneseq
    %v1978 = vshrl.u32 %v1977, 7
    %v1979 = vsub.s32 0, %v1978
    %v1980 = vrot.slane %v170, %v1979
    %v1981 = vadd.f32 %v1975, %v1980
    %v1982 = vadd.f32 %v1976, %v1980
    %v1983 = vld [vmem:[%s8] sm:$0xff]
    %v1984 = vld [vmem:[%s8 + $0x8] sm:$0xff]
    %v1985 = vld [vmem:[%s8 + $0x10] sm:$0xff]
    %v1986 = vld [vmem:[%s8 + $0x18] sm:$0xff]
    %v1987 = vld [vmem:[%s9] sm:$0x1]
    %v1989 = vlaneseq
    %v1990 = vshrl.u32 %v1989, 7
    %v1991 = vsub.s32 0, %v1990
    %v1992 = vrot.slane %v1987, %v1991
    %v1995 = vsel %vm182, %v1981, 0
    %v1998 = vsel %vm182, %v1982, 0
    %2000 = vmatprep.subr.mxu0 0.0
    %2001 = vmatpush1.msra.mxu0 %v1983
    %2002 = vmatprep.subr.mxu0 0.0
    %2003 = vmatpush1.msra.mxu0 %v1984
    %2004 = vmatprep.subr.mxu0 0.0
    %2005 = vmatpush1.msra.mxu0 %v1985
    %2006 = vmatprep.subr.mxu0 0.0
    %2007 = vmatpush1.msra.mxu0 %v1986
    %2008 = vmatprep.subr.mxu0 0.0
    %2009 = vmatpush1.msra.mxu0 0.0
    %2010 = vmatprep.subr.mxu0 0.0
    %2011 = vmatpush1.msra.mxu0 0.0
    %2012 = vmatprep.subr.mxu0 0.0
    %2013 = vmatpush1.msra.mxu0 0.0
    %2014 = vmatprep.subr.mxu0 0.0
    %2015 = vmatpush1.msra.mxu0 0.0
    %2016 = vmatprep.subr.mxu0 0.0
    %2017 = vmatpush1.msra.mxu0 0.0
    %2018 = vmatprep.subr.mxu0 0.0
    %2019 = vmatpush1.msra.mxu0 0.0
    %2020 = vmatprep.subr.mxu0 0.0
    %2021 = vmatpush1.msra.mxu0 0.0
    %2022 = vmatprep.subr.mxu0 0.0
    %2023 = vmatpush1.msra.mxu0 0.0
    %2024 = vmatprep.subr.mxu0 0.0
    %2025 = vmatpush1.msra.mxu0 0.0
    %2026 = vmatprep.subr.mxu0 0.0
    %2027 = vmatpush1.msra.mxu0 0.0
    %2028 = vmatprep.subr.mxu0 0.0
    %2029 = vmatpush1.msra.mxu0 0.0
    %2030 = vmatprep.subr.mxu0 0.0
    %2031 = vmatpush1.msra.mxu0 0.0
    %2032 = vmatprep.subr.mxu0 0.0
    %2033 = vmatpush1.msra.mxu0 0.0
    %2034 = vmatprep.subr.mxu0 0.0
    %2035 = vmatpush1.msra.mxu0 0.0
    %2036 = vmatprep.subr.mxu0 0.0
    %2037 = vmatpush1.msra.mxu0 0.0
    %2038 = vmatprep.subr.mxu0 0.0
    %2039 = vmatpush1.msra.mxu0 0.0
    %2040 = vmatprep.subr.mxu0 0.0
    %2041 = vmatpush1.msra.mxu0 0.0
    %2042 = vmatprep.subr.mxu0 0.0
    %2043 = vmatpush1.msra.mxu0 0.0
    %2044 = vmatprep.subr.mxu0 0.0
    %2045 = vmatpush1.msra.mxu0 0.0
    %2046 = vmatprep.subr.mxu0 0.0
    %2047 = vmatpush1.msra.mxu0 0.0
    %2048 = vmatprep.subr.mxu0 0.0
    %2049 = vmatpush1.msra.mxu0 0.0
    %2050 = vmatprep.subr.mxu0 0.0
    %2051 = vmatpush1.msra.mxu0 0.0
    %2052 = vmatprep.subr.mxu0 0.0
    %2053 = vmatpush1.msra.mxu0 0.0
    %2054 = vmatprep.subr.mxu0 0.0
    %2055 = vmatpush1.msra.mxu0 0.0
    %2056 = vmatprep.subr.mxu0 0.0
    %2057 = vmatpush1.msra.mxu0 0.0
    %2058 = vmatprep.subr.mxu0 0.0
    %2059 = vmatpush1.msra.mxu0 0.0
    %2060 = vmatprep.subr.mxu0 0.0
    %2061 = vmatpush1.msra.mxu0 0.0
    %2062 = vmatprep.subr.mxu0 0.0
    %2063 = vmatpush1.msra.mxu0 0.0
    %2064 = vmatprep.mubr.f32.mxu0 0.0
    %2065 = vmatmul.mubr.f32.gmra.mrb[0].mxu0 %v1995
    %v2066 = vpop.f32.mrb[0].mxu0
    %v2067 = vadd.f32 %v1992, %v2066
    %v2068 = vpop.f32.mrb[0].mxu0
    %2069 = vmatprep.mubr.f32.mxu0 0.0
    %2070 = vmatmul.mubr.f32.gmra.mrb[0].mxu0 %v1998
    %v2071 = vpop.f32.mrb[0].mxu0
    %v2072 = vadd.f32 %v1992, %v2071
    %v2073 = vpop.f32.mrb[0].mxu0
    %2074 = vdwg.mxu0
    %v2075 = vld [vmem:[#allocation10] sm:$0xff]
    %v2076 = vld [vmem:[#allocation10 + $0x8] sm:$0xff]
    %v2077 = vld [vmem:[#allocation10 + $0x10] sm:$0xff]
    %v2078 = vld [vmem:[#allocation10 + $0x18] sm:$0xff]
    %v2079 = vld [vmem:[%s11] sm:$0x1]
    %v2081 = vlaneseq
    %v2082 = vshrl.u32 %v2081, 7
    %v2083 = vsub.s32 0, %v2082
    %v2084 = vrot.slane %v2079, %v2083
    %v2087 = vsel %vm182, %v163, 0
    %v2090 = vsel %vm182, %v164, 0
    %2092 = vmatprep.subr.mxu0 0.0
    %2093 = vmatpush1.msra.mxu0 %v2075
    %2094 = vmatprep.subr.mxu0 0.0
    %2095 = vmatpush1.msra.mxu0 %v2076
    %2096 = vmatprep.subr.mxu0 0.0
    %2097 = vmatpush1.msra.mxu0 %v2077
    %2098 = vmatprep.subr.mxu0 0.0
    %2099 = vmatpush1.msra.mxu0 %v2078
    %2100 = vmatprep.subr.mxu0 0.0
    %2101 = vmatpush1.msra.mxu0 0.0
    %2102 = vmatprep.subr.mxu0 0.0
    %2103 = vmatpush1.msra.mxu0 0.0
    %2104 = vmatprep.subr.mxu0 0.0
    %2105 = vmatpush1.msra.mxu0 0.0
    %2106 = vmatprep.subr.mxu0 0.0
    %2107 = vmatpush1.msra.mxu0 0.0
    %2108 = vmatprep.subr.mxu0 0.0
    %2109 = vmatpush1.msra.mxu0 0.0
    %2110 = vmatprep.subr.mxu0 0.0
    %2111 = vmatpush1.msra.mxu0 0.0
    %2112 = vmatprep.subr.mxu0 0.0
    %2113 = vmatpush1.msra.mxu0 0.0
    %2114 = vmatprep.subr.mxu0 0.0
    %2115 = vmatpush1.msra.mxu0 0.0
    %2116 = vmatprep.subr.mxu0 0.0
    %2117 = vmatpush1.msra.mxu0 0.0
    %2118 = vmatprep.subr.mxu0 0.0
    %2119 = vmatpush1.msra.mxu0 0.0
    %2120 = vmatprep.subr.mxu0 0.0
    %2121 = vmatpush1.msra.mxu0 0.0
    %2122 = vmatprep.subr.mxu0 0.0
    %2123 = vmatpush1.msra.mxu0 0.0
    %2124 = vmatprep.subr.mxu0 0.0
    %2125 = vmatpush1.msra.mxu0 0.0
    %2126 = vmatprep.subr.mxu0 0.0
    %2127 = vmatpush1.msra.mxu0 0.0
    %2128 = vmatprep.subr.mxu0 0.0
    %2129 = vmatpush1.msra.mxu0 0.0
    %2130 = vmatprep.subr.mxu0 0.0
    %2131 = vmatpush1.msra.mxu0 0.0
    %2132 = vmatprep.subr.mxu0 0.0
    %2133 = vmatpush1.msra.mxu0 0.0
    %2134 = vmatprep.subr.mxu0 0.0
    %2135 = vmatpush1.msra.mxu0 0.0
    %2136 = vmatprep.subr.mxu0 0.0
    %2137 = vmatpush1.msra.mxu0 0.0
    %2138 = vmatprep.subr.mxu0 0.0
    %2139 = vmatpush1.msra.mxu0 0.0
    %2140 = vmatprep.subr.mxu0 0.0
    %2141 = vmatpush1.msra.mxu0 0.0
    %2142 = vmatprep.subr.mxu0 0.0
    %2143 = vmatpush1.msra.mxu0 0.0
    %2144 = vmatprep.subr.mxu0 0.0
    %2145 = vmatpush1.msra.mxu0 0.0
    %2146 = vmatprep.subr.mxu0 0.0
    %2147 = vmatpush1.msra.mxu0 0.0
    %2148 = vmatprep.subr.mxu0 0.0
    %2149 = vmatpush1.msra.mxu0 0.0
    %2150 = vmatprep.subr.mxu0 0.0
    %2151 = vmatpush1.msra.mxu0 0.0
    %2152 = vmatprep.subr.mxu0 0.0
    %2153 = vmatpush1.msra.mxu0 0.0
    %2154 = vmatprep.subr.mxu0 0.0
    %2155 = vmatpush1.msra.mxu0 0.0
    %2156 = vmatprep.mubr.f32.mxu0 0.0
    %2157 = vmatmul.mubr.f32.gmra.mrb[0].mxu0 %v2087
    %v2158 = vpop.f32.mrb[0].mxu0
    %v2159 = vadd.f32 %v2084, %v2158
    %v2160 = vpop.f32.mrb[0].mxu0
    %2161 = vmatprep.mubr.f32.mxu0 0.0
    %2162 = vmatmul.mubr.f32.gmra.mrb[0].mxu0 %v2090
    %v2163 = vpop.f32.mrb[0].mxu0
    %v2164 = vadd.f32 %v2084, %v2163
    %v2165 = vpop.f32.mrb[0].mxu0
    %2166 = vdwg.mxu0
    %v2167 = vld [vmem:[#allocation11] sm:$0xff]
    %v2168 = vld [vmem:[#allocation11 + $0x8] sm:$0xff]
    %v2169 = vld [vmem:[#allocation11 + $0x10] sm:$0xff]
    %v2170 = vld [vmem:[#allocation11 + $0x18] sm:$0xff]
    %v2171 = vld [vmem:[%s13] sm:$0x1]
    %v2173 = vsel %vm272, %v2067, 0
    %v2176 = vsel %vm272, %v2159, 0
    %2178 = vmatprep.subr.mxu0 0.0
    %2179 = vmatpush1.xpose.msra.mxu0 %v2176
    %2180 = vmatprep.subr.mxu0 0.0
    %2181 = vmatpush1.xpose.msra.mxu0 0.0
    %2182 = vmatprep.subr.mxu0 0.0
    %2183 = vmatpush1.xpose.msra.mxu0 0.0
    %2184 = vmatprep.subr.mxu0 0.0
    %2185 = vmatpush1.xpose.msra.mxu0 0.0
    %2186 = vmatprep.subr.mxu0 0.0
    %2187 = vmatpush1.xpose.msra.mxu0 0.0
    %2188 = vmatprep.subr.mxu0 0.0
    %2189 = vmatpush1.xpose.msra.mxu0 0.0
    %2190 = vmatprep.subr.mxu0 0.0
    %2191 = vmatpush1.xpose.msra.mxu0 0.0
    %2192 = vmatprep.subr.mxu0 0.0
    %2193 = vmatpush1.xpose.msra.mxu0 0.0
    %2194 = vmatprep.subr.mxu0 0.0
    %2195 = vmatpush1.xpose.msra.mxu0 0.0
    %2196 = vmatprep.subr.mxu0 0.0
    %2197 = vmatpush1.xpose.msra.mxu0 0.0
    %2198 = vmatprep.subr.mxu0 0.0
    %2199 = vmatpush1.xpose.msra.mxu0 0.0
    %2200 = vmatprep.subr.mxu0 0.0
    %2201 = vmatpush1.xpose.msra.mxu0 0.0
    %2202 = vmatprep.subr.mxu0 0.0
    %2203 = vmatpush1.xpose.msra.mxu0 0.0
    %2204 = vmatprep.subr.mxu0 0.0
    %2205 = vmatpush1.xpose.msra.mxu0 0.0
    %2206 = vmatprep.subr.mxu0 0.0
    %2207 = vmatpush1.xpose.msra.mxu0 0.0
    %2208 = vmatprep.subr.mxu0 0.0
    %2209 = vmatpush1.xpose.msra.mxu0 0.0
    %2210 = vmatprep.subr.mxu0 0.0
    %2211 = vmatpush1.xpose.msra.mxu0 0.0
    %2212 = vmatprep.subr.mxu0 0.0
    %2213 = vmatpush1.xpose.msra.mxu0 0.0
    %2214 = vmatprep.subr.mxu0 0.0
    %2215 = vmatpush1.xpose.msra.mxu0 0.0
    %2216 = vmatprep.subr.mxu0 0.0
    %2217 = vmatpush1.xpose.msra.mxu0 0.0
    %2218 = vmatprep.subr.mxu0 0.0
    %2219 = vmatpush1.xpose.msra.mxu0 0.0
    %2220 = vmatprep.subr.mxu0 0.0
    %2221 = vmatpush1.xpose.msra.mxu0 0.0
    %2222 = vmatprep.subr.mxu0 0.0
    %2223 = vmatpush1.xpose.msra.mxu0 0.0
    %2224 = vmatprep.subr.mxu0 0.0
    %2225 = vmatpush1.xpose.msra.mxu0 0.0
    %2226 = vmatprep.subr.mxu0 0.0
    %2227 = vmatpush1.xpose.msra.mxu0 0.0
    %2228 = vmatprep.subr.mxu0 0.0
    %2229 = vmatpush1.xpose.msra.mxu0 0.0
    %2230 = vmatprep.subr.mxu0 0.0
    %2231 = vmatpush1.xpose.msra.mxu0 0.0
    %2232 = vmatprep.subr.mxu0 0.0
    %2233 = vmatpush1.xpose.msra.mxu0 0.0
    %2234 = vmatprep.subr.mxu0 0.0
    %2235 = vmatpush1.xpose.msra.mxu0 0.0
    %2236 = vmatprep.subr.mxu0 0.0
    %2237 = vmatpush1.xpose.msra.mxu0 0.0
    %2238 = vmatprep.subr.mxu0 0.0
    %2239 = vmatpush1.xpose.msra.mxu0 0.0
    %2240 = vmatprep.subr.mxu0 0.0
    %2241 = vmatpush1.xpose.msra.mxu0 0.0
    %2242 = vmatprep.mubr.f32.mxu0 0.0
    %2243 = vmatmul.mubr.f32.gmra.mrb[0].mxu0 %v2173
    %v2244 = vpop.f32.mrb[0].mxu0
    %v2245 = vadd.f32 0.0, %v2244
    %v2246 = vpop.f32.mrb[0].mxu0
    %2247 = vdwg.mxu0
    %v2249 = vsel %vm272, %v2072, 0
    %v2252 = vsel %vm272, %v2164, 0
    %2254 = vmatprep.subr.mxu0 0.0
    %2255 = vmatpush1.xpose.msra.mxu0 %v2252
    %2256 = vmatprep.subr.mxu0 0.0
    %2257 = vmatpush1.xpose.msra.mxu0 0.0
    %2258 = vmatprep.subr.mxu0 0.0
    %2259 = vmatpush1.xpose.msra.mxu0 0.0
    %2260 = vmatprep.subr.mxu0 0.0
    %2261 = vmatpush1.xpose.msra.mxu0 0.0
    %2262 = vmatprep.subr.mxu0 0.0
    %2263 = vmatpush1.xpose.msra.mxu0 0.0
    %2264 = vmatprep.subr.mxu0 0.0
    %2265 = vmatpush1.xpose.msra.mxu0 0.0
    %2266 = vmatprep.subr.mxu0 0.0
    %2267 = vmatpush1.xpose.msra.mxu0 0.0
    %2268 = vmatprep.subr.mxu0 0.0
    %2269 = vmatpush1.xpose.msra.mxu0 0.0
    %2270 = vmatprep.subr.mxu0 0.0
    %2271 = vmatpush1.xpose.msra.mxu0 0.0
    %2272 = vmatprep.subr.mxu0 0.0
    %2273 = vmatpush1.xpose.msra.mxu0 0.0
    %2274 = vmatprep.subr.mxu0 0.0
    %2275 = vmatpush1.xpose.msra.mxu0 0.0
    %2276 = vmatprep.subr.mxu0 0.0
    %2277 = vmatpush1.xpose.msra.mxu0 0.0
    %2278 = vmatprep.subr.mxu0 0.0
    %2279 = vmatpush1.xpose.msra.mxu0 0.0
    %2280 = vmatprep.subr.mxu0 0.0
    %2281 = vmatpush1.xpose.msra.mxu0 0.0
    %2282 = vmatprep.subr.mxu0 0.0
    %2283 = vmatpush1.xpose.msra.mxu0 0.0
    %2284 = vmatprep.subr.mxu0 0.0
    %2285 = vmatpush1.xpose.msra.mxu0 0.0
    %2286 = vmatprep.subr.mxu0 0.0
    %2287 = vmatpush1.xpose.msra.mxu0 0.0
    %2288 = vmatprep.subr.mxu0 0.0
    %2289 = vmatpush1.xpose.msra.mxu0 0.0
    %2290 = vmatprep.subr.mxu0 0.0
    %2291 = vmatpush1.xpose.msra.mxu0 0.0
    %2292 = vmatprep.subr.mxu0 0.0
    %2293 = vmatpush1.xpose.msra.mxu0 0.0
    %2294 = vmatprep.subr.mxu0 0.0
    %2295 = vmatpush1.xpose.msra.mxu0 0.0
    %2296 = vmatprep.subr.mxu0 0.0
    %2297 = vmatpush1.xpose.msra.mxu0 0.0
    %2298 = vmatprep.subr.mxu0 0.0
    %2299 = vmatpush1.xpose.msra.mxu0 0.0
    %2300 = vmatprep.subr.mxu0 0.0
    %2301 = vmatpush1.xpose.msra.mxu0 0.0
    %2302 = vmatprep.subr.mxu0 0.0
    %2303 = vmatpush1.xpose.msra.mxu0 0.0
    %2304 = vmatprep.subr.mxu0 0.0
    %2305 = vmatpush1.xpose.msra.mxu0 0.0
    %2306 = vmatprep.subr.mxu0 0.0
    %2307 = vmatpush1.xpose.msra.mxu0 0.0
    %2308 = vmatprep.subr.mxu0 0.0
    %2309 = vmatpush1.xpose.msra.mxu0 0.0
    %2310 = vmatprep.subr.mxu0 0.0
    %2311 = vmatpush1.xpose.msra.mxu0 0.0
    %2312 = vmatprep.subr.mxu0 0.0
    %2313 = vmatpush1.xpose.msra.mxu0 0.0
    %2314 = vmatprep.subr.mxu0 0.0
    %2315 = vmatpush1.xpose.msra.mxu0 0.0
    %2316 = vmatprep.subr.mxu0 0.0
    %2317 = vmatpush1.xpose.msra.mxu0 0.0
    %2318 = vmatprep.mubr.f32.mxu0 0.0
    %2319 = vmatmul.mubr.f32.gmra.mrb[0].mxu0 %v2249
    %v2320 = vpop.f32.mrb[0].mxu0
    %v2321 = vadd.f32 0.0, %v2320
    %v2322 = vpop.f32.mrb[0].mxu0
    %2323 = vdwg.mxu0
    %v2324 = vmul.f32 %v2245, 0.35355338
    %v2325 = vmul.f32 %v2321, 0.35355338
    %vm2326 = vcmp.eq.f32.partialorder %v167, 0.0
    %vm2327 = vcmp.eq.f32.partialorder %v168, 0.0
    %v2328 = vsel %vm2326, -1e+09, %v2324
    %v2329 = vsel %vm2327, -1e+09, %v2325
    %v2330 = vsel %vm272, %v2328, -inf
    %2331 = vmax.xlane.f32.xlu0 %v2330
    %v2332 = vpop.xlane.xlu0 %2331
    %v2333 = vsel %vm272, %v2329, -inf
    %2334 = vmax.xlane.f32.xlu0 %v2333
    %v2335 = vpop.xlane.xlu0 %2334
    %v2336 = vsub.f32 %v2328, %v2332
    %v2337 = vsub.f32 %v2329, %v2335
    %v2338 = vmul.f32 %v2336, 1.442695
    %v2339 = vpow.pop %v2338
    %v2340 = vmul.f32 %v2337, 1.442695
    %v2341 = vpow.pop %v2340
    %v2342 = vsel %vm272, %v2339, 0.0
    %2343 = vadd.xlane.f32.xlu0 %v2342
    %v2344 = vpop.xlane.xlu0 %2343
    %v2345 = vsel %vm272, %v2341, 0.0
    %2346 = vadd.xlane.f32.xlu0 %v2345
    %v2347 = vpop.xlane.xlu0 %2346
    %v2348 = vrcp.pop %v2344
    %v2349 = vmul.f32 %v2339, %v2348
    %v2350 = vrcp.pop %v2347
    %v2351 = vmul.f32 %v2341, %v2350
    %2352 = vrot.lane.b32.xlu0 %v2159, 96
    %v2353 = vpop.permute.xlu0 %2352
    %v2356 = vsel %vm272, %v2349, 0
    %2358 = vmatprep.subr.mxu0 0.0
    %2359 = vmatpush1.msra.mxu0 %v2353
    %2360 = vmatprep.subr.mxu0 0.0
    %2361 = vmatpush1.msra.mxu0 0.0
    %2362 = vmatprep.subr.mxu0 0.0
    %2363 = vmatpush1.msra.mxu0 0.0
    %2364 = vmatprep.subr.mxu0 0.0
    %2365 = vmatpush1.msra.mxu0 0.0
    %2366 = vmatprep.subr.mxu0 0.0
    %2367 = vmatpush1.msra.mxu0 0.0
    %2368 = vmatprep.subr.mxu0 0.0
    %2369 = vmatpush1.msra.mxu0 0.0
    %2370 = vmatprep.subr.mxu0 0.0
    %2371 = vmatpush1.msra.mxu0 0.0
    %2372 = vmatprep.subr.mxu0 0.0
    %2373 = vmatpush1.msra.mxu0 0.0
    %2374 = vmatprep.subr.mxu0 0.0
    %2375 = vmatpush1.msra.mxu0 0.0
    %2376 = vmatprep.subr.mxu0 0.0
    %2377 = vmatpush1.msra.mxu0 0.0
    %2378 = vmatprep.subr.mxu0 0.0
    %2379 = vmatpush1.msra.mxu0 0.0
    %2380 = vmatprep.subr.mxu0 0.0
    %2381 = vmatpush1.msra.mxu0 0.0
    %2382 = vmatprep.subr.mxu0 0.0
    %2383 = vmatpush1.msra.mxu0 0.0
    %2384 = vmatprep.subr.mxu0 0.0
    %2385 = vmatpush1.msra.mxu0 0.0
    %2386 = vmatprep.subr.mxu0 0.0
    %2387 = vmatpush1.msra.mxu0 0.0
    %2388 = vmatprep.subr.mxu0 0.0
    %2389 = vmatpush1.msra.mxu0 0.0
    %2390 = vmatprep.subr.mxu0 0.0
    %2391 = vmatpush1.msra.mxu0 0.0
    %2392 = vmatprep.subr.mxu0 0.0
    %2393 = vmatpush1.msra.mxu0 0.0
    %2394 = vmatprep.subr.mxu0 0.0
    %2395 = vmatpush1.msra.mxu0 0.0
    %2396 = vmatprep.subr.mxu0 0.0
    %2397 = vmatpush1.msra.mxu0 0.0
    %2398 = vmatprep.subr.mxu0 0.0
    %2399 = vmatpush1.msra.mxu0 0.0
    %2400 = vmatprep.subr.mxu0 0.0
    %2401 = vmatpush1.msra.mxu0 0.0
    %2402 = vmatprep.subr.mxu0 0.0
    %2403 = vmatpush1.msra.mxu0 0.0
    %2404 = vmatprep.subr.mxu0 0.0
    %2405 = vmatpush1.msra.mxu0 0.0
    %2406 = vmatprep.subr.mxu0 0.0
    %2407 = vmatpush1.msra.mxu0 0.0
    %2408 = vmatprep.subr.mxu0 0.0
    %2409 = vmatpush1.msra.mxu0 0.0
    %2410 = vmatprep.subr.mxu0 0.0
    %2411 = vmatpush1.msra.mxu0 0.0
    %2412 = vmatprep.subr.mxu0 0.0
    %2413 = vmatpush1.msra.mxu0 0.0
    %2414 = vmatprep.subr.mxu0 0.0
    %2415 = vmatpush1.msra.mxu0 0.0
    %2416 = vmatprep.subr.mxu0 0.0
    %2417 = vmatpush1.msra.mxu0 0.0
    %2418 = vmatprep.subr.mxu0 0.0
    %2419 = vmatpush1.msra.mxu0 0.0
    %2420 = vmatprep.subr.mxu0 0.0
    %2421 = vmatpush1.msra.mxu0 0.0
    %2422 = vmatprep.mubr.f32.mxu0 0.0
    %2423 = vmatmul.mubr.f32.gmra.mrb[0].mxu0 %v2356
    %v2424 = vpop.f32.mrb[0].mxu0
    %v2425 = vadd.f32 0.0, %v2424
    %v2426 = vpop.f32.mrb[0].mxu0
    %2427 = vdwg.mxu0
    %2428 = vrot.lane.b32.xlu0 %v2164, 96
    %v2429 = vpop.permute.xlu0 %2428
    %v2432 = vsel %vm272, %v2351, 0
    %2434 = vmatprep.subr.mxu0 0.0
    %2435 = vmatpush1.msra.mxu0 %v2429
    %2436 = vmatprep.subr.mxu0 0.0
    %2437 = vmatpush1.msra.mxu0 0.0
    %2438 = vmatprep.subr.mxu0 0.0
    %2439 = vmatpush1.msra.mxu0 0.0
    %2440 = vmatprep.subr.mxu0 0.0
    %2441 = vmatpush1.msra.mxu0 0.0
    %2442 = vmatprep.subr.mxu0 0.0
    %2443 = vmatpush1.msra.mxu0 0.0
    %2444 = vmatprep.subr.mxu0 0.0
    %2445 = vmatpush1.msra.mxu0 0.0
    %2446 = vmatprep.subr.mxu0 0.0
    %2447 = vmatpush1.msra.mxu0 0.0
    %2448 = vmatprep.subr.mxu0 0.0
    %2449 = vmatpush1.msra.mxu0 0.0
    %2450 = vmatprep.subr.mxu0 0.0
    %2451 = vmatpush1.msra.mxu0 0.0
    %2452 = vmatprep.subr.mxu0 0.0
    %2453 = vmatpush1.msra.mxu0 0.0
    %2454 = vmatprep.subr.mxu0 0.0
    %2455 = vmatpush1.msra.mxu0 0.0
    %2456 = vmatprep.subr.mxu0 0.0
    %2457 = vmatpush1.msra.mxu0 0.0
    %2458 = vmatprep.subr.mxu0 0.0
    %2459 = vmatpush1.msra.mxu0 0.0
    %2460 = vmatprep.subr.mxu0 0.0
    %2461 = vmatpush1.msra.mxu0 0.0
    %2462 = vmatprep.subr.mxu0 0.0
    %2463 = vmatpush1.msra.mxu0 0.0
    %2464 = vmatprep.subr.mxu0 0.0
    %2465 = vmatpush1.msra.mxu0 0.0
    %2466 = vmatprep.subr.mxu0 0.0
    %2467 = vmatpush1.msra.mxu0 0.0
    %2468 = vmatprep.subr.mxu0 0.0
    %2469 = vmatpush1.msra.mxu0 0.0
    %2470 = vmatprep.subr.mxu0 0.0
    %2471 = vmatpush1.msra.mxu0 0.0
    %2472 = vmatprep.subr.mxu0 0.0
    %2473 = vmatpush1.msra.mxu0 0.0
    %2474 = vmatprep.subr.mxu0 0.0
    %2475 = vmatpush1.msra.mxu0 0.0
    %2476 = vmatprep.subr.mxu0 0.0
    %2477 = vmatpush1.msra.mxu0 0.0
    %2478 = vmatprep.subr.mxu0 0.0
    %2479 = vmatpush1.msra.mxu0 0.0
    %2480 = vmatprep.subr.mxu0 0.0
    %2481 = vmatpush1.msra.mxu0 0.0
    %2482 = vmatprep.subr.mxu0 0.0
    %2483 = vmatpush1.msra.mxu0 0.0
    %2484 = vmatprep.subr.mxu0 0.0
    %2485 = vmatpush1.msra.mxu0 0.0
    %2486 = vmatprep.subr.mxu0 0.0
    %2487 = vmatpush1.msra.mxu0 0.0
    %2488 = vmatprep.subr.mxu0 0.0
    %2489 = vmatpush1.msra.mxu0 0.0
    %2490 = vmatprep.subr.mxu0 0.0
    %2491 = vmatpush1.msra.mxu0 0.0
    %2492 = vmatprep.subr.mxu0 0.0
    %2493 = vmatpush1.msra.mxu0 0.0
    %2494 = vmatprep.subr.mxu0 0.0
    %2495 = vmatpush1.msra.mxu0 0.0
    %2496 = vmatprep.subr.mxu0 0.0
    %2497 = vmatpush1.msra.mxu0 0.0
    %2498 = vmatprep.mubr.f32.mxu0 0.0
    %2499 = vmatmul.mubr.f32.gmra.mrb[0].mxu0 %v2432
    %v2500 = vpop.f32.mrb[0].mxu0
    %v2501 = vadd.f32 0.0, %v2500
    %v2502 = vpop.f32.mrb[0].mxu0
    %2503 = vdwg.mxu0
    %2504 = vrot.lane.b32.xlu0 %v2067, 120
    %v2505 = vpop.permute.xlu0 %2504
    %2506 = vrot.lane.b32.xlu0 %v2159, 120
    %v2507 = vpop.permute.xlu0 %2506
    %v2508 = vsel %vm272, %v2505, 0
    %v2510 = vsel %vm272, %v2507, 0
    %2512 = vmatprep.subr.mxu0 0.0
    %2513 = vmatpush1.xpose.msra.mxu0 %v2510
    %2514 = vmatprep.subr.mxu0 0.0
    %2515 = vmatpush1.xpose.msra.mxu0 0.0
    %2516 = vmatprep.subr.mxu0 0.0
    %2517 = vmatpush1.xpose.msra.mxu0 0.0
    %2518 = vmatprep.subr.mxu0 0.0
    %2519 = vmatpush1.xpose.msra.mxu0 0.0
    %2520 = vmatprep.subr.mxu0 0.0
    %2521 = vmatpush1.xpose.msra.mxu0 0.0
    %2522 = vmatprep.subr.mxu0 0.0
    %2523 = vmatpush1.xpose.msra.mxu0 0.0
    %2524 = vmatprep.subr.mxu0 0.0
    %2525 = vmatpush1.xpose.msra.mxu0 0.0
    %2526 = vmatprep.subr.mxu0 0.0
    %2527 = vmatpush1.xpose.msra.mxu0 0.0
    %2528 = vmatprep.subr.mxu0 0.0
    %2529 = vmatpush1.xpose.msra.mxu0 0.0
    %2530 = vmatprep.subr.mxu0 0.0
    %2531 = vmatpush1.xpose.msra.mxu0 0.0
    %2532 = vmatprep.subr.mxu0 0.0
    %2533 = vmatpush1.xpose.msra.mxu0 0.0
    %2534 = vmatprep.subr.mxu0 0.0
    %2535 = vmatpush1.xpose.msra.mxu0 0.0
    %2536 = vmatprep.subr.mxu0 0.0
    %2537 = vmatpush1.xpose.msra.mxu0 0.0
    %2538 = vmatprep.subr.mxu0 0.0
    %2539 = vmatpush1.xpose.msra.mxu0 0.0
    %2540 = vmatprep.subr.mxu0 0.0
    %2541 = vmatpush1.xpose.msra.mxu0 0.0
    %2542 = vmatprep.subr.mxu0 0.0
    %2543 = vmatpush1.xpose.msra.mxu0 0.0
    %2544 = vmatprep.subr.mxu0 0.0
    %2545 = vmatpush1.xpose.msra.mxu0 0.0
    %2546 = vmatprep.subr.mxu0 0.0
    %2547 = vmatpush1.xpose.msra.mxu0 0.0
    %2548 = vmatprep.subr.mxu0 0.0
    %2549 = vmatpush1.xpose.msra.mxu0 0.0
    %2550 = vmatprep.subr.mxu0 0.0
    %2551 = vmatpush1.xpose.msra.mxu0 0.0
    %2552 = vmatprep.subr.mxu0 0.0
    %2553 = vmatpush1.xpose.msra.mxu0 0.0
    %2554 = vmatprep.subr.mxu0 0.0
    %2555 = vmatpush1.xpose.msra.mxu0 0.0
    %2556 = vmatprep.subr.mxu0 0.0
    %2557 = vmatpush1.xpose.msra.mxu0 0.0
    %2558 = vmatprep.subr.mxu0 0.0
    %2559 = vmatpush1.xpose.msra.mxu0 0.0
    %2560 = vmatprep.subr.mxu0 0.0
    %2561 = vmatpush1.xpose.msra.mxu0 0.0
    %2562 = vmatprep.subr.mxu0 0.0
    %2563 = vmatpush1.xpose.msra.mxu0 0.0
    %2564 = vmatprep.subr.mxu0 0.0
    %2565 = vmatpush1.xpose.msra.mxu0 0.0
    %2566 = vmatprep.subr.mxu0 0.0
    %2567 = vmatpush1.xpose.msra.mxu0 0.0
    %2568 = vmatprep.subr.mxu0 0.0
    %2569 = vmatpush1.xpose.msra.mxu0 0.0
    %2570 = vmatprep.subr.mxu0 0.0
    %2571 = vmatpush1.xpose.msra.mxu0 0.0
    %2572 = vmatprep.subr.mxu0 0.0
    %2573 = vmatpush1.xpose.msra.mxu0 0.0
    %2574 = vmatprep.subr.mxu0 0.0
    %2575 = vmatpush1.xpose.msra.mxu0 0.0
    %2576 = vmatprep.mubr.f32.mxu0 0.0
    %2577 = vmatmul.mubr.f32.gmra.mrb[0].mxu0 %v2508
    %v2578 = vpop.f32.mrb[0].mxu0
    %v2579 = vadd.f32 0.0, %v2578
    %v2580 = vpop.f32.mrb[0].mxu0
    %2581 = vdwg.mxu0
    %2582 = vrot.lane.b32.xlu0 %v2072, 120
    %v2583 = vpop.permute.xlu0 %2582
    %2584 = vrot.lane.b32.xlu0 %v2164, 120
    %v2585 = vpop.permute.xlu0 %2584
    %v2586 = vsel %vm272, %v2583, 0
    %v2588 = vsel %vm272, %v2585, 0
    %2590 = vmatprep.subr.mxu0 0.0
    %2591 = vmatpush1.xpose.msra.mxu0 %v2588
    %2592 = vmatprep.subr.mxu0 0.0
    %2593 = vmatpush1.xpose.msra.mxu0 0.0
    %2594 = vmatprep.subr.mxu0 0.0
    %2595 = vmatpush1.xpose.msra.mxu0 0.0
    %2596 = vmatprep.subr.mxu0 0.0
    %2597 = vmatpush1.xpose.msra.mxu0 0.0
    %2598 = vmatprep.subr.mxu0 0.0
    %2599 = vmatpush1.xpose.msra.mxu0 0.0
    %2600 = vmatprep.subr.mxu0 0.0
    %2601 = vmatpush1.xpose.msra.mxu0 0.0
    %2602 = vmatprep.subr.mxu0 0.0
    %2603 = vmatpush1.xpose.msra.mxu0 0.0
    %2604 = vmatprep.subr.mxu0 0.0
    %2605 = vmatpush1.xpose.msra.mxu0 0.0
    %2606 = vmatprep.subr.mxu0 0.0
    %2607 = vmatpush1.xpose.msra.mxu0 0.0
    %2608 = vmatprep.subr.mxu0 0.0
    %2609 = vmatpush1.xpose.msra.mxu0 0.0
    %2610 = vmatprep.subr.mxu0 0.0
    %2611 = vmatpush1.xpose.msra.mxu0 0.0
    %2612 = vmatprep.subr.mxu0 0.0
    %2613 = vmatpush1.xpose.msra.mxu0 0.0
    %2614 = vmatprep.subr.mxu0 0.0
    %2615 = vmatpush1.xpose.msra.mxu0 0.0
    %2616 = vmatprep.subr.mxu0 0.0
    %2617 = vmatpush1.xpose.msra.mxu0 0.0
    %2618 = vmatprep.subr.mxu0 0.0
    %2619 = vmatpush1.xpose.msra.mxu0 0.0
    %2620 = vmatprep.subr.mxu0 0.0
    %2621 = vmatpush1.xpose.msra.mxu0 0.0
    %2622 = vmatprep.subr.mxu0 0.0
    %2623 = vmatpush1.xpose.msra.mxu0 0.0
    %2624 = vmatprep.subr.mxu0 0.0
    %2625 = vmatpush1.xpose.msra.mxu0 0.0
    %2626 = vmatprep.subr.mxu0 0.0
    %2627 = vmatpush1.xpose.msra.mxu0 0.0
    %2628 = vmatprep.subr.mxu0 0.0
    %2629 = vmatpush1.xpose.msra.mxu0 0.0
    %2630 = vmatprep.subr.mxu0 0.0
    %2631 = vmatpush1.xpose.msra.mxu0 0.0
    %2632 = vmatprep.subr.mxu0 0.0
    %2633 = vmatpush1.xpose.msra.mxu0 0.0
    %2634 = vmatprep.subr.mxu0 0.0
    %2635 = vmatpush1.xpose.msra.mxu0 0.0
    %2636 = vmatprep.subr.mxu0 0.0
    %2637 = vmatpush1.xpose.msra.mxu0 0.0
    %2638 = vmatprep.subr.mxu0 0.0
    %2639 = vmatpush1.xpose.msra.mxu0 0.0
    %2640 = vmatprep.subr.mxu0 0.0
    %2641 = vmatpush1.xpose.msra.mxu0 0.0
    %2642 = vmatprep.subr.mxu0 0.0
    %2643 = vmatpush1.xpose.msra.mxu0 0.0
    %2644 = vmatprep.subr.mxu0 0.0
    %2645 = vmatpush1.xpose.msra.mxu0 0.0
    %2646 = vmatprep.subr.mxu0 0.0
    %2647 = vmatpush1.xpose.msra.mxu0 0.0
    %2648 = vmatprep.subr.mxu0 0.0
    %2649 = vmatpush1.xpose.msra.mxu0 0.0
    %2650 = vmatprep.subr.mxu0 0.0
    %2651 = vmatpush1.xpose.msra.mxu0 0.0
    %2652 = vmatprep.subr.mxu0 0.0
    %2653 = vmatpush1.xpose.msra.mxu0 0.0
    %2654 = vmatprep.mubr.f32.mxu0 0.0
    %2655 = vmatmul.mubr.f32.gmra.mrb[0].mxu0 %v2586
    %v2656 = vpop.f32.mrb[0].mxu0
    %v2657 = vadd.f32 0.0, %v2656
    %v2658 = vpop.f32.mrb[0].mxu0
    %2659 = vdwg.mxu0
    %v2660 = vmul.f32 %v2579, 0.35355338
    %v2661 = vmul.f32 %v2657, 0.35355338
    %v2662 = vsel %vm2326, -1e+09, %v2660
    %v2663 = vsel %vm2327, -1e+09, %v2661
    %v2664 = vsel %vm272, %v2662, -inf
    %2665 = vmax.xlane.f32.xlu0 %v2664
    %v2666 = vpop.xlane.xlu0 %2665
    %v2667 = vsel %vm272, %v2663, -inf
    %2668 = vmax.xlane.f32.xlu0 %v2667
    %v2669 = vpop.xlane.xlu0 %2668
    %v2670 = vsub.f32 %v2662, %v2666
    %v2671 = vsub.f32 %v2663, %v2669
    %v2672 = vmul.f32 %v2670, 1.442695
    %v2673 = vpow.pop %v2672
    %v2674 = vmul.f32 %v2671, 1.442695
    %v2675 = vpow.pop %v2674
    %v2676 = vsel %vm272, %v2673, 0.0
    %2677 = vadd.xlane.f32.xlu0 %v2676
    %v2678 = vpop.xlane.xlu0 %2677
    %v2679 = vsel %vm272, %v2675, 0.0
    %2680 = vadd.xlane.f32.xlu0 %v2679
    %v2681 = vpop.xlane.xlu0 %2680
    %v2682 = vrcp.pop %v2678
    %v2683 = vmul.f32 %v2673, %v2682
    %v2684 = vrcp.pop %v2681
    %v2685 = vmul.f32 %v2675, %v2684
    %2686 = vrot.lane.b32.xlu0 %v2159, 88
    %v2687 = vpop.permute.xlu0 %2686
    %v2690 = vsel %vm272, %v2683, 0
    %2692 = vmatprep.subr.mxu0 0.0
    %2693 = vmatpush1.msra.mxu0 %v2687
    %2694 = vmatprep.subr.mxu0 0.0
    %2695 = vmatpush1.msra.mxu0 0.0
    %2696 = vmatprep.subr.mxu0 0.0
    %2697 = vmatpush1.msra.mxu0 0.0
    %2698 = vmatprep.subr.mxu0 0.0
    %2699 = vmatpush1.msra.mxu0 0.0
    %2700 = vmatprep.subr.mxu0 0.0
    %2701 = vmatpush1.msra.mxu0 0.0
    %2702 = vmatprep.subr.mxu0 0.0
    %2703 = vmatpush1.msra.mxu0 0.0
    %2704 = vmatprep.subr.mxu0 0.0
    %2705 = vmatpush1.msra.mxu0 0.0
    %2706 = vmatprep.subr.mxu0 0.0
    %2707 = vmatpush1.msra.mxu0 0.0
    %2708 = vmatprep.subr.mxu0 0.0
    %2709 = vmatpush1.msra.mxu0 0.0
    %2710 = vmatprep.subr.mxu0 0.0
    %2711 = vmatpush1.msra.mxu0 0.0
    %2712 = vmatprep.subr.mxu0 0.0
    %2713 = vmatpush1.msra.mxu0 0.0
    %2714 = vmatprep.subr.mxu0 0.0
    %2715 = vmatpush1.msra.mxu0 0.0
    %2716 = vmatprep.subr.mxu0 0.0
    %2717 = vmatpush1.msra.mxu0 0.0
    %2718 = vmatprep.subr.mxu0 0.0
    %2719 = vmatpush1.msra.mxu0 0.0
    %2720 = vmatprep.subr.mxu0 0.0
    %2721 = vmatpush1.msra.mxu0 0.0
    %2722 = vmatprep.subr.mxu0 0.0
    %2723 = vmatpush1.msra.mxu0 0.0
    %2724 = vmatprep.subr.mxu0 0.0
    %2725 = vmatpush1.msra.mxu0 0.0
    %2726 = vmatprep.subr.mxu0 0.0
    %2727 = vmatpush1.msra.mxu0 0.0
    %2728 = vmatprep.subr.mxu0 0.0
    %2729 = vmatpush1.msra.mxu0 0.0
    %2730 = vmatprep.subr.mxu0 0.0
    %2731 = vmatpush1.msra.mxu0 0.0
    %2732 = vmatprep.subr.mxu0 0.0
    %2733 = vmatpush1.msra.mxu0 0.0
    %2734 = vmatprep.subr.mxu0 0.0
    %2735 = vmatpush1.msra.mxu0 0.0
    %2736 = vmatprep.subr.mxu0 0.0
    %2737 = vmatpush1.msra.mxu0 0.0
    %2738 = vmatprep.subr.mxu0 0.0
    %2739 = vmatpush1.msra.mxu0 0.0
    %2740 = vmatprep.subr.mxu0 0.0
    %2741 = vmatpush1.msra.mxu0 0.0
    %2742 = vmatprep.subr.mxu0 0.0
    %2743 = vmatpush1.msra.mxu0 0.0
    %2744 = vmatprep.subr.mxu0 0.0
    %2745 = vmatpush1.msra.mxu0 0.0
    %2746 = vmatprep.subr.mxu0 0.0
    %2747 = vmatpush1.msra.mxu0 0.0
    %2748 = vmatprep.subr.mxu0 0.0
    %2749 = vmatpush1.msra.mxu0 0.0
    %2750 = vmatprep.subr.mxu0 0.0
    %2751 = vmatpush1.msra.mxu0 0.0
    %2752 = vmatprep.subr.mxu0 0.0
    %2753 = vmatpush1.msra.mxu0 0.0
    %2754 = vmatprep.subr.mxu0 0.0
    %2755 = vmatpush1.msra.mxu0 0.0
    %2756 = vmatprep.mubr.f32.mxu0 0.0
    %2757 = vmatmul.mubr.f32.gmra.mrb[0].mxu0 %v2690
    %v2758 = vpop.f32.mrb[0].mxu0
    %v2759 = vadd.f32 0.0, %v2758
    %v2760 = vpop.f32.mrb[0].mxu0
    %2761 = vdwg.mxu0
    %2762 = vrot.lane.b32.xlu0 %v2164, 88
    %v2763 = vpop.permute.xlu0 %2762
    %v2766 = vsel %vm272, %v2685, 0
    %2768 = vmatprep.subr.mxu0 0.0
    %2769 = vmatpush1.msra.mxu0 %v2763
    %2770 = vmatprep.subr.mxu0 0.0
    %2771 = vmatpush1.msra.mxu0 0.0
    %2772 = vmatprep.subr.mxu0 0.0
    %2773 = vmatpush1.msra.mxu0 0.0
    %2774 = vmatprep.subr.mxu0 0.0
    %2775 = vmatpush1.msra.mxu0 0.0
    %2776 = vmatprep.subr.mxu0 0.0
    %2777 = vmatpush1.msra.mxu0 0.0
    %2778 = vmatprep.subr.mxu0 0.0
    %2779 = vmatpush1.msra.mxu0 0.0
    %2780 = vmatprep.subr.mxu0 0.0
    %2781 = vmatpush1.msra.mxu0 0.0
    %2782 = vmatprep.subr.mxu0 0.0
    %2783 = vmatpush1.msra.mxu0 0.0
    %2784 = vmatprep.subr.mxu0 0.0
    %2785 = vmatpush1.msra.mxu0 0.0
    %2786 = vmatprep.subr.mxu0 0.0
    %2787 = vmatpush1.msra.mxu0 0.0
    %2788 = vmatprep.subr.mxu0 0.0
    %2789 = vmatpush1.msra.mxu0 0.0
    %2790 = vmatprep.subr.mxu0 0.0
    %2791 = vmatpush1.msra.mxu0 0.0
    %2792 = vmatprep.subr.mxu0 0.0
    %2793 = vmatpush1.msra.mxu0 0.0
    %2794 = vmatprep.subr.mxu0 0.0
    %2795 = vmatpush1.msra.mxu0 0.0
    %2796 = vmatprep.subr.mxu0 0.0
    %2797 = vmatpush1.msra.mxu0 0.0
    %2798 = vmatprep.subr.mxu0 0.0
    %2799 = vmatpush1.msra.mxu0 0.0
    %2800 = vmatprep.subr.mxu0 0.0
    %2801 = vmatpush1.msra.mxu0 0.0
    %2802 = vmatprep.subr.mxu0 0.0
    %2803 = vmatpush1.msra.mxu0 0.0
    %2804 = vmatprep.subr.mxu0 0.0
    %2805 = vmatpush1.msra.mxu0 0.0
    %2806 = vmatprep.subr.mxu0 0.0
    %2807 = vmatpush1.msra.mxu0 0.0
    %2808 = vmatprep.subr.mxu0 0.0
    %2809 = vmatpush1.msra.mxu0 0.0
    %2810 = vmatprep.subr.mxu0 0.0
    %2811 = vmatpush1.msra.mxu0 0.0
    %2812 = vmatprep.subr.mxu0 0.0
    %2813 = vmatpush1.msra.mxu0 0.0
    %2814 = vmatprep.subr.mxu0 0.0
    %2815 = vmatpush1.msra.mxu0 0.0
    %2816 = vmatprep.subr.mxu0 0.0
    %2817 = vmatpush1.msra.mxu0 0.0
    %2818 = vmatprep.subr.mxu0 0.0
    %2819 = vmatpush1.msra.mxu0 0.0
    %2820 = vmatprep.subr.mxu0 0.0
    %2821 = vmatpush1.msra.mxu0 0.0
    %2822 = vmatprep.subr.mxu0 0.0
    %2823 = vmatpush1.msra.mxu0 0.0
    %2824 = vmatprep.subr.mxu0 0.0
    %2825 = vmatpush1.msra.mxu0 0.0
    %2826 = vmatprep.subr.mxu0 0.0
    %2827 = vmatpush1.msra.mxu0 0.0
    %2828 = vmatprep.subr.mxu0 0.0
    %2829 = vmatpush1.msra.mxu0 0.0
    %2830 = vmatprep.subr.mxu0 0.0
    %2831 = vmatpush1.msra.mxu0 0.0
    %2832 = vmatprep.mubr.f32.mxu0 0.0
    %2833 = vmatmul.mubr.f32.gmra.mrb[0].mxu0 %v2766
    %v2834 = vpop.f32.mrb[0].mxu0
    %v2835 = vadd.f32 0.0, %v2834
    %v2836 = vpop.f32.mrb[0].mxu0
    %2837 = vdwg.mxu0
    %v2839 = vsel %vm272, %v2759, 0
    %v2842 = vsel %vm272, %v2835, 0
    %2844 = vmatprep.subr.mxu0 0.0
    %2845 = vmatpush1.msra.mxu0 %v2168
    %2846 = vmatprep.subr.mxu0 0.0
    %2847 = vmatpush1.msra.mxu0 0.0
    %2848 = vmatprep.subr.mxu0 0.0
    %2849 = vmatpush1.msra.mxu0 0.0
    %2850 = vmatprep.subr.mxu0 0.0
    %2851 = vmatpush1.msra.mxu0 0.0
    %2852 = vmatprep.subr.mxu0 0.0
    %2853 = vmatpush1.msra.mxu0 0.0
    %2854 = vmatprep.subr.mxu0 0.0
    %2855 = vmatpush1.msra.mxu0 0.0
    %2856 = vmatprep.subr.mxu0 0.0
    %2857 = vmatpush1.msra.mxu0 0.0
    %2858 = vmatprep.subr.mxu0 0.0
    %2859 = vmatpush1.msra.mxu0 0.0
    %2860 = vmatprep.subr.mxu0 0.0
    %2861 = vmatpush1.msra.mxu0 0.0
    %2862 = vmatprep.subr.mxu0 0.0
    %2863 = vmatpush1.msra.mxu0 0.0
    %2864 = vmatprep.subr.mxu0 0.0
    %2865 = vmatpush1.msra.mxu0 0.0
    %2866 = vmatprep.subr.mxu0 0.0
    %2867 = vmatpush1.msra.mxu0 0.0
    %2868 = vmatprep.subr.mxu0 0.0
    %2869 = vmatpush1.msra.mxu0 0.0
    %2870 = vmatprep.subr.mxu0 0.0
    %2871 = vmatpush1.msra.mxu0 0.0
    %2872 = vmatprep.subr.mxu0 0.0
    %2873 = vmatpush1.msra.mxu0 0.0
    %2874 = vmatprep.subr.mxu0 0.0
    %2875 = vmatpush1.msra.mxu0 0.0
    %2876 = vmatprep.subr.mxu0 0.0
    %2877 = vmatpush1.msra.mxu0 0.0
    %2878 = vmatprep.subr.mxu0 0.0
    %2879 = vmatpush1.msra.mxu0 0.0
    %2880 = vmatprep.subr.mxu0 0.0
    %2881 = vmatpush1.msra.mxu0 0.0
    %2882 = vmatprep.subr.mxu0 0.0
    %2883 = vmatpush1.msra.mxu0 0.0
    %2884 = vmatprep.subr.mxu0 0.0
    %2885 = vmatpush1.msra.mxu0 0.0
    %2886 = vmatprep.subr.mxu0 0.0
    %2887 = vmatpush1.msra.mxu0 0.0
    %2888 = vmatprep.subr.mxu0 0.0
    %2889 = vmatpush1.msra.mxu0 0.0
    %2890 = vmatprep.subr.mxu0 0.0
    %2891 = vmatpush1.msra.mxu0 0.0
    %2892 = vmatprep.subr.mxu0 0.0
    %2893 = vmatpush1.msra.mxu0 0.0
    %2894 = vmatprep.subr.mxu0 0.0
    %2895 = vmatpush1.msra.mxu0 0.0
    %2896 = vmatprep.subr.mxu0 0.0
    %2897 = vmatpush1.msra.mxu0 0.0
    %2898 = vmatprep.subr.mxu0 0.0
    %2899 = vmatpush1.msra.mxu0 0.0
    %2900 = vmatprep.subr.mxu0 0.0
    %2901 = vmatpush1.msra.mxu0 0.0
    %2902 = vmatprep.subr.mxu0 0.0
    %2903 = vmatpush1.msra.mxu0 0.0
    %2904 = vmatprep.subr.mxu0 0.0
    %2905 = vmatpush1.msra.mxu0 0.0
    %2906 = vmatprep.subr.mxu0 0.0
    %2907 = vmatpush1.msra.mxu0 0.0
    %2908 = vmatprep.mubr.f32.mxu0 0.0
    %2909 = vmatmul.mubr.f32.gmra.mrb[0].mxu0 %v2839
    %v2910 = vpop.f32.mrb[0].mxu0
    %v2911 = vadd.f32 0.0, %v2910
    %v2912 = vpop.f32.mrb[0].mxu0
    %2913 = vmatprep.mubr.f32.mxu0 0.0
    %2914 = vmatmul.mubr.f32.gmra.mrb[0].mxu0 %v2842
    %v2915 = vpop.f32.mrb[0].mxu0
    %v2916 = vadd.f32 0.0, %v2915
    %v2917 = vpop.f32.mrb[0].mxu0
    %2918 = vdwg.mxu0
    %v2920 = vsel %vm272, %v2425, 0
    %v2923 = vsel %vm272, %v2501, 0
    %2925 = vmatprep.subr.mxu0 0.0
    %2926 = vmatpush1.msra.mxu0 %v2167
    %2927 = vmatprep.subr.mxu0 0.0
    %2928 = vmatpush1.msra.mxu0 0.0
    %2929 = vmatprep.subr.mxu0 0.0
    %2930 = vmatpush1.msra.mxu0 0.0
    %2931 = vmatprep.subr.mxu0 0.0
    %2932 = vmatpush1.msra.mxu0 0.0
    %2933 = vmatprep.subr.mxu0 0.0
    %2934 = vmatpush1.msra.mxu0 0.0
    %2935 = vmatprep.subr.mxu0 0.0
    %2936 = vmatpush1.msra.mxu0 0.0
    %2937 = vmatprep.subr.mxu0 0.0
    %2938 = vmatpush1.msra.mxu0 0.0
    %2939 = vmatprep.subr.mxu0 0.0
    %2940 = vmatpush1.msra.mxu0 0.0
    %2941 = vmatprep.subr.mxu0 0.0
    %2942 = vmatpush1.msra.mxu0 0.0
    %2943 = vmatprep.subr.mxu0 0.0
    %2944 = vmatpush1.msra.mxu0 0.0
    %2945 = vmatprep.subr.mxu0 0.0
    %2946 = vmatpush1.msra.mxu0 0.0
    %2947 = vmatprep.subr.mxu0 0.0
    %2948 = vmatpush1.msra.mxu0 0.0
    %2949 = vmatprep.subr.mxu0 0.0
    %2950 = vmatpush1.msra.mxu0 0.0
    %2951 = vmatprep.subr.mxu0 0.0
    %2952 = vmatpush1.msra.mxu0 0.0
    %2953 = vmatprep.subr.mxu0 0.0
    %2954 = vmatpush1.msra.mxu0 0.0
    %2955 = vmatprep.subr.mxu0 0.0
    %2956 = vmatpush1.msra.mxu0 0.0
    %2957 = vmatprep.subr.mxu0 0.0
    %2958 = vmatpush1.msra.mxu0 0.0
    %2959 = vmatprep.subr.mxu0 0.0
    %2960 = vmatpush1.msra.mxu0 0.0
    %2961 = vmatprep.subr.mxu0 0.0
    %2962 = vmatpush1.msra.mxu0 0.0
    %2963 = vmatprep.subr.mxu0 0.0
    %2964 = vmatpush1.msra.mxu0 0.0
    %2965 = vmatprep.subr.mxu0 0.0
    %2966 = vmatpush1.msra.mxu0 0.0
    %2967 = vmatprep.subr.mxu0 0.0
    %2968 = vmatpush1.msra.mxu0 0.0
    %2969 = vmatprep.subr.mxu0 0.0
    %2970 = vmatpush1.msra.mxu0 0.0
    %2971 = vmatprep.subr.mxu0 0.0
    %2972 = vmatpush1.msra.mxu0 0.0
    %2973 = vmatprep.subr.mxu0 0.0
    %2974 = vmatpush1.msra.mxu0 0.0
    %2975 = vmatprep.subr.mxu0 0.0
    %2976 = vmatpush1.msra.mxu0 0.0
    %2977 = vmatprep.subr.mxu0 0.0
    %2978 = vmatpush1.msra.mxu0 0.0
    %2979 = vmatprep.subr.mxu0 0.0
    %2980 = vmatpush1.msra.mxu0 0.0
    %2981 = vmatprep.subr.mxu0 0.0
    %2982 = vmatpush1.msra.mxu0 0.0
    %2983 = vmatprep.subr.mxu0 0.0
    %2984 = vmatpush1.msra.mxu0 0.0
    %2985 = vmatprep.subr.mxu0 0.0
    %2986 = vmatpush1.msra.mxu0 0.0
    %2987 = vmatprep.subr.mxu0 0.0
    %2988 = vmatpush1.msra.mxu0 0.0
    %2989 = vmatprep.mubr.f32.mxu0 0.0
    %2990 = vmatmul.mubr.f32.gmra.mrb[0].mxu0 %v2920
    %v2991 = vpop.f32.mrb[0].mxu0
    %v2992 = vadd.f32 %v2911, %v2991
    %v2993 = vpop.f32.mrb[0].mxu0
    %2994 = vmatprep.mubr.f32.mxu0 0.0
    %2995 = vmatmul.mubr.f32.gmra.mrb[0].mxu0 %v2923
    %v2996 = vpop.f32.mrb[0].mxu0
    %v2997 = vadd.f32 %v2916, %v2996
    %v2998 = vpop.f32.mrb[0].mxu0
    %2999 = vdwg.mxu0
    %3000 = vrot.lane.b32.xlu0 %v2067, 112
    %v3001 = vpop.permute.xlu0 %3000
    %3002 = vrot.lane.b32.xlu0 %v2159, 112
    %v3003 = vpop.permute.xlu0 %3002
    %v3004 = vsel %vm272, %v3001, 0
    %v3006 = vsel %vm272, %v3003, 0
    %3008 = vmatprep.subr.mxu0 0.0
    %3009 = vmatpush1.xpose.msra.mxu0 %v3006
    %3010 = vmatprep.subr.mxu0 0.0
    %3011 = vmatpush1.xpose.msra.mxu0 0.0
    %3012 = vmatprep.subr.mxu0 0.0
    %3013 = vmatpush1.xpose.msra.mxu0 0.0
    %3014 = vmatprep.subr.mxu0 0.0
    %3015 = vmatpush1.xpose.msra.mxu0 0.0
    %3016 = vmatprep.subr.mxu0 0.0
    %3017 = vmatpush1.xpose.msra.mxu0 0.0
    %3018 = vmatprep.subr.mxu0 0.0
    %3019 = vmatpush1.xpose.msra.mxu0 0.0
    %3020 = vmatprep.subr.mxu0 0.0
    %3021 = vmatpush1.xpose.msra.mxu0 0.0
    %3022 = vmatprep.subr.mxu0 0.0
    %3023 = vmatpush1.xpose.msra.mxu0 0.0
    %3024 = vmatprep.subr.mxu0 0.0
    %3025 = vmatpush1.xpose.msra.mxu0 0.0
    %3026 = vmatprep.subr.mxu0 0.0
    %3027 = vmatpush1.xpose.msra.mxu0 0.0
    %3028 = vmatprep.subr.mxu0 0.0
    %3029 = vmatpush1.xpose.msra.mxu0 0.0
    %3030 = vmatprep.subr.mxu0 0.0
    %3031 = vmatpush1.xpose.msra.mxu0 0.0
    %3032 = vmatprep.subr.mxu0 0.0
    %3033 = vmatpush1.xpose.msra.mxu0 0.0
    %3034 = vmatprep.subr.mxu0 0.0
    %3035 = vmatpush1.xpose.msra.mxu0 0.0
    %3036 = vmatprep.subr.mxu0 0.0
    %3037 = vmatpush1.xpose.msra.mxu0 0.0
    %3038 = vmatprep.subr.mxu0 0.0
    %3039 = vmatpush1.xpose.msra.mxu0 0.0
    %3040 = vmatprep.subr.mxu0 0.0
    %3041 = vmatpush1.xpose.msra.mxu0 0.0
    %3042 = vmatprep.subr.mxu0 0.0
    %3043 = vmatpush1.xpose.msra.mxu0 0.0
    %3044 = vmatprep.subr.mxu0 0.0
    %3045 = vmatpush1.xpose.msra.mxu0 0.0
    %3046 = vmatprep.subr.mxu0 0.0
    %3047 = vmatpush1.xpose.msra.mxu0 0.0
    %3048 = vmatprep.subr.mxu0 0.0
    %3049 = vmatpush1.xpose.msra.mxu0 0.0
    %3050 = vmatprep.subr.mxu0 0.0
    %3051 = vmatpush1.xpose.msra.mxu0 0.0
    %3052 = vmatprep.subr.mxu0 0.0
    %3053 = vmatpush1.xpose.msra.mxu0 0.0
    %3054 = vmatprep.subr.mxu0 0.0
    %3055 = vmatpush1.xpose.msra.mxu0 0.0
    %3056 = vmatprep.subr.mxu0 0.0
    %3057 = vmatpush1.xpose.msra.mxu0 0.0
    %3058 = vmatprep.subr.mxu0 0.0
    %3059 = vmatpush1.xpose.msra.mxu0 0.0
    %3060 = vmatprep.subr.mxu0 0.0
    %3061 = vmatpush1.xpose.msra.mxu0 0.0
    %3062 = vmatprep.subr.mxu0 0.0
    %3063 = vmatpush1.xpose.msra.mxu0 0.0
    %3064 = vmatprep.subr.mxu0 0.0
    %3065 = vmatpush1.xpose.msra.mxu0 0.0
    %3066 = vmatprep.subr.mxu0 0.0
    %3067 = vmatpush1.xpose.msra.mxu0 0.0
    %3068 = vmatprep.subr.mxu0 0.0
    %3069 = vmatpush1.xpose.msra.mxu0 0.0
    %3070 = vmatprep.subr.mxu0 0.0
    %3071 = vmatpush1.xpose.msra.mxu0 0.0
    %3072 = vmatprep.mubr.f32.mxu0 0.0
    %3073 = vmatmul.mubr.f32.gmra.mrb[0].mxu0 %v3004
    %v3074 = vpop.f32.mrb[0].mxu0
    %v3075 = vadd.f32 0.0, %v3074
    %v3076 = vpop.f32.mrb[0].mxu0
    %3077 = vdwg.mxu0
    %3078 = vrot.lane.b32.xlu0 %v2072, 112
    %v3079 = vpop.permute.xlu0 %3078
    %3080 = vrot.lane.b32.xlu0 %v2164, 112
    %v3081 = vpop.permute.xlu0 %3080
    %v3082 = vsel %vm272, %v3079, 0
    %v3084 = vsel %vm272, %v3081, 0
    %3086 = vmatprep.subr.mxu0 0.0
    %3087 = vmatpush1.xpose.msra.mxu0 %v3084
    %3088 = vmatprep.subr.mxu0 0.0
    %3089 = vmatpush1.xpose.msra.mxu0 0.0
    %3090 = vmatprep.subr.mxu0 0.0
    %3091 = vmatpush1.xpose.msra.mxu0 0.0
    %3092 = vmatprep.subr.mxu0 0.0
    %3093 = vmatpush1.xpose.msra.mxu0 0.0
    %3094 = vmatprep.subr.mxu0 0.0
    %3095 = vmatpush1.xpose.msra.mxu0 0.0
    %3096 = vmatprep.subr.mxu0 0.0
    %3097 = vmatpush1.xpose.msra.mxu0 0.0
    %3098 = vmatprep.subr.mxu0 0.0
    %3099 = vmatpush1.xpose.msra.mxu0 0.0
    %3100 = vmatprep.subr.mxu0 0.0
    %3101 = vmatpush1.xpose.msra.mxu0 0.0
    %3102 = vmatprep.subr.mxu0 0.0
    %3103 = vmatpush1.xpose.msra.mxu0 0.0
    %3104 = vmatprep.subr.mxu0 0.0
    %3105 = vmatpush1.xpose.msra.mxu0 0.0
    %3106 = vmatprep.subr.mxu0 0.0
    %3107 = vmatpush1.xpose.msra.mxu0 0.0
    %3108 = vmatprep.subr.mxu0 0.0
    %3109 = vmatpush1.xpose.msra.mxu0 0.0
    %3110 = vmatprep.subr.mxu0 0.0
    %3111 = vmatpush1.xpose.msra.mxu0 0.0
    %3112 = vmatprep.subr.mxu0 0.0
    %3113 = vmatpush1.xpose.msra.mxu0 0.0
    %3114 = vmatprep.subr.mxu0 0.0
    %3115 = vmatpush1.xpose.msra.mxu0 0.0
    %3116 = vmatprep.subr.mxu0 0.0
    %3117 = vmatpush1.xpose.msra.mxu0 0.0
    %3118 = vmatprep.subr.mxu0 0.0
    %3119 = vmatpush1.xpose.msra.mxu0 0.0
    %3120 = vmatprep.subr.mxu0 0.0
    %3121 = vmatpush1.xpose.msra.mxu0 0.0
    %3122 = vmatprep.subr.mxu0 0.0
    %3123 = vmatpush1.xpose.msra.mxu0 0.0
    %3124 = vmatprep.subr.mxu0 0.0
    %3125 = vmatpush1.xpose.msra.mxu0 0.0
    %3126 = vmatprep.subr.mxu0 0.0
    %3127 = vmatpush1.xpose.msra.mxu0 0.0
    %3128 = vmatprep.subr.mxu0 0.0
    %3129 = vmatpush1.xpose.msra.mxu0 0.0
    %3130 = vmatprep.subr.mxu0 0.0
    %3131 = vmatpush1.xpose.msra.mxu0 0.0
    %3132 = vmatprep.subr.mxu0 0.0
    %3133 = vmatpush1.xpose.msra.mxu0 0.0
    %3134 = vmatprep.subr.mxu0 0.0
    %3135 = vmatpush1.xpose.msra.mxu0 0.0
    %3136 = vmatprep.subr.mxu0 0.0
    %3137 = vmatpush1.xpose.msra.mxu0 0.0
    %3138 = vmatprep.subr.mxu0 0.0
    %3139 = vmatpush1.xpose.msra.mxu0 0.0
    %3140 = vmatprep.subr.mxu0 0.0
    %3141 = vmatpush1.xpose.msra.mxu0 0.0
    %3142 = vmatprep.subr.mxu0 0.0
    %3143 = vmatpush1.xpose.msra.mxu0 0.0
    %3144 = vmatprep.subr.mxu0 0.0
    %3145 = vmatpush1.xpose.msra.mxu0 0.0
    %3146 = vmatprep.subr.mxu0 0.0
    %3147 = vmatpush1.xpose.msra.mxu0 0.0
    %3148 = vmatprep.subr.mxu0 0.0
    %3149 = vmatpush1.xpose.msra.mxu0 0.0
    %3150 = vmatprep.mubr.f32.mxu0 0.0
    %3151 = vmatmul.mubr.f32.gmra.mrb[0].mxu0 %v3082
    %v3152 = vpop.f32.mrb[0].mxu0
    %v3153 = vadd.f32 0.0, %v3152
    %v3154 = vpop.f32.mrb[0].mxu0
    %3155 = vdwg.mxu0
    %v3156 = vmul.f32 %v3075, 0.35355338
    %v3157 = vmul.f32 %v3153, 0.35355338
    %v3158 = vsel %vm2326, -1e+09, %v3156
    %v3159 = vsel %vm2327, -1e+09, %v3157
    %v3160 = vsel %vm272, %v3158, -inf
    %3161 = vmax.xlane.f32.xlu0 %v3160
    %v3162 = vpop.xlane.xlu0 %3161
    %v3163 = vsel %vm272, %v3159, -inf
    %3164 = vmax.xlane.f32.xlu0 %v3163
    %v3165 = vpop.xlane.xlu0 %3164
    %v3166 = vsub.f32 %v3158, %v3162
    %v3167 = vsub.f32 %v3159, %v3165
    %v3168 = vmul.f32 %v3166, 1.442695
    %v3169 = vpow.pop %v3168
    %v3170 = vmul.f32 %v3167, 1.442695
    %v3171 = vpow.pop %v3170
    %v3172 = vsel %vm272, %v3169, 0.0
    %3173 = vadd.xlane.f32.xlu0 %v3172
    %v3174 = vpop.xlane.xlu0 %3173
    %v3175 = vsel %vm272, %v3171, 0.0
    %3176 = vadd.xlane.f32.xlu0 %v3175
    %v3177 = vpop.xlane.xlu0 %3176
    %v3178 = vrcp.pop %v3174
    %v3179 = vmul.f32 %v3169, %v3178
    %v3180 = vrcp.pop %v3177
    %v3181 = vmul.f32 %v3171, %v3180
    %3182 = vrot.lane.b32.xlu0 %v2159, 80
    %v3183 = vpop.permute.xlu0 %3182
    %v3186 = vsel %vm272, %v3179, 0
    %3188 = vmatprep.subr.mxu0 0.0
    %3189 = vmatpush1.msra.mxu0 %v3183
    %3190 = vmatprep.subr.mxu0 0.0
    %3191 = vmatpush1.msra.mxu0 0.0
    %3192 = vmatprep.subr.mxu0 0.0
    %3193 = vmatpush1.msra.mxu0 0.0
    %3194 = vmatprep.subr.mxu0 0.0
    %3195 = vmatpush1.msra.mxu0 0.0
    %3196 = vmatprep.subr.mxu0 0.0
    %3197 = vmatpush1.msra.mxu0 0.0
    %3198 = vmatprep.subr.mxu0 0.0
    %3199 = vmatpush1.msra.mxu0 0.0
    %3200 = vmatprep.subr.mxu0 0.0
    %3201 = vmatpush1.msra.mxu0 0.0
    %3202 = vmatprep.subr.mxu0 0.0
    %3203 = vmatpush1.msra.mxu0 0.0
    %3204 = vmatprep.subr.mxu0 0.0
    %3205 = vmatpush1.msra.mxu0 0.0
    %3206 = vmatprep.subr.mxu0 0.0
    %3207 = vmatpush1.msra.mxu0 0.0
    %3208 = vmatprep.subr.mxu0 0.0
    %3209 = vmatpush1.msra.mxu0 0.0
    %3210 = vmatprep.subr.mxu0 0.0
    %3211 = vmatpush1.msra.mxu0 0.0
    %3212 = vmatprep.subr.mxu0 0.0
    %3213 = vmatpush1.msra.mxu0 0.0
    %3214 = vmatprep.subr.mxu0 0.0
    %3215 = vmatpush1.msra.mxu0 0.0
    %3216 = vmatprep.subr.mxu0 0.0
    %3217 = vmatpush1.msra.mxu0 0.0
    %3218 = vmatprep.subr.mxu0 0.0
    %3219 = vmatpush1.msra.mxu0 0.0
    %3220 = vmatprep.subr.mxu0 0.0
    %3221 = vmatpush1.msra.mxu0 0.0
    %3222 = vmatprep.subr.mxu0 0.0
    %3223 = vmatpush1.msra.mxu0 0.0
    %3224 = vmatprep.subr.mxu0 0.0
    %3225 = vmatpush1.msra.mxu0 0.0
    %3226 = vmatprep.subr.mxu0 0.0
    %3227 = vmatpush1.msra.mxu0 0.0
    %3228 = vmatprep.subr.mxu0 0.0
    %3229 = vmatpush1.msra.mxu0 0.0
    %3230 = vmatprep.subr.mxu0 0.0
    %3231 = vmatpush1.msra.mxu0 0.0
    %3232 = vmatprep.subr.mxu0 0.0
    %3233 = vmatpush1.msra.mxu0 0.0
    %3234 = vmatprep.subr.mxu0 0.0
    %3235 = vmatpush1.msra.mxu0 0.0
    %3236 = vmatprep.subr.mxu0 0.0
    %3237 = vmatpush1.msra.mxu0 0.0
    %3238 = vmatprep.subr.mxu0 0.0
    %3239 = vmatpush1.msra.mxu0 0.0
    %3240 = vmatprep.subr.mxu0 0.0
    %3241 = vmatpush1.msra.mxu0 0.0
    %3242 = vmatprep.subr.mxu0 0.0
    %3243 = vmatpush1.msra.mxu0 0.0
    %3244 = vmatprep.subr.mxu0 0.0
    %3245 = vmatpush1.msra.mxu0 0.0
    %3246 = vmatprep.subr.mxu0 0.0
    %3247 = vmatpush1.msra.mxu0 0.0
    %3248 = vmatprep.subr.mxu0 0.0
    %3249 = vmatpush1.msra.mxu0 0.0
    %3250 = vmatprep.subr.mxu0 0.0
    %3251 = vmatpush1.msra.mxu0 0.0
    %3252 = vmatprep.mubr.f32.mxu0 0.0
    %3253 = vmatmul.mubr.f32.gmra.mrb[0].mxu0 %v3186
    %v3254 = vpop.f32.mrb[0].mxu0
    %v3255 = vadd.f32 0.0, %v3254
    %v3256 = vpop.f32.mrb[0].mxu0
    %3257 = vdwg.mxu0
    %3258 = vrot.lane.b32.xlu0 %v2164, 80
    %v3259 = vpop.permute.xlu0 %3258
    %v3262 = vsel %vm272, %v3181, 0
    %3264 = vmatprep.subr.mxu0 0.0
    %3265 = vmatpush1.msra.mxu0 %v3259
    %3266 = vmatprep.subr.mxu0 0.0
    %3267 = vmatpush1.msra.mxu0 0.0
    %3268 = vmatprep.subr.mxu0 0.0
    %3269 = vmatpush1.msra.mxu0 0.0
    %3270 = vmatprep.subr.mxu0 0.0
    %3271 = vmatpush1.msra.mxu0 0.0
    %3272 = vmatprep.subr.mxu0 0.0
    %3273 = vmatpush1.msra.mxu0 0.0
    %3274 = vmatprep.subr.mxu0 0.0
    %3275 = vmatpush1.msra.mxu0 0.0
    %3276 = vmatprep.subr.mxu0 0.0
    %3277 = vmatpush1.msra.mxu0 0.0
    %3278 = vmatprep.subr.mxu0 0.0
    %3279 = vmatpush1.msra.mxu0 0.0
    %3280 = vmatprep.subr.mxu0 0.0
    %3281 = vmatpush1.msra.mxu0 0.0
    %3282 = vmatprep.subr.mxu0 0.0
    %3283 = vmatpush1.msra.mxu0 0.0
    %3284 = vmatprep.subr.mxu0 0.0
    %3285 = vmatpush1.msra.mxu0 0.0
    %3286 = vmatprep.subr.mxu0 0.0
    %3287 = vmatpush1.msra.mxu0 0.0
    %3288 = vmatprep.subr.mxu0 0.0
    %3289 = vmatpush1.msra.mxu0 0.0
    %3290 = vmatprep.subr.mxu0 0.0
    %3291 = vmatpush1.msra.mxu0 0.0
    %3292 = vmatprep.subr.mxu0 0.0
    %3293 = vmatpush1.msra.mxu0 0.0
    %3294 = vmatprep.subr.mxu0 0.0
    %3295 = vmatpush1.msra.mxu0 0.0
    %3296 = vmatprep.subr.mxu0 0.0
    %3297 = vmatpush1.msra.mxu0 0.0
    %3298 = vmatprep.subr.mxu0 0.0
    %3299 = vmatpush1.msra.mxu0 0.0
    %3300 = vmatprep.subr.mxu0 0.0
    %3301 = vmatpush1.msra.mxu0 0.0
    %3302 = vmatprep.subr.mxu0 0.0
    %3303 = vmatpush1.msra.mxu0 0.0
    %3304 = vmatprep.subr.mxu0 0.0
    %3305 = vmatpush1.msra.mxu0 0.0
    %3306 = vmatprep.subr.mxu0 0.0
    %3307 = vmatpush1.msra.mxu0 0.0
    %3308 = vmatprep.subr.mxu0 0.0
    %3309 = vmatpush1.msra.mxu0 0.0
    %3310 = vmatprep.subr.mxu0 0.0
    %3311 = vmatpush1.msra.mxu0 0.0
    %3312 = vmatprep.subr.mxu0 0.0
    %3313 = vmatpush1.msra.mxu0 0.0
    %3314 = vmatprep.subr.mxu0 0.0
    %3315 = vmatpush1.msra.mxu0 0.0
    %3316 = vmatprep.subr.mxu0 0.0
    %3317 = vmatpush1.msra.mxu0 0.0
    %3318 = vmatprep.subr.mxu0 0.0
    %3319 = vmatpush1.msra.mxu0 0.0
    %3320 = vmatprep.subr.mxu0 0.0
    %3321 = vmatpush1.msra.mxu0 0.0
    %3322 = vmatprep.subr.mxu0 0.0
    %3323 = vmatpush1.msra.mxu0 0.0
    %3324 = vmatprep.subr.mxu0 0.0
    %3325 = vmatpush1.msra.mxu0 0.0
    %3326 = vmatprep.subr.mxu0 0.0
    %3327 = vmatpush1.msra.mxu0 0.0
    %3328 = vmatprep.mubr.f32.mxu0 0.0
    %3329 = vmatmul.mubr.f32.gmra.mrb[0].mxu0 %v3262
    %v3330 = vpop.f32.mrb[0].mxu0
    %v3331 = vadd.f32 0.0, %v3330
    %v3332 = vpop.f32.mrb[0].mxu0
    %3333 = vdwg.mxu0
    %v3335 = vsel %vm272, %v3255, 0
    %v3338 = vsel %vm272, %v3331, 0
    %3340 = vmatprep.subr.mxu0 0.0
    %3341 = vmatpush1.msra.mxu0 %v2169
    %3342 = vmatprep.subr.mxu0 0.0
    %3343 = vmatpush1.msra.mxu0 0.0
    %3344 = vmatprep.subr.mxu0 0.0
    %3345 = vmatpush1.msra.mxu0 0.0
    %3346 = vmatprep.subr.mxu0 0.0
    %3347 = vmatpush1.msra.mxu0 0.0
    %3348 = vmatprep.subr.mxu0 0.0
    %3349 = vmatpush1.msra.mxu0 0.0
    %3350 = vmatprep.subr.mxu0 0.0
    %3351 = vmatpush1.msra.mxu0 0.0
    %3352 = vmatprep.subr.mxu0 0.0
    %3353 = vmatpush1.msra.mxu0 0.0
    %3354 = vmatprep.subr.mxu0 0.0
    %3355 = vmatpush1.msra.mxu0 0.0
    %3356 = vmatprep.subr.mxu0 0.0
    %3357 = vmatpush1.msra.mxu0 0.0
    %3358 = vmatprep.subr.mxu0 0.0
    %3359 = vmatpush1.msra.mxu0 0.0
    %3360 = vmatprep.subr.mxu0 0.0
    %3361 = vmatpush1.msra.mxu0 0.0
    %3362 = vmatprep.subr.mxu0 0.0
    %3363 = vmatpush1.msra.mxu0 0.0
    %3364 = vmatprep.subr.mxu0 0.0
    %3365 = vmatpush1.msra.mxu0 0.0
    %3366 = vmatprep.subr.mxu0 0.0
    %3367 = vmatpush1.msra.mxu0 0.0
    %3368 = vmatprep.subr.mxu0 0.0
    %3369 = vmatpush1.msra.mxu0 0.0
    %3370 = vmatprep.subr.mxu0 0.0
    %3371 = vmatpush1.msra.mxu0 0.0
    %3372 = vmatprep.subr.mxu0 0.0
    %3373 = vmatpush1.msra.mxu0 0.0
    %3374 = vmatprep.subr.mxu0 0.0
    %3375 = vmatpush1.msra.mxu0 0.0
    %3376 = vmatprep.subr.mxu0 0.0
    %3377 = vmatpush1.msra.mxu0 0.0
    %3378 = vmatprep.subr.mxu0 0.0
    %3379 = vmatpush1.msra.mxu0 0.0
    %3380 = vmatprep.subr.mxu0 0.0
    %3381 = vmatpush1.msra.mxu0 0.0
    %3382 = vmatprep.subr.mxu0 0.0
    %3383 = vmatpush1.msra.mxu0 0.0
    %3384 = vmatprep.subr.mxu0 0.0
    %3385 = vmatpush1.msra.mxu0 0.0
    %3386 = vmatprep.subr.mxu0 0.0
    %3387 = vmatpush1.msra.mxu0 0.0
    %3388 = vmatprep.subr.mxu0 0.0
    %3389 = vmatpush1.msra.mxu0 0.0
    %3390 = vmatprep.subr.mxu0 0.0
    %3391 = vmatpush1.msra.mxu0 0.0
    %3392 = vmatprep.subr.mxu0 0.0
    %3393 = vmatpush1.msra.mxu0 0.0
    %3394 = vmatprep.subr.mxu0 0.0
    %3395 = vmatpush1.msra.mxu0 0.0
    %3396 = vmatprep.subr.mxu0 0.0
    %3397 = vmatpush1.msra.mxu0 0.0
    %3398 = vmatprep.subr.mxu0 0.0
    %3399 = vmatpush1.msra.mxu0 0.0
    %3400 = vmatprep.subr.mxu0 0.0
    %3401 = vmatpush1.msra.mxu0 0.0
    %3402 = vmatprep.subr.mxu0 0.0
    %3403 = vmatpush1.msra.mxu0 0.0
    %3404 = vmatprep.mubr.f32.mxu0 0.0
    %3405 = vmatmul.mubr.f32.gmra.mrb[0].mxu0 %v3335
    %v3406 = vpop.f32.mrb[0].mxu0
    %v3407 = vadd.f32 0.0, %v3406
    %v3408 = vpop.f32.mrb[0].mxu0
    %3409 = vmatprep.mubr.f32.mxu0 0.0
    %3410 = vmatmul.mubr.f32.gmra.mrb[0].mxu0 %v3338
    %v3411 = vpop.f32.mrb[0].mxu0
    %v3412 = vadd.f32 0.0, %v3411
    %v3413 = vpop.f32.mrb[0].mxu0
    %3414 = vdwg.mxu0
    %v3415 = vadd.f32 %v2992, %v3407
    %v3416 = vadd.f32 %v2997, %v3412
    %3417 = vrot.lane.b32.xlu0 %v2067, 104
    %v3418 = vpop.permute.xlu0 %3417
    %3419 = vrot.lane.b32.xlu0 %v2159, 104
    %v3420 = vpop.permute.xlu0 %3419
    %v3421 = vsel %vm272, %v3418, 0
    %v3423 = vsel %vm272, %v3420, 0
    %3425 = vmatprep.subr.mxu0 0.0
    %3426 = vmatpush1.xpose.msra.mxu0 %v3423
    %3427 = vmatprep.subr.mxu0 0.0
    %3428 = vmatpush1.xpose.msra.mxu0 0.0
    %3429 = vmatprep.subr.mxu0 0.0
    %3430 = vmatpush1.xpose.msra.mxu0 0.0
    %3431 = vmatprep.subr.mxu0 0.0
    %3432 = vmatpush1.xpose.msra.mxu0 0.0
    %3433 = vmatprep.subr.mxu0 0.0
    %3434 = vmatpush1.xpose.msra.mxu0 0.0
    %3435 = vmatprep.subr.mxu0 0.0
    %3436 = vmatpush1.xpose.msra.mxu0 0.0
    %3437 = vmatprep.subr.mxu0 0.0
    %3438 = vmatpush1.xpose.msra.mxu0 0.0
    %3439 = vmatprep.subr.mxu0 0.0
    %3440 = vmatpush1.xpose.msra.mxu0 0.0
    %3441 = vmatprep.subr.mxu0 0.0
    %3442 = vmatpush1.xpose.msra.mxu0 0.0
    %3443 = vmatprep.subr.mxu0 0.0
    %3444 = vmatpush1.xpose.msra.mxu0 0.0
    %3445 = vmatprep.subr.mxu0 0.0
    %3446 = vmatpush1.xpose.msra.mxu0 0.0
    %3447 = vmatprep.subr.mxu0 0.0
    %3448 = vmatpush1.xpose.msra.mxu0 0.0
    %3449 = vmatprep.subr.mxu0 0.0
    %3450 = vmatpush1.xpose.msra.mxu0 0.0
    %3451 = vmatprep.subr.mxu0 0.0
    %3452 = vmatpush1.xpose.msra.mxu0 0.0
    %3453 = vmatprep.subr.mxu0 0.0
    %3454 = vmatpush1.xpose.msra.mxu0 0.0
    %3455 = vmatprep.subr.mxu0 0.0
    %3456 = vmatpush1.xpose.msra.mxu0 0.0
    %3457 = vmatprep.subr.mxu0 0.0
    %3458 = vmatpush1.xpose.msra.mxu0 0.0
    %3459 = vmatprep.subr.mxu0 0.0
    %3460 = vmatpush1.xpose.msra.mxu0 0.0
    %3461 = vmatprep.subr.mxu0 0.0
    %3462 = vmatpush1.xpose.msra.mxu0 0.0
    %3463 = vmatprep.subr.mxu0 0.0
    %3464 = vmatpush1.xpose.msra.mxu0 0.0
    %3465 = vmatprep.subr.mxu0 0.0
    %3466 = vmatpush1.xpose.msra.mxu0 0.0
    %3467 = vmatprep.subr.mxu0 0.0
    %3468 = vmatpush1.xpose.msra.mxu0 0.0
    %3469 = vmatprep.subr.mxu0 0.0
    %3470 = vmatpush1.xpose.msra.mxu0 0.0
    %3471 = vmatprep.subr.mxu0 0.0
    %3472 = vmatpush1.xpose.msra.mxu0 0.0
    %3473 = vmatprep.subr.mxu0 0.0
    %3474 = vmatpush1.xpose.msra.mxu0 0.0
    %3475 = vmatprep.subr.mxu0 0.0
    %3476 = vmatpush1.xpose.msra.mxu0 0.0
    %3477 = vmatprep.subr.mxu0 0.0
    %3478 = vmatpush1.xpose.msra.mxu0 0.0
    %3479 = vmatprep.subr.mxu0 0.0
    %3480 = vmatpush1.xpose.msra.mxu0 0.0
    %3481 = vmatprep.subr.mxu0 0.0
    %3482 = vmatpush1.xpose.msra.mxu0 0.0
    %3483 = vmatprep.subr.mxu0 0.0
    %3484 = vmatpush1.xpose.msra.mxu0 0.0
    %3485 = vmatprep.subr.mxu0 0.0
    %3486 = vmatpush1.xpose.msra.mxu0 0.0
    %3487 = vmatprep.subr.mxu0 0.0
    %3488 = vmatpush1.xpose.msra.mxu0 0.0
    %3489 = vmatprep.mubr.f32.mxu0 0.0
    %3490 = vmatmul.mubr.f32.gmra.mrb[0].mxu0 %v3421
    %v3491 = vpop.f32.mrb[0].mxu0
    %v3492 = vadd.f32 0.0, %v3491
    %v3493 = vpop.f32.mrb[0].mxu0
    %3494 = vdwg.mxu0
    %3495 = vrot.lane.b32.xlu0 %v2072, 104
    %v3496 = vpop.permute.xlu0 %3495
    %3497 = vrot.lane.b32.xlu0 %v2164, 104
    %v3498 = vpop.permute.xlu0 %3497
    %v3499 = vsel %vm272, %v3496, 0
    %v3501 = vsel %vm272, %v3498, 0
    %3503 = vmatprep.subr.mxu0 0.0
    %3504 = vmatpush1.xpose.msra.mxu0 %v3501
    %3505 = vmatprep.subr.mxu0 0.0
    %3506 = vmatpush1.xpose.msra.mxu0 0.0
    %3507 = vmatprep.subr.mxu0 0.0
    %3508 = vmatpush1.xpose.msra.mxu0 0.0
    %3509 = vmatprep.subr.mxu0 0.0
    %3510 = vmatpush1.xpose.msra.mxu0 0.0
    %3511 = vmatprep.subr.mxu0 0.0
    %3512 = vmatpush1.xpose.msra.mxu0 0.0
    %3513 = vmatprep.subr.mxu0 0.0
    %3514 = vmatpush1.xpose.msra.mxu0 0.0
    %3515 = vmatprep.subr.mxu0 0.0
    %3516 = vmatpush1.xpose.msra.mxu0 0.0
    %3517 = vmatprep.subr.mxu0 0.0
    %3518 = vmatpush1.xpose.msra.mxu0 0.0
    %3519 = vmatprep.subr.mxu0 0.0
    %3520 = vmatpush1.xpose.msra.mxu0 0.0
    %3521 = vmatprep.subr.mxu0 0.0
    %3522 = vmatpush1.xpose.msra.mxu0 0.0
    %3523 = vmatprep.subr.mxu0 0.0
    %3524 = vmatpush1.xpose.msra.mxu0 0.0
    %3525 = vmatprep.subr.mxu0 0.0
    %3526 = vmatpush1.xpose.msra.mxu0 0.0
    %3527 = vmatprep.subr.mxu0 0.0
    %3528 = vmatpush1.xpose.msra.mxu0 0.0
    %3529 = vmatprep.subr.mxu0 0.0
    %3530 = vmatpush1.xpose.msra.mxu0 0.0
    %3531 = vmatprep.subr.mxu0 0.0
    %3532 = vmatpush1.xpose.msra.mxu0 0.0
    %3533 = vmatprep.subr.mxu0 0.0
    %3534 = vmatpush1.xpose.msra.mxu0 0.0
    %3535 = vmatprep.subr.mxu0 0.0
    %3536 = vmatpush1.xpose.msra.mxu0 0.0
    %3537 = vmatprep.subr.mxu0 0.0
    %3538 = vmatpush1.xpose.msra.mxu0 0.0
    %3539 = vmatprep.subr.mxu0 0.0
    %3540 = vmatpush1.xpose.msra.mxu0 0.0
    %3541 = vmatprep.subr.mxu0 0.0
    %3542 = vmatpush1.xpose.msra.mxu0 0.0
    %3543 = vmatprep.subr.mxu0 0.0
    %3544 = vmatpush1.xpose.msra.mxu0 0.0
    %3545 = vmatprep.subr.mxu0 0.0
    %3546 = vmatpush1.xpose.msra.mxu0 0.0
    %3547 = vmatprep.subr.mxu0 0.0
    %3548 = vmatpush1.xpose.msra.mxu0 0.0
    %3549 = vmatprep.subr.mxu0 0.0
    %3550 = vmatpush1.xpose.msra.mxu0 0.0
    %3551 = vmatprep.subr.mxu0 0.0
    %3552 = vmatpush1.xpose.msra.mxu0 0.0
    %3553 = vmatprep.subr.mxu0 0.0
    %3554 = vmatpush1.xpose.msra.mxu0 0.0
    %3555 = vmatprep.subr.mxu0 0.0
    %3556 = vmatpush1.xpose.msra.mxu0 0.0
    %3557 = vmatprep.subr.mxu0 0.0
    %3558 = vmatpush1.xpose.msra.mxu0 0.0
    %3559 = vmatprep.subr.mxu0 0.0
    %3560 = vmatpush1.xpose.msra.mxu0 0.0
    %3561 = vmatprep.subr.mxu0 0.0
    %3562 = vmatpush1.xpose.msra.mxu0 0.0
    %3563 = vmatprep.subr.mxu0 0.0
    %3564 = vmatpush1.xpose.msra.mxu0 0.0
    %3565 = vmatprep.subr.mxu0 0.0
    %3566 = vmatpush1.xpose.msra.mxu0 0.0
    %3567 = vmatprep.mubr.f32.mxu0 0.0
    %3568 = vmatmul.mubr.f32.gmra.mrb[0].mxu0 %v3499
    %v3569 = vpop.f32.mrb[0].mxu0
    %v3570 = vadd.f32 0.0, %v3569
    %v3571 = vpop.f32.mrb[0].mxu0
    %3572 = vdwg.mxu0
    %v3573 = vmul.f32 %v3492, 0.35355338
    %v3574 = vmul.f32 %v3570, 0.35355338
    %v3575 = vsel %vm2326, -1e+09, %v3573
    %v3576 = vsel %vm2327, -1e+09, %v3574
    %v3577 = vsel %vm272, %v3575, -inf
    %3578 = vmax.xlane.f32.xlu0 %v3577
    %v3579 = vpop.xlane.xlu0 %3578
    %v3580 = vsel %vm272, %v3576, -inf
    %3581 = vmax.xlane.f32.xlu0 %v3580
    %v3582 = vpop.xlane.xlu0 %3581
    %v3583 = vsub.f32 %v3575, %v3579
    %v3584 = vsub.f32 %v3576, %v3582
    %v3585 = vmul.f32 %v3583, 1.442695
    %v3586 = vpow.pop %v3585
    %v3587 = vmul.f32 %v3584, 1.442695
    %v3588 = vpow.pop %v3587
    %v3589 = vsel %vm272, %v3586, 0.0
    %3590 = vadd.xlane.f32.xlu0 %v3589
    %v3591 = vpop.xlane.xlu0 %3590
    %v3592 = vsel %vm272, %v3588, 0.0
    %3593 = vadd.xlane.f32.xlu0 %v3592
    %v3594 = vpop.xlane.xlu0 %3593
    %v3595 = vrcp.pop %v3591
    %v3596 = vmul.f32 %v3586, %v3595
    %v3597 = vrcp.pop %v3594
    %v3598 = vmul.f32 %v3588, %v3597
    %3599 = vrot.lane.b32.xlu0 %v2159, 72
    %v3600 = vpop.permute.xlu0 %3599
    %v3603 = vsel %vm272, %v3596, 0
    %3605 = vmatprep.subr.mxu0 0.0
    %3606 = vmatpush1.msra.mxu0 %v3600
    %3607 = vmatprep.subr.mxu0 0.0
    %3608 = vmatpush1.msra.mxu0 0.0
    %3609 = vmatprep.subr.mxu0 0.0
    %3610 = vmatpush1.msra.mxu0 0.0
    %3611 = vmatprep.subr.mxu0 0.0
    %3612 = vmatpush1.msra.mxu0 0.0
    %3613 = vmatprep.subr.mxu0 0.0
    %3614 = vmatpush1.msra.mxu0 0.0
    %3615 = vmatprep.subr.mxu0 0.0
    %3616 = vmatpush1.msra.mxu0 0.0
    %3617 = vmatprep.subr.mxu0 0.0
    %3618 = vmatpush1.msra.mxu0 0.0
    %3619 = vmatprep.subr.mxu0 0.0
    %3620 = vmatpush1.msra.mxu0 0.0
    %3621 = vmatprep.subr.mxu0 0.0
    %3622 = vmatpush1.msra.mxu0 0.0
    %3623 = vmatprep.subr.mxu0 0.0
    %3624 = vmatpush1.msra.mxu0 0.0
    %3625 = vmatprep.subr.mxu0 0.0
    %3626 = vmatpush1.msra.mxu0 0.0
    %3627 = vmatprep.subr.mxu0 0.0
    %3628 = vmatpush1.msra.mxu0 0.0
    %3629 = vmatprep.subr.mxu0 0.0
    %3630 = vmatpush1.msra.mxu0 0.0
    %3631 = vmatprep.subr.mxu0 0.0
    %3632 = vmatpush1.msra.mxu0 0.0
    %3633 = vmatprep.subr.mxu0 0.0
    %3634 = vmatpush1.msra.mxu0 0.0
    %3635 = vmatprep.subr.mxu0 0.0
    %3636 = vmatpush1.msra.mxu0 0.0
    %3637 = vmatprep.subr.mxu0 0.0
    %3638 = vmatpush1.msra.mxu0 0.0
    %3639 = vmatprep.subr.mxu0 0.0
    %3640 = vmatpush1.msra.mxu0 0.0
    %3641 = vmatprep.subr.mxu0 0.0
    %3642 = vmatpush1.msra.mxu0 0.0
    %3643 = vmatprep.subr.mxu0 0.0
    %3644 = vmatpush1.msra.mxu0 0.0
    %3645 = vmatprep.subr.mxu0 0.0
    %3646 = vmatpush1.msra.mxu0 0.0
    %3647 = vmatprep.subr.mxu0 0.0
    %3648 = vmatpush1.msra.mxu0 0.0
    %3649 = vmatprep.subr.mxu0 0.0
    %3650 = vmatpush1.msra.mxu0 0.0
    %3651 = vmatprep.subr.mxu0 0.0
    %3652 = vmatpush1.msra.mxu0 0.0
    %3653 = vmatprep.subr.mxu0 0.0
    %3654 = vmatpush1.msra.mxu0 0.0
    %3655 = vmatprep.subr.mxu0 0.0
    %3656 = vmatpush1.msra.mxu0 0.0
    %3657 = vmatprep.subr.mxu0 0.0
    %3658 = vmatpush1.msra.mxu0 0.0
    %3659 = vmatprep.subr.mxu0 0.0
    %3660 = vmatpush1.msra.mxu0 0.0
    %3661 = vmatprep.subr.mxu0 0.0
    %3662 = vmatpush1.msra.mxu0 0.0
    %3663 = vmatprep.subr.mxu0 0.0
    %3664 = vmatpush1.msra.mxu0 0.0
    %3665 = vmatprep.subr.mxu0 0.0
    %3666 = vmatpush1.msra.mxu0 0.0
    %3667 = vmatprep.subr.mxu0 0.0
    %3668 = vmatpush1.msra.mxu0 0.0
    %3669 = vmatprep.mubr.f32.mxu0 0.0
    %3670 = vmatmul.mubr.f32.gmra.mrb[0].mxu0 %v3603
    %v3671 = vpop.f32.mrb[0].mxu0
    %v3672 = vadd.f32 0.0, %v3671
    %v3673 = vpop.f32.mrb[0].mxu0
    %3674 = vdwg.mxu0
    %3675 = vrot.lane.b32.xlu0 %v2164, 72
    %v3676 = vpop.permute.xlu0 %3675
    %v3679 = vsel %vm272, %v3598, 0
    %3681 = vmatprep.subr.mxu0 0.0
    %3682 = vmatpush1.msra.mxu0 %v3676
    %3683 = vmatprep.subr.mxu0 0.0
    %3684 = vmatpush1.msra.mxu0 0.0
    %3685 = vmatprep.subr.mxu0 0.0
    %3686 = vmatpush1.msra.mxu0 0.0
    %3687 = vmatprep.subr.mxu0 0.0
    %3688 = vmatpush1.msra.mxu0 0.0
    %3689 = vmatprep.subr.mxu0 0.0
    %3690 = vmatpush1.msra.mxu0 0.0
    %3691 = vmatprep.subr.mxu0 0.0
    %3692 = vmatpush1.msra.mxu0 0.0
    %3693 = vmatprep.subr.mxu0 0.0
    %3694 = vmatpush1.msra.mxu0 0.0
    %3695 = vmatprep.subr.mxu0 0.0
    %3696 = vmatpush1.msra.mxu0 0.0
    %3697 = vmatprep.subr.mxu0 0.0
    %3698 = vmatpush1.msra.mxu0 0.0
    %3699 = vmatprep.subr.mxu0 0.0
    %3700 = vmatpush1.msra.mxu0 0.0
    %3701 = vmatprep.subr.mxu0 0.0
    %3702 = vmatpush1.msra.mxu0 0.0
    %3703 = vmatprep.subr.mxu0 0.0
    %3704 = vmatpush1.msra.mxu0 0.0
    %3705 = vmatprep.subr.mxu0 0.0
    %3706 = vmatpush1.msra.mxu0 0.0
    %3707 = vmatprep.subr.mxu0 0.0
    %3708 = vmatpush1.msra.mxu0 0.0
    %3709 = vmatprep.subr.mxu0 0.0
    %3710 = vmatpush1.msra.mxu0 0.0
    %3711 = vmatprep.subr.mxu0 0.0
    %3712 = vmatpush1.msra.mxu0 0.0
    %3713 = vmatprep.subr.mxu0 0.0
    %3714 = vmatpush1.msra.mxu0 0.0
    %3715 = vmatprep.subr.mxu0 0.0
    %3716 = vmatpush1.msra.mxu0 0.0
    %3717 = vmatprep.subr.mxu0 0.0
    %3718 = vmatpush1.msra.mxu0 0.0
    %3719 = vmatprep.subr.mxu0 0.0
    %3720 = vmatpush1.msra.mxu0 0.0
    %3721 = vmatprep.subr.mxu0 0.0
    %3722 = vmatpush1.msra.mxu0 0.0
    %3723 = vmatprep.subr.mxu0 0.0
    %3724 = vmatpush1.msra.mxu0 0.0
    %3725 = vmatprep.subr.mxu0 0.0
    %3726 = vmatpush1.msra.mxu0 0.0
    %3727 = vmatprep.subr.mxu0 0.0
    %3728 = vmatpush1.msra.mxu0 0.0
    %3729 = vmatprep.subr.mxu0 0.0
    %3730 = vmatpush1.msra.mxu0 0.0
    %3731 = vmatprep.subr.mxu0 0.0
    %3732 = vmatpush1.msra.mxu0 0.0
    %3733 = vmatprep.subr.mxu0 0.0
    %3734 = vmatpush1.msra.mxu0 0.0
    %3735 = vmatprep.subr.mxu0 0.0
    %3736 = vmatpush1.msra.mxu0 0.0
    %3737 = vmatprep.subr.mxu0 0.0
    %3738 = vmatpush1.msra.mxu0 0.0
    %3739 = vmatprep.subr.mxu0 0.0
    %3740 = vmatpush1.msra.mxu0 0.0
    %3741 = vmatprep.subr.mxu0 0.0
    %3742 = vmatpush1.msra.mxu0 0.0
    %3743 = vmatprep.subr.mxu0 0.0
    %3744 = vmatpush1.msra.mxu0 0.0
    %3745 = vmatprep.mubr.f32.mxu0 0.0
    %3746 = vmatmul.mubr.f32.gmra.mrb[0].mxu0 %v3679
    %v3747 = vpop.f32.mrb[0].mxu0
    %v3748 = vadd.f32 0.0, %v3747
    %v3749 = vpop.f32.mrb[0].mxu0
    %3750 = vdwg.mxu0
    %v3752 = vsel %vm272, %v3672, 0
    %v3755 = vsel %vm272, %v3748, 0
    %3757 = vmatprep.subr.mxu0 0.0
    %3758 = vmatpush1.msra.mxu0 %v2170
    %3759 = vmatprep.subr.mxu0 0.0
    %3760 = vmatpush1.msra.mxu0 0.0
    %3761 = vmatprep.subr.mxu0 0.0
    %3762 = vmatpush1.msra.mxu0 0.0
    %3763 = vmatprep.subr.mxu0 0.0
    %3764 = vmatpush1.msra.mxu0 0.0
    %3765 = vmatprep.subr.mxu0 0.0
    %3766 = vmatpush1.msra.mxu0 0.0
    %3767 = vmatprep.subr.mxu0 0.0
    %3768 = vmatpush1.msra.mxu0 0.0
    %3769 = vmatprep.subr.mxu0 0.0
    %3770 = vmatpush1.msra.mxu0 0.0
    %3771 = vmatprep.subr.mxu0 0.0
    %3772 = vmatpush1.msra.mxu0 0.0
    %3773 = vmatprep.subr.mxu0 0.0
    %3774 = vmatpush1.msra.mxu0 0.0
    %3775 = vmatprep.subr.mxu0 0.0
    %3776 = vmatpush1.msra.mxu0 0.0
    %3777 = vmatprep.subr.mxu0 0.0
    %3778 = vmatpush1.msra.mxu0 0.0
    %3779 = vmatprep.subr.mxu0 0.0
    %3780 = vmatpush1.msra.mxu0 0.0
    %3781 = vmatprep.subr.mxu0 0.0
    %3782 = vmatpush1.msra.mxu0 0.0
    %3783 = vmatprep.subr.mxu0 0.0
    %3784 = vmatpush1.msra.mxu0 0.0
    %3785 = vmatprep.subr.mxu0 0.0
    %3786 = vmatpush1.msra.mxu0 0.0
    %3787 = vmatprep.subr.mxu0 0.0
    %3788 = vmatpush1.msra.mxu0 0.0
    %3789 = vmatprep.subr.mxu0 0.0
    %3790 = vmatpush1.msra.mxu0 0.0
    %3791 = vmatprep.subr.mxu0 0.0
    %3792 = vmatpush1.msra.mxu0 0.0
    %3793 = vmatprep.subr.mxu0 0.0
    %3794 = vmatpush1.msra.mxu0 0.0
    %3795 = vmatprep.subr.mxu0 0.0
    %3796 = vmatpush1.msra.mxu0 0.0
    %3797 = vmatprep.subr.mxu0 0.0
    %3798 = vmatpush1.msra.mxu0 0.0
    %3799 = vmatprep.subr.mxu0 0.0
    %3800 = vmatpush1.msra.mxu0 0.0
    %3801 = vmatprep.subr.mxu0 0.0
    %3802 = vmatpush1.msra.mxu0 0.0
    %3803 = vmatprep.subr.mxu0 0.0
    %3804 = vmatpush1.msra.mxu0 0.0
    %3805 = vmatprep.subr.mxu0 0.0
    %3806 = vmatpush1.msra.mxu0 0.0
    %3807 = vmatprep.subr.mxu0 0.0
    %3808 = vmatpush1.msra.mxu0 0.0
    %3809 = vmatprep.subr.mxu0 0.0
    %3810 = vmatpush1.msra.mxu0 0.0
    %3811 = vmatprep.subr.mxu0 0.0
    %3812 = vmatpush1.msra.mxu0 0.0
    %3813 = vmatprep.subr.mxu0 0.0
    %3814 = vmatpush1.msra.mxu0 0.0
    %3815 = vmatprep.subr.mxu0 0.0
    %3816 = vmatpush1.msra.mxu0 0.0
    %3817 = vmatprep.subr.mxu0 0.0
    %3818 = vmatpush1.msra.mxu0 0.0
    %3819 = vmatprep.subr.mxu0 0.0
    %3820 = vmatpush1.msra.mxu0 0.0
    %3821 = vmatprep.mubr.f32.mxu0 0.0
    %3822 = vmatmul.mubr.f32.gmra.mrb[0].mxu0 %v3752
    %v3823 = vpop.f32.mrb[0].mxu0
    %v3824 = vadd.f32 0.0, %v3823
    %v3825 = vpop.f32.mrb[0].mxu0
    %3826 = vmatprep.mubr.f32.mxu0 0.0
    %3827 = vmatmul.mubr.f32.gmra.mrb[0].mxu0 %v3755
    %v3828 = vpop.f32.mrb[0].mxu0
    %v3829 = vadd.f32 0.0, %v3828
    %v3830 = vpop.f32.mrb[0].mxu0
    %3831 = vdwg.mxu0
    %v3832 = vadd.f32 %v3415, %v3824
    %v3833 = vadd.f32 %v3416, %v3829
    %v3835 = vlaneseq
    %v3836 = vshrl.u32 %v3835, 7
    %v3837 = vsub.s32 0, %v3836
    %v3838 = vrot.slane %v2171, %v3837
    %v3840 = vadd.f32 %v3832, %v3838
    %v3841 = vadd.f32 %v3833, %v3838
    %v3842 = vadd.f32 %v1981, %v3840
    %v3843 = vadd.f32 %v1982, %v3841
    %v3844 = vsel %vm182, %v3842, 0.0
    %3845 = vadd.xlane.f32.xlu0 %v3844
    %v3846 = vpop.xlane.xlu0 %3845
    %v3847 = vsel %vm182, %v3843, 0.0
    %3848 = vadd.xlane.f32.xlu0 %v3847
    %v3849 = vpop.xlane.xlu0 %3848
    %v3850 = vmul.f32 %v3846, %v1950
    %v3851 = vmul.f32 %v3849, %v1950
    %v3852 = vsub.f32 %v3842, %v3850
    %v3853 = vsub.f32 %v3843, %v3851
    %v3854 = vmul.f32 %v3852, %v3852
    %v3855 = vmul.f32 %v3853, %v3853
    %v3856 = vsel %vm182, %v3854, 0.0
    %3857 = vadd.xlane.f32.xlu0 %v3856
    %v3858 = vpop.xlane.xlu0 %3857
    %v3859 = vsel %vm182, %v3855, 0.0
    %3860 = vadd.xlane.f32.xlu0 %v3859
    %v3861 = vpop.xlane.xlu0 %3860
    %v3862 = vmul.f32 %v3858, %v1950
    %v3863 = vmul.f32 %v3861, %v1950
    %v3864 = vadd.f32 %v3862, 1e-05
    %v3865 = vadd.f32 %v3863, 1e-05
    %v3866 = vrsqrt.pop %v3864
    %v3867 = vrsqrt.pop %v3865
    %v3868 = vmul.f32 %v3852, %v3866
    %v3869 = vmul.f32 %v3853, %v3867
    %v3870 = vlaneseq
    %v3871 = vshrl.u32 %v3870, 7
    %v3872 = vsub.s32 1, %v3871
    %v3873 = vrot.slane %v169, %v3872
    %v3874 = vmul.f32 %v3868, %v3873
    %v3875 = vmul.f32 %v3869, %v3873
    %v3876 = vlaneseq
    %v3877 = vshrl.u32 %v3876, 7
    %v3878 = vsub.s32 1, %v3877
    %v3879 = vrot.slane %v170, %v3878
    %v3880 = vadd.f32 %v3874, %v3879
    %v3881 = vadd.f32 %v3875, %v3879
    %v3882 = vld [vmem:[#allocation13] sm:$0xff]
    %v3883 = vld [vmem:[#allocation13 + $0x8] sm:$0xff]
    %v3884 = vld [vmem:[#allocation13 + $0x10] sm:$0xff]
    %v3885 = vld [vmem:[#allocation13 + $0x18] sm:$0xff]
    %v3886 = vld [vmem:[%s15] sm:$0x1]
    %v3888 = vlaneseq
    %v3889 = vshrl.u32 %v3888, 7
    %v3890 = vsub.s32 0, %v3889
    %v3891 = vrot.slane %v3886, %v3890
    %v3894 = vsel %vm182, %v3880, 0
    %v3897 = vsel %vm182, %v3881, 0
    %3899 = vmatprep.subr.mxu0 0.0
    %3900 = vmatpush1.msra.mxu0 %v3882
    %3901 = vmatprep.subr.mxu0 0.0
    %3902 = vmatpush1.msra.mxu0 %v3883
    %3903 = vmatprep.subr.mxu0 0.0
    %3904 = vmatpush1.msra.mxu0 %v3884
    %3905 = vmatprep.subr.mxu0 0.0
    %3906 = vmatpush1.msra.mxu0 %v3885
    %3907 = vmatprep.subr.mxu0 0.0
    %3908 = vmatpush1.msra.mxu0 0.0
    %3909 = vmatprep.subr.mxu0 0.0
    %3910 = vmatpush1.msra.mxu0 0.0
    %3911 = vmatprep.subr.mxu0 0.0
    %3912 = vmatpush1.msra.mxu0 0.0
    %3913 = vmatprep.subr.mxu0 0.0
    %3914 = vmatpush1.msra.mxu0 0.0
    %3915 = vmatprep.subr.mxu0 0.0
    %3916 = vmatpush1.msra.mxu0 0.0
    %3917 = vmatprep.subr.mxu0 0.0
    %3918 = vmatpush1.msra.mxu0 0.0
    %3919 = vmatprep.subr.mxu0 0.0
    %3920 = vmatpush1.msra.mxu0 0.0
    %3921 = vmatprep.subr.mxu0 0.0
    %3922 = vmatpush1.msra.mxu0 0.0
    %3923 = vmatprep.subr.mxu0 0.0
    %3924 = vmatpush1.msra.mxu0 0.0
    %3925 = vmatprep.subr.mxu0 0.0
    %3926 = vmatpush1.msra.mxu0 0.0
    %3927 = vmatprep.subr.mxu0 0.0
    %3928 = vmatpush1.msra.mxu0 0.0
    %3929 = vmatprep.subr.mxu0 0.0
    %3930 = vmatpush1.msra.mxu0 0.0
    %3931 = vmatprep.subr.mxu0 0.0
    %3932 = vmatpush1.msra.mxu0 0.0
    %3933 = vmatprep.subr.mxu0 0.0
    %3934 = vmatpush1.msra.mxu0 0.0
    %3935 = vmatprep.subr.mxu0 0.0
    %3936 = vmatpush1.msra.mxu0 0.0
    %3937 = vmatprep.subr.mxu0 0.0
    %3938 = vmatpush1.msra.mxu0 0.0
    %3939 = vmatprep.subr.mxu0 0.0
    %3940 = vmatpush1.msra.mxu0 0.0
    %3941 = vmatprep.subr.mxu0 0.0
    %3942 = vmatpush1.msra.mxu0 0.0
    %3943 = vmatprep.subr.mxu0 0.0
    %3944 = vmatpush1.msra.mxu0 0.0
    %3945 = vmatprep.subr.mxu0 0.0
    %3946 = vmatpush1.msra.mxu0 0.0
    %3947 = vmatprep.subr.mxu0 0.0
    %3948 = vmatpush1.msra.mxu0 0.0
    %3949 = vmatprep.subr.mxu0 0.0
    %3950 = vmatpush1.msra.mxu0 0.0
    %3951 = vmatprep.subr.mxu0 0.0
    %3952 = vmatpush1.msra.mxu0 0.0
    %3953 = vmatprep.subr.mxu0 0.0
    %3954 = vmatpush1.msra.mxu0 0.0
    %3955 = vmatprep.subr.mxu0 0.0
    %3956 = vmatpush1.msra.mxu0 0.0
    %3957 = vmatprep.subr.mxu0 0.0
    %3958 = vmatpush1.msra.mxu0 0.0
    %3959 = vmatprep.subr.mxu0 0.0
    %3960 = vmatpush1.msra.mxu0 0.0
    %3961 = vmatprep.subr.mxu0 0.0
    %3962 = vmatpush1.msra.mxu0 0.0
    %3963 = vmatprep.mubr.f32.mxu0 0.0
    %3964 = vmatmul.mubr.f32.gmra.mrb[0].mxu0 %v3894
    %v3965 = vpop.f32.mrb[0].mxu0
    %v3966 = vadd.f32 %v3891, %v3965
    %v3967 = vpop.f32.mrb[0].mxu0
    %3968 = vmatprep.mubr.f32.mxu0 0.0
    %3969 = vmatmul.mubr.f32.gmra.mrb[0].mxu0 %v3897
    %v3970 = vpop.f32.mrb[0].mxu0
    %v3971 = vadd.f32 %v3891, %v3970
    %v3972 = vpop.f32.mrb[0].mxu0
    %3973 = vdwg.mxu0
    %v3974 = vmax.f32 %v3966, 0.0
    %v3975 = vmax.f32 %v3971, 0.0
    %v3976 = vld [vmem:[%s16] sm:$0xff]
    %v3977 = vld [vmem:[%s16 + $0x8] sm:$0xff]
    %v3978 = vld [vmem:[%s16 + $0x10] sm:$0xff]
    %v3979 = vld [vmem:[%s16 + $0x18] sm:$0xff]
    %v3980 = vld [vmem:[%s16 + $0x20] sm:$0xff]
    %v3981 = vld [vmem:[%s16 + $0x28] sm:$0xff]
    %v3982 = vld [vmem:[%s16 + $0x30] sm:$0xff]
    %v3983 = vld [vmem:[%s16 + $0x38] sm:$0xff]
    %v3984 = vld [vmem:[%s17] sm:$0x1]
    %v3986 = vlaneseq
    %v3987 = vshrl.u32 %v3986, 7
    %v3988 = vsub.s32 0, %v3987
    %v3989 = vrot.slane %v3984, %v3988
    %vm3991 = vcmask 523264
    %v3993 = vsel %vm3991, %v3974, 0
    %v3996 = vsel %vm3991, %v3975, 0
    %3998 = vmatprep.subr.mxu0 0.0
    %3999 = vmatpush1.msra.mxu0 %v3976
    %4000 = vmatprep.subr.mxu0 0.0
    %4001 = vmatpush1.msra.mxu0 %v3977
    %4002 = vmatprep.subr.mxu0 0.0
    %4003 = vmatpush1.msra.mxu0 %v3978
    %4004 = vmatprep.subr.mxu0 0.0
    %4005 = vmatpush1.msra.mxu0 %v3979
    %4006 = vmatprep.subr.mxu0 0.0
    %4007 = vmatpush1.msra.mxu0 %v3980
    %4008 = vmatprep.subr.mxu0 0.0
    %4009 = vmatpush1.msra.mxu0 %v3981
    %4010 = vmatprep.subr.mxu0 0.0
    %4011 = vmatpush1.msra.mxu0 %v3982
    %4012 = vmatprep.subr.mxu0 0.0
    %4013 = vmatpush1.msra.mxu0 %v3983
    %4014 = vmatprep.subr.mxu0 0.0
    %4015 = vmatpush1.msra.mxu0 0.0
    %4016 = vmatprep.subr.mxu0 0.0
    %4017 = vmatpush1.msra.mxu0 0.0
    %4018 = vmatprep.subr.mxu0 0.0
    %4019 = vmatpush1.msra.mxu0 0.0
    %4020 = vmatprep.subr.mxu0 0.0
    %4021 = vmatpush1.msra.mxu0 0.0
    %4022 = vmatprep.subr.mxu0 0.0
    %4023 = vmatpush1.msra.mxu0 0.0
    %4024 = vmatprep.subr.mxu0 0.0
    %4025 = vmatpush1.msra.mxu0 0.0
    %4026 = vmatprep.subr.mxu0 0.0
    %4027 = vmatpush1.msra.mxu0 0.0
    %4028 = vmatprep.subr.mxu0 0.0
    %4029 = vmatpush1.msra.mxu0 0.0
    %4030 = vmatprep.subr.mxu0 0.0
    %4031 = vmatpush1.msra.mxu0 0.0
    %4032 = vmatprep.subr.mxu0 0.0
    %4033 = vmatpush1.msra.mxu0 0.0
    %4034 = vmatprep.subr.mxu0 0.0
    %4035 = vmatpush1.msra.mxu0 0.0
    %4036 = vmatprep.subr.mxu0 0.0
    %4037 = vmatpush1.msra.mxu0 0.0
    %4038 = vmatprep.subr.mxu0 0.0
    %4039 = vmatpush1.msra.mxu0 0.0
    %4040 = vmatprep.subr.mxu0 0.0
    %4041 = vmatpush1.msra.mxu0 0.0
    %4042 = vmatprep.subr.mxu0 0.0
    %4043 = vmatpush1.msra.mxu0 0.0
    %4044 = vmatprep.subr.mxu0 0.0
    %4045 = vmatpush1.msra.mxu0 0.0
    %4046 = vmatprep.subr.mxu0 0.0
    %4047 = vmatpush1.msra.mxu0 0.0
    %4048 = vmatprep.subr.mxu0 0.0
    %4049 = vmatpush1.msra.mxu0 0.0
    %4050 = vmatprep.subr.mxu0 0.0
    %4051 = vmatpush1.msra.mxu0 0.0
    %4052 = vmatprep.subr.mxu0 0.0
    %4053 = vmatpush1.msra.mxu0 0.0
    %4054 = vmatprep.subr.mxu0 0.0
    %4055 = vmatpush1.msra.mxu0 0.0
    %4056 = vmatprep.subr.mxu0 0.0
    %4057 = vmatpush1.msra.mxu0 0.0
    %4058 = vmatprep.subr.mxu0 0.0
    %4059 = vmatpush1.msra.mxu0 0.0
    %4060 = vmatprep.subr.mxu0 0.0
    %4061 = vmatpush1.msra.mxu0 0.0
    %4062 = vmatprep.mubr.f32.mxu0 0.0
    %4063 = vmatmul.mubr.f32.gmra.mrb[0].mxu0 %v3993
    %v4064 = vpop.f32.mrb[0].mxu0
    %v4065 = vadd.f32 %v3989, %v4064
    %v4066 = vpop.f32.mrb[0].mxu0
    %4067 = vmatprep.mubr.f32.mxu0 0.0
    %4068 = vmatmul.mubr.f32.gmra.mrb[0].mxu0 %v3996
    %v4069 = vpop.f32.mrb[0].mxu0
    %v4070 = vadd.f32 %v3989, %v4069
    %v4071 = vpop.f32.mrb[0].mxu0
    %4072 = vdwg.mxu0
    %v4073 = vadd.f32 %v3880, %v4065
    %v4074 = vadd.f32 %v3881, %v4070
    %v4075 = vsel %vm182, %v4073, 0.0
    %4076 = vadd.xlane.f32.xlu0 %v4075
    %v4077 = vpop.xlane.xlu0 %4076
    %v4078 = vsel %vm182, %v4074, 0.0
    %4079 = vadd.xlane.f32.xlu0 %v4078
    %v4080 = vpop.xlane.xlu0 %4079
    %v4081 = vmul.f32 %v4077, %v1950
    %v4082 = vmul.f32 %v4080, %v1950
    %v4083 = vsub.f32 %v4073, %v4081
    %v4084 = vsub.f32 %v4074, %v4082
    %v4085 = vmul.f32 %v4083, %v4083
    %v4086 = vmul.f32 %v4084, %v4084
    %v4087 = vsel %vm182, %v4085, 0.0
    %4088 = vadd.xlane.f32.xlu0 %v4087
    %v4089 = vpop.xlane.xlu0 %4088
    %v4090 = vsel %vm182, %v4086, 0.0
    %4091 = vadd.xlane.f32.xlu0 %v4090
    %v4092 = vpop.xlane.xlu0 %4091
    %v4093 = vmul.f32 %v4089, %v1950
    %v4094 = vmul.f32 %v4092, %v1950
    %v4095 = vadd.f32 %v4093, 1e-05
    %v4096 = vadd.f32 %v4094, 1e-05
    %v4097 = vrsqrt.pop %v4095
    %v4098 = vrsqrt.pop %v4096
    %v4099 = vmul.f32 %v4083, %v4097
    %v4100 = vmul.f32 %v4084, %v4098
    %v4101 = vlaneseq
    %v4102 = vshrl.u32 %v4101, 7
    %v4103 = vsub.s32 2, %v4102
    %v4104 = vrot.slane %v169, %v4103
    %v4105 = vmul.f32 %v4099, %v4104
    %v4106 = vmul.f32 %v4100, %v4104
    %v4107 = vlaneseq
    %v4108 = vshrl.u32 %v4107, 7
    %v4109 = vsub.s32 2, %v4108
    %v4110 = vrot.slane %v170, %v4109
    %v4111 = vadd.f32 %v4105, %v4110
    %v4112 = vadd.f32 %v4106, %v4110
    %4113 = vst.msk [vmem:[#allocation14] sm:$0xff] %vm182, %v4111
    %4114 = vst.msk [vmem:[#allocation14 + $0x8] sm:$0xff] %vm182, %v4112
    // Predicated region
    $region110: #{tpu_custom_call.1} parent=1 // pred_check
      _
    $region111: #{tpu_custom_call.1} parent=1 // pred_check_branch
      %4116 = sbr.rel (0) target = $region113
    $region112: #{tpu_custom_call.1} parent=1 // pred_region
      %s4118 = ssub.s32 256, 256
      %4119 = vsyncadd [#allocation4], %s4118
      %s4120 = sshll.u32 [#allocation14], 4
      %s4121 = int_to_ptr.vmem [resolvable:$true] %s4120
      %4126 = dma.vmem_to_hbm [thread:$0]  %s4121, 256, %s20, [#allocation4], 128, 128, 8
    $region113: #{tpu_custom_call.1} parent=1 // pred_fallthru
      _
    // Predicated region
    $region114: #{tpu_custom_call.1} parent=1 // pred_check
      _
    $region115: #{tpu_custom_call.1} parent=1 // pred_check_branch
      %4128 = sbr.rel (0) target = $region117
    $region116: #{tpu_custom_call.1} parent=1 // pred_region
      %4129 = dma.done [#allocation4], 256
    $region117: #{tpu_custom_call.1} parent=1 // pred_fallthru
      _
    %4130 = vsyncpa [#allocation3], 1
    %4131 = vsyncpa [#allocation6], 1
    %4132 = vsyncpa [#allocation9], 1
    %4133 = vsyncpa [#allocation12], 1
    %4134 = vsyncpa [#allocation4], 1

</llo_original>
